<compile_context>
chip_gen: v6e
topology: v6e:2x2x1
jax: 0.10.0
libtpu: 0.0.40
codegen_flags: <defaults>
</compile_context>

<pallas_src>
import functools
import math

import jax
import jax.numpy as jnp
import numpy as np
from jax.experimental import pallas as pl
from jax.experimental.pallas import tpu as pltpu

EPS = 1e-6

# per-layer weights, stacked with a leading num_layers dim, in kernel-native layout
STACKED_KEYS = (
    "sa_wqkv", "sa_bqkv", "sa_wo", "sa_bo",
    "ca_wq", "ca_bq", "ca_wkv", "ca_bkv", "ca_wo", "ca_bo",
    "ffn_w1", "ffn_b1", "ffn_w2", "ffn_b2",
    "g1", "b1", "g2", "b2", "g3", "b3",
)
NUM_STACKED = len(STACKED_KEYS)


# ----------------------------- in-kernel math helpers ----------------------------- #

def _layer_norm(x, g, b):
    # x: (N, D) f32, g/b: (1, D) f32.  torch.nn.LayerNorm (biased variance), eps=1e-6.
    m = jnp.mean(x, axis=-1, keepdims=True)
    v = jnp.mean((x - m) ** 2, axis=-1, keepdims=True)
    return (x - m) * jax.lax.rsqrt(v + EPS) * g + b


def _mha_core(q, kv, bb, lq, lk, w_o, b_o, nhead, want_attn, av_scr):
    """Multi-head attention given fused projections.

    q:  (bb*lq, D) f32, already scaled by 1/sqrt(hd).
    kv: (bb*lk, 2D) f32, columns [K | V].
    w_o: (D, D) bf16, b_o: (1, D) f32.
    av_scr: (bb*lq, D) f32 VMEM scratch used to assemble the per-head AV slab so the
            output projection is a single lane-dense (rows, D) x (D, D) matmul.
    Returns (bb*lq, D) f32 output and, if want_attn, (bb, lq, lk) head-averaged weights.
    """
    d = q.shape[-1]
    hd = d // nhead
    a_acc = None
    for h in range(nhead):                                   # static unroll over heads
        lo, hi = h * hd, (h + 1) * hd
        qh = q[:, lo:hi].reshape(bb, lq, hd).astype(jnp.bfloat16)
        kh = kv[:, lo:hi].reshape(bb, lk, hd).astype(jnp.bfloat16)
        vh = kv[:, d + lo:d + hi].reshape(bb, lk, hd).astype(jnp.bfloat16)
        s = jnp.einsum("bqe,bke->bqk", qh, kh, preferred_element_type=jnp.float32)
        s = s - jnp.max(s, axis=-1, keepdims=True)
        e = jnp.exp(s)
        a = e * pl.reciprocal(jnp.sum(e, axis=-1, keepdims=True), approx=True)
        if want_attn:                                        # statically skipped otherwise
            a_acc = a if a_acc is None else a_acc + a
        av = jnp.einsum("bqk,bke->bqe", a.astype(jnp.bfloat16), vh,
                        preferred_element_type=jnp.float32)
        av_scr[:, lo:hi] = av.reshape(bb * lq, hd)
    o = jnp.dot(av_scr[...].astype(jnp.bfloat16), w_o,
                preferred_element_type=jnp.float32) + b_o
    attn = a_acc * (1.0 / nhead) if want_attn else None
    return o, attn


# --------------------------------- Pallas kernel ----------------------------------- #

def _decoder_kernel(*refs, nhead, return_attn):
    tgt_ref, mem_ref = refs[0], refs[1]
    w = refs[2:2 + NUM_STACKED]
    fg_ref, fb_ref = refs[2 + NUM_STACKED], refs[3 + NUM_STACKED]
    out_refs = refs[4 + NUM_STACKED:-2]
    x_scr, av_scr = refs[-2], refs[-1]
    o_ref = out_refs[0]
    sa_ref = out_refs[1] if return_attn else None
    ca_ref = out_refs[2] if return_attn else None

    (sa_wqkv, sa_bqkv, sa_wo, sa_bo,
     ca_wq, ca_bq, ca_wkv, ca_bkv, ca_wo, ca_bo,
     ffn_w1, ffn_b1, ffn_w2, ffn_b2,
     g1, b1, g2, b2, g3, b3) = w

    layer = pl.program_id(1)
    num_layers = pl.num_programs(1)
    bb, lt, d = tgt_ref.shape
    lm = mem_ref.shape[1]
    scale = 1.0 / math.sqrt(d // nhead)

    # At the first layer of every batch block, load the target block into the resident
    # activation scratch; it then carries the activations across all layer grid steps.
    @pl.when(layer == 0)
    def _():
        x_scr[...] = tgt_ref[...].reshape(bb * lt, d)

    x = x_scr[...]
    mem_b = mem_ref[...].reshape(bb * lm, d).astype(jnp.bfloat16)

    # ---------------- self-attention (post-norm, dropout=0) ---------------- #
    qkv = jnp.dot(x.astype(jnp.bfloat16), sa_wqkv[...],
                  preferred_element_type=jnp.float32) + sa_bqkv[...]
    q = qkv[:, :d] * scale                    # exact f32 softmax scale on q
    kv = qkv[:, d:]
    t2, sa = _mha_core(q, kv, bb, lt, lt, sa_wo[...], sa_bo[...],
                       nhead, return_attn, av_scr)
    x = _layer_norm(x + t2, g1[...], b1[...])

    # ---------------- cross-attention over encoder memory ------------------ #
    q = (jnp.dot(x.astype(jnp.bfloat16), ca_wq[...],
                 preferred_element_type=jnp.float32) + ca_bq[...]) * scale
    kv = jnp.dot(mem_b, ca_wkv[...], preferred_element_type=jnp.float32) + ca_bkv[...]
    t2, ca = _mha_core(q, kv, bb, lt, lm, ca_wo[...], ca_bo[...],
                       nhead, return_attn, av_scr)
    x = _layer_norm(x + t2, g2[...], b2[...])

    # ---------------- positionwise feed-forward (ReLU) --------------------- #
    hdn = jnp.dot(x.astype(jnp.bfloat16), ffn_w1[...],
                  preferred_element_type=jnp.float32) + ffn_b1[...]
    hdn = jnp.maximum(hdn, 0.0)
    f = jnp.dot(hdn.astype(jnp.bfloat16), ffn_w2[...],
                preferred_element_type=jnp.float32) + ffn_b2[...]
    x = _layer_norm(x + f, g3[...], b3[...])

    x_scr[...] = x
    if return_attn:
        sa_ref[...] = sa
        ca_ref[...] = ca

    # Decoder's final LayerNorm, fused into the last layer step.
    @pl.when(layer == num_layers - 1)
    def _():
        o_ref[...] = _layer_norm(x, fg_ref[...], fb_ref[...]).reshape(bb, lt, d)


# ----------------------------------- wrappers -------------------------------------- #

def _device_kind():
    try:
        return jax.devices()[0].device_kind.lower()
    except Exception:
        return ""


def _estimate_vmem_bytes(bb, Lt, Lm, D, F, return_attn):
    """Rough per-core VMEM working set for one batch block (double-buffered IO, weights
    for two layers in flight, plus in-kernel f32 temporaries)."""
    f32, bf16 = 4, 2
    rt, rm = bb * Lt, bb * Lm
    act = 2 * f32 * (rt * D + rm * D)            # tgt + memory input blocks (x2 buffers)
    act += 2 * f32 * rt * D                      # output block (x2 buffers)
    act += 2 * f32 * rt * D                      # x_scr + av_scr scratch
    if return_attn:
        act += 2 * f32 * rt * (Lt + Lm)          # attention-map output blocks
    w_mm = bf16 * (D * 3 * D + D * D + D * D + D * 2 * D + D * D + D * F + F * D)
    w_small = f32 * (3 * D + D + D + 2 * D + D + F + D + 6 * D)
    wgt = 2 * (w_mm + w_small)                   # layer-pipelined weights, 2 in flight
    tmp = f32 * (rt * 3 * D + rm * 2 * D + rt * F)       # qkv / kv / ffn-hidden slabs
    tmp += f32 * 4 * rt * max(Lt, Lm)                    # score / exp / attn temporaries
    tmp += bf16 * (rt * D + rm * D)
    return act + wgt + tmp


def _pick_batch_block(B, Lt, Lm, D, F, return_attn, budget, target_rows, force_split):
    best = 1
    for bb in range(1, B + 1):
        if B % bb:
            continue                                         # no ragged last block
        if bb * Lt > max(target_rows, Lt):
            continue
        if _estimate_vmem_bytes(bb, Lt, Lm, D, F, return_attn) > budget:
            continue
        best = bb
    if force_split and B > 1 and B // best < 2:
        cap = B // 2
        best = max(dv for dv in range(1, cap + 1) if B % dv == 0)
    return best


def transformer_decoder_forward(tgt, memory, stacked, final_norm, nhead, *,
                                return_attn=True, batch_block=None):
    B, Lt, D = tgt.shape
    Lm = memory.shape[1]
    NL = stacked["sa_wqkv"].shape[0]
    F = stacked["ffn_w1"].shape[-1]

    kind = _device_kind()
    is_v7 = "v7" in kind
    big_vmem = ("v5" in kind) or ("v6" in kind)
    vmem_limit = (100 << 20) if (big_vmem and not is_v7) else (48 << 20)
    budget = (80 << 20) if (big_vmem and not is_v7) else (36 << 20)
    target_rows = 128 if is_v7 else 512

    if batch_block is None:
        bb = _pick_batch_block(B, Lt, Lm, D, F, return_attn, budget, target_rows, is_v7)
    else:
        bb = max(1, min(batch_block, B))
        while B % bb:
            bb -= 1
    nb = B // bb

    weights = [stacked[k] for k in STACKED_KEYS] + [final_norm["g"], final_norm["b"]]

    in_specs = [pl.BlockSpec((bb, Lt, D), lambda b, l: (b, 0, 0)),
                pl.BlockSpec((bb, Lm, D), lambda b, l: (b, 0, 0))]
    for k in STACKED_KEYS:     # layer-stacked weights, pipelined along the layer axis
        arr = stacked[k]
        in_specs.append(pl.BlockSpec((None,) + tuple(arr.shape[1:]),
                                     lambda b, l: (l, 0, 0)))
    in_specs += [pl.BlockSpec((1, D), lambda b, l: (0, 0)),
                 pl.BlockSpec((1, D), lambda b, l: (0, 0))]

    out_specs = [pl.BlockSpec((bb, Lt, D), lambda b, l: (b, 0, 0))]
    out_shape = [jax.ShapeDtypeStruct((B, Lt, D), jnp.float32)]
    if return_attn:
        # TODO(synk): Lt/Lm last dims below 128 lower to masked stores; pad lane dims or
        #             emit bf16 maps if these become store-bound at realistic sizes.
        out_specs += [pl.BlockSpec((None, bb, Lt, Lt), lambda b, l: (l, b, 0, 0)),
                      pl.BlockSpec((None, bb, Lt, Lm), lambda b, l: (l, b, 0, 0))]
        out_shape += [jax.ShapeDtypeStruct((NL, B, Lt, Lt), jnp.float32),
                      jax.ShapeDtypeStruct((NL, B, Lt, Lm), jnp.float32)]

    kernel = functools.partial(_decoder_kernel, nhead=nhead, return_attn=return_attn)
    res = pl.pallas_call(
        kernel,
        grid=(nb, NL),
        in_specs=in_specs,
        out_specs=out_specs,
        out_shape=out_shape,
        scratch_shapes=[pltpu.VMEM((bb * Lt, D), jnp.float32),   # activation carry
                        pltpu.VMEM((bb * Lt, D), jnp.float32)],  # per-head AV assembly
        compiler_params=pltpu.CompilerParams(
            dimension_semantics=("parallel", "arbitrary"),
            vmem_limit_bytes=vmem_limit),
    )(tgt, memory, *weights)

    if return_attn:
        out, sa, ca = res
        return out, [sa[l] for l in range(NL)], [ca[l] for l in range(NL)]
    return res[0], [], []


# --------------------------- deterministic parameter init ------------------------- #

def init_params(key, num_layers, d_model, nhead, d_ffn):
    """Deterministic parameters in the PyTorch module's native layout."""
    def rnd(k, shape, scale=0.1):
        return jax.random.normal(k, shape, jnp.float32) * scale

    layers = []
    for _ in range(num_layers):
        key, *ks = jax.random.split(key, 19)
        layers.append(dict(
            sa_in_w=rnd(ks[0], (3 * d_model, d_model)),
            sa_in_b=rnd(ks[1], (1, 3 * d_model)),
            sa_out_w=rnd(ks[2], (d_model, d_model)),
            sa_out_b=rnd(ks[3], (1, d_model)),
            ca_in_w=rnd(ks[4], (3 * d_model, d_model)),
            ca_in_b=rnd(ks[5], (1, 3 * d_model)),
            ca_out_w=rnd(ks[6], (d_model, d_model)),
            ca_out_b=rnd(ks[7], (1, d_model)),
            ffn_w1=rnd(ks[8], (d_ffn, d_model)),
            ffn_b1=rnd(ks[9], (1, d_ffn)),
            ffn_w2=rnd(ks[10], (d_model, d_ffn)),
            ffn_b2=rnd(ks[11], (1, d_model)),
            g1=1.0 + rnd(ks[12], (1, d_model), 0.02),
            b1=rnd(ks[13], (1, d_model), 0.02),
            g2=1.0 + rnd(ks[14], (1, d_model), 0.02),
            b2=rnd(ks[15], (1, d_model), 0.02),
            g3=1.0 + rnd(ks[16], (1, d_model), 0.02),
            b3=rnd(ks[17], (1, d_model), 0.02),
        ))
    key, k1, k2 = jax.random.split(key, 3)
    final = dict(g=1.0 + rnd(k1, (1, d_model), 0.02), b=rnd(k2, (1, d_model), 0.02))
    return layers, final


def prepare_layer_params(p, mm_dtype=jnp.bfloat16):
    """Host-side weight prep: lane-dense 2-D slabs, pre-transposed to (K, N), Q/K/V fused
    (self-attn) and K/V fused (cross-attn), matmul weights cast to bf16, biases / LayerNorm
    params kept f32.  The softmax scale is NOT folded (applied exactly in f32 in-kernel)."""
    D = p["sa_out_w"].shape[0]
    f32 = jnp.float32
    return dict(
        sa_wqkv=p["sa_in_w"].T.astype(mm_dtype),        # (D, 3D), cols = [Q|K|V]
        sa_bqkv=p["sa_in_b"].astype(f32),               # (1, 3D)
        sa_wo=p["sa_out_w"].T.astype(mm_dtype),         # (D, D)
        sa_bo=p["sa_out_b"].astype(f32),                # (1, D)
        ca_wq=p["ca_in_w"][:D].T.astype(mm_dtype),      # (D, D)
        ca_bq=p["ca_in_b"][:, :D].astype(f32),          # (1, D)
        ca_wkv=p["ca_in_w"][D:].T.astype(mm_dtype),     # (D, 2D), cols = [K|V]
        ca_bkv=p["ca_in_b"][:, D:].astype(f32),         # (1, 2D)
        ca_wo=p["ca_out_w"].T.astype(mm_dtype),
        ca_bo=p["ca_out_b"].astype(f32),
        ffn_w1=p["ffn_w1"].T.astype(mm_dtype),          # (D, F)
        ffn_b1=p["ffn_b1"].astype(f32),
        ffn_w2=p["ffn_w2"].T.astype(mm_dtype),          # (F, D)
        ffn_b2=p["ffn_b2"].astype(f32),
        g1=p["g1"].astype(f32), b1=p["b1"].astype(f32),
        g2=p["g2"].astype(f32), b2=p["b2"].astype(f32),
        g3=p["g3"].astype(f32), b3=p["b3"].astype(f32),
    )


def stack_layer_params(prepared_list):
    """Stack per-layer prepared params with a leading num_layers dim (kernel layout)."""
    return {k: jnp.stack([lp[k] for lp in prepared_list], axis=0) for k in STACKED_KEYS}


# ------------------------------ pure-JAX reference -------------------------------- #

def _ref_ln(x, g, b):
    m = jnp.mean(x, axis=-1, keepdims=True)
    v = jnp.mean((x - m) ** 2, axis=-1, keepdims=True)
    return (x - m) / jnp.sqrt(v + EPS) * g[0] + b[0]


def _ref_mha(q_in, k_in, v_in, in_w, in_b, out_w, out_b, nhead):
    B, Lq, D = q_in.shape
    hd = D // nhead
    bb = in_b[0]
    q = q_in @ in_w[:D].T + bb[:D]
    k = k_in @ in_w[D:2 * D].T + bb[D:2 * D]
    v = v_in @ in_w[2 * D:].T + bb[2 * D:]
    q = q.reshape(B, Lq, nhead, hd).transpose(0, 2, 1, 3)
    k = k.reshape(B, -1, nhead, hd).transpose(0, 2, 1, 3)
    v = v.reshape(B, -1, nhead, hd).transpose(0, 2, 1, 3)
    s = jnp.einsum("bhqd,bhkd->bhqk", q, k) / jnp.sqrt(jnp.float32(hd))
    a = jax.nn.softmax(s, axis=-1)
    o = jnp.einsum("bhqk,bhkd->bhqd", a, v)
    o = o.transpose(0, 2, 1, 3).reshape(B, Lq, D)
    return o @ out_w.T + out_b[0], a.mean(axis=1)


def ref_decoder(tgt, memory, layers, final, nhead):
    x = tgt
    sas, cas = [], []
    for p in layers:
        t2, sa = _ref_mha(x, x, x, p["sa_in_w"], p["sa_in_b"], p["sa_out_w"], p["sa_out_b"], nhead)
        x = _ref_ln(x + t2, p["g1"], p["b1"])
        t2, ca = _ref_mha(x, memory, memory, p["ca_in_w"], p["ca_in_b"], p["ca_out_w"], p["ca_out_b"], nhead)
        x = _ref_ln(x + t2, p["g2"], p["b2"])
        h = jnp.maximum(x @ p["ffn_w1"].T + p["ffn_b1"][0], 0.0)
        f = h @ p["ffn_w2"].T + p["ffn_b2"][0]
        x = _ref_ln(x + f, p["g3"], p["b3"])
        sas.append(sa)
        cas.append(ca)
    x = _ref_ln(x, final["g"], final["b"])
    return x, sas, cas


# --------------------------------------- main -------------------------------------- #

if __name__ == "__main__":
    NUM_LAYERS, NHEAD, D_FFN, D_MODEL = 2, 4, 64, 32
    B, LT, LM = 2, 8, 16

    key = jax.random.PRNGKey(0)
    k_tgt, k_mem, k_par = jax.random.split(key, 3)
    tgt = jax.random.normal(k_tgt, (B, LT, D_MODEL), jnp.float32)
    memory = jax.random.normal(k_mem, (B, LM, D_MODEL), jnp.float32)

    torch_layer_params, final_norm = init_params(k_par, NUM_LAYERS, D_MODEL, NHEAD, D_FFN)
    stacked = stack_layer_params([prepare_layer_params(p) for p in torch_layer_params])

    out, self_attns, cross_attns = transformer_decoder_forward(
        tgt, memory, stacked, final_norm, NHEAD, return_attn=True)
    out = jax.block_until_ready(out)

    # sanity-check against the pure-f32 JAX reference; the kernel uses bf16 MXU operands
    # and an approximate softmax reciprocal, hence the slightly looser tolerances.
    ref_out, ref_sas, ref_cas = ref_decoder(tgt, memory, torch_layer_params, final_norm, NHEAD)
    np.testing.assert_allclose(np.asarray(out), np.asarray(ref_out), rtol=5e-2, atol=5e-2)
    for a, r in zip(self_attns, ref_sas):
        np.testing.assert_allclose(np.asarray(a), np.asarray(r), rtol=5e-2, atol=2e-2)
    for a, r in zip(cross_attns, ref_cas):
        np.testing.assert_allclose(np.asarray(a), np.asarray(r), rtol=5e-2, atol=2e-2)

    print("KERNEL_OK")
</pallas_src>

<mosaic_0001>
module attributes {stable_mosaic.version = 11 : i64} {
  func.func @_decoder_kernel(%arg0: i32, %arg1: i32, %arg2: memref<2x8x32xf32, #tpu.memory_space<vmem>>, %arg3: memref<2x16x32xf32, #tpu.memory_space<vmem>>, %arg4: memref<1x32x96xbf16, #tpu.memory_space<vmem>>, %arg5: memref<1x1x96xf32, #tpu.memory_space<vmem>>, %arg6: memref<1x32x32xbf16, #tpu.memory_space<vmem>>, %arg7: memref<1x1x32xf32, #tpu.memory_space<vmem>>, %arg8: memref<1x32x32xbf16, #tpu.memory_space<vmem>>, %arg9: memref<1x1x32xf32, #tpu.memory_space<vmem>>, %arg10: memref<1x32x64xbf16, #tpu.memory_space<vmem>>, %arg11: memref<1x1x64xf32, #tpu.memory_space<vmem>>, %arg12: memref<1x32x32xbf16, #tpu.memory_space<vmem>>, %arg13: memref<1x1x32xf32, #tpu.memory_space<vmem>>, %arg14: memref<1x32x64xbf16, #tpu.memory_space<vmem>>, %arg15: memref<1x1x64xf32, #tpu.memory_space<vmem>>, %arg16: memref<1x64x32xbf16, #tpu.memory_space<vmem>>, %arg17: memref<1x1x32xf32, #tpu.memory_space<vmem>>, %arg18: memref<1x1x32xf32, #tpu.memory_space<vmem>>, %arg19: memref<1x1x32xf32, #tpu.memory_space<vmem>>, %arg20: memref<1x1x32xf32, #tpu.memory_space<vmem>>, %arg21: memref<1x1x32xf32, #tpu.memory_space<vmem>>, %arg22: memref<1x1x32xf32, #tpu.memory_space<vmem>>, %arg23: memref<1x1x32xf32, #tpu.memory_space<vmem>>, %arg24: memref<1x32xf32, #tpu.memory_space<vmem>>, %arg25: memref<1x32xf32, #tpu.memory_space<vmem>>, %arg26: memref<2x8x32xf32, #tpu.memory_space<vmem>>, %arg27: memref<1x2x8x8xf32, #tpu.memory_space<vmem>>, %arg28: memref<1x2x8x16xf32, #tpu.memory_space<vmem>>, %arg29: memref<16x32xf32, #tpu.memory_space<vmem>>, %arg30: memref<16x32xf32, #tpu.memory_space<vmem>>) attributes {dimension_semantics = [#tpu.dimension_semantics<parallel>, #tpu.dimension_semantics<arbitrary>], iteration_bounds = array<i64: 1, 2>, scalar_prefetch = 0 : i64, scratch_operands = 2 : i64, tpu.core_type = #tpu.core_type<tc>, window_params = [{transform_indices = @transform_0, window_bounds = array<i64: 2, 8, 32>}, {transform_indices = @transform_1, window_bounds = array<i64: 2, 16, 32>}, {transform_indices = @transform_2, window_bounds = array<i64: 1, 32, 96>}, {transform_indices = @transform_3, window_bounds = array<i64: 1, 1, 96>}, {transform_indices = @transform_4, window_bounds = array<i64: 1, 32, 32>}, {transform_indices = @transform_5, window_bounds = array<i64: 1, 1, 32>}, {transform_indices = @transform_6, window_bounds = array<i64: 1, 32, 32>}, {transform_indices = @transform_7, window_bounds = array<i64: 1, 1, 32>}, {transform_indices = @transform_8, window_bounds = array<i64: 1, 32, 64>}, {transform_indices = @transform_9, window_bounds = array<i64: 1, 1, 64>}, {transform_indices = @transform_10, window_bounds = array<i64: 1, 32, 32>}, {transform_indices = @transform_11, window_bounds = array<i64: 1, 1, 32>}, {transform_indices = @transform_12, window_bounds = array<i64: 1, 32, 64>}, {transform_indices = @transform_13, window_bounds = array<i64: 1, 1, 64>}, {transform_indices = @transform_14, window_bounds = array<i64: 1, 64, 32>}, {transform_indices = @transform_15, window_bounds = array<i64: 1, 1, 32>}, {transform_indices = @transform_16, window_bounds = array<i64: 1, 1, 32>}, {transform_indices = @transform_17, window_bounds = array<i64: 1, 1, 32>}, {transform_indices = @transform_18, window_bounds = array<i64: 1, 1, 32>}, {transform_indices = @transform_19, window_bounds = array<i64: 1, 1, 32>}, {transform_indices = @transform_20, window_bounds = array<i64: 1, 1, 32>}, {transform_indices = @transform_21, window_bounds = array<i64: 1, 1, 32>}, {pipeline_mode = #tpu.pipeline_mode<synchronous>, transform_indices = @transform_22, window_bounds = array<i64: 1, 32>}, {pipeline_mode = #tpu.pipeline_mode<synchronous>, transform_indices = @transform_23, window_bounds = array<i64: 1, 32>}, {transform_indices = @transform_24, window_bounds = array<i64: 2, 8, 32>}, {transform_indices = @transform_25, window_bounds = array<i64: 1, 2, 8, 8>}, {transform_indices = @transform_26, window_bounds = array<i64: 1, 2, 8, 16>}]} {
    %c0_i32 = arith.constant 0 : i32
    %0 = arith.cmpi eq, %arg1, %c0_i32 : i32
    %1 = arith.extui %0 : i1 to i32
    %c0_i32_0 = arith.constant 0 : i32
    %2 = arith.cmpi ne, %1, %c0_i32_0 : i32
    scf.if %2 {
      %c0_151 = arith.constant 0 : index
      %c0_152 = arith.constant 0 : index
      %c0_153 = arith.constant 0 : index
      %365 = vector.load %arg2[%c0_151, %c0_152, %c0_153] : memref<2x8x32xf32, #tpu.memory_space<vmem>>, vector<2x8x32xf32>
      %366 = vector.shape_cast %365 : vector<2x8x32xf32> to vector<16x32xf32>
      %c0_154 = arith.constant 0 : index
      %c0_155 = arith.constant 0 : index
      %367 = vector.load %arg29[%c0_154, %c0_155] : memref<16x32xf32, #tpu.memory_space<vmem>>, vector<16x32xf32>
      tpu.vector_store %arg29[%c0_154, %c0_155], %366 {strides = array<i32>} : memref<16x32xf32, #tpu.memory_space<vmem>>, vector<16x32xf32>,
    } else {
    }
    %c0 = arith.constant 0 : index
    %c0_1 = arith.constant 0 : index
    %3 = vector.load %arg29[%c0, %c0_1] : memref<16x32xf32, #tpu.memory_space<vmem>>, vector<16x32xf32>
    %c0_2 = arith.constant 0 : index
    %c0_3 = arith.constant 0 : index
    %c0_4 = arith.constant 0 : index
    %4 = vector.load %arg3[%c0_2, %c0_3, %c0_4] : memref<2x16x32xf32, #tpu.memory_space<vmem>>, vector<2x16x32xf32>
    %5 = vector.shape_cast %4 : vector<2x16x32xf32> to vector<32x32xf32>
    %6 = arith.truncf %5 : vector<32x32xf32> to vector<32x32xbf16>
    %7 = arith.truncf %3 : vector<16x32xf32> to vector<16x32xbf16>
    %c0_5 = arith.constant 0 : index
    %c0_6 = arith.constant 0 : index
    %c0_7 = arith.constant 0 : index
    %8 = vector.load %arg4[%c0_5, %c0_6, %c0_7] : memref<1x32x96xbf16, #tpu.memory_space<vmem>>, vector<1x32x96xbf16>
    %9 = vector.shape_cast %8 : vector<1x32x96xbf16> to vector<32x96xbf16>
    %cst = arith.constant dense<0.000000e+00> : vector<16x96xf32>
    %10 = tpu.matmul %7, %9, %cst {dimension_numbers = #tpu.dot_dimension_numbers<[1], [0], [0], [1], [0, 0, 1, 1], [], []>} : vector<16x32xbf16>, vector<32x96xbf16>, vector<16x96xf32> -> vector<16x96xf32>
    %c0_8 = arith.constant 0 : index
    %c0_9 = arith.constant 0 : index
    %c0_10 = arith.constant 0 : index
    %11 = vector.load %arg5[%c0_8, %c0_9, %c0_10] : memref<1x1x96xf32, #tpu.memory_space<vmem>>, vector<1x1x96xf32>
    %12 = vector.shape_cast %11 : vector<1x1x96xf32> to vector<1x96xf32>
    %13 = vector.broadcast %12 : vector<1x96xf32> to vector<16x96xf32>
    %14 = arith.addf %10, %13 : vector<16x96xf32>
    %15 = vector.extract_strided_slice %14 {offsets = [0, 0], sizes = [16, 32], strides = [1, 1]} : vector<16x96xf32> to vector<16x32xf32>
    %cst_11 = arith.constant 0.353553385 : f32
    %16 = vector.broadcast %cst_11 : f32 to vector<16x32xf32>
    %17 = arith.mulf %15, %16 : vector<16x32xf32>
    %18 = vector.extract_strided_slice %14 {offsets = [0, 32], sizes = [16, 64], strides = [1, 1]} : vector<16x96xf32> to vector<16x64xf32>
    %c0_12 = arith.constant 0 : index
    %c0_13 = arith.constant 0 : index
    %c0_14 = arith.constant 0 : index
    %19 = vector.load %arg6[%c0_12, %c0_13, %c0_14] : memref<1x32x32xbf16, #tpu.memory_space<vmem>>, vector<1x32x32xbf16>
    %20 = vector.shape_cast %19 : vector<1x32x32xbf16> to vector<32x32xbf16>
    %c0_15 = arith.constant 0 : index
    %c0_16 = arith.constant 0 : index
    %c0_17 = arith.constant 0 : index
    %21 = vector.load %arg7[%c0_15, %c0_16, %c0_17] : memref<1x1x32xf32, #tpu.memory_space<vmem>>, vector<1x1x32xf32>
    %22 = vector.shape_cast %21 : vector<1x1x32xf32> to vector<1x32xf32>
    %23 = vector.extract_strided_slice %17 {offsets = [0, 0], sizes = [16, 8], strides = [1, 1]} : vector<16x32xf32> to vector<16x8xf32>
    %24 = vector.shape_cast %23 : vector<16x8xf32> to vector<2x8x8xf32>
    %25 = arith.truncf %24 : vector<2x8x8xf32> to vector<2x8x8xbf16>
    %26 = vector.extract_strided_slice %18 {offsets = [0, 0], sizes = [16, 8], strides = [1, 1]} : vector<16x64xf32> to vector<16x8xf32>
    %27 = vector.shape_cast %26 : vector<16x8xf32> to vector<2x8x8xf32>
    %28 = arith.truncf %27 : vector<2x8x8xf32> to vector<2x8x8xbf16>
    %29 = vector.extract_strided_slice %18 {offsets = [0, 32], sizes = [16, 8], strides = [1, 1]} : vector<16x64xf32> to vector<16x8xf32>
    %30 = vector.shape_cast %29 : vector<16x8xf32> to vector<2x8x8xf32>
    %31 = arith.truncf %30 : vector<2x8x8xf32> to vector<2x8x8xbf16>
    "tpu.trace_start"() <{level = 10 : i32, message = "bqe,bke->bqk"}> : () -> ()
    %cst_18 = arith.constant dense<0.000000e+00> : vector<2x8x8xf32>
    %32 = tpu.matmul %25, %28, %cst_18 {dimension_numbers = #tpu.dot_dimension_numbers<[2], [2], [1], [1], [0, 0, 0, 1, 1, 1], [0], [0]>} : vector<2x8x8xbf16>, vector<2x8x8xbf16>, vector<2x8x8xf32> -> vector<2x8x8xf32>
    "tpu.trace_stop"() : () -> ()
    %cst_19 = arith.constant dense<0xFF800000> : vector<2x8xf32>
    %33 = vector.multi_reduction <maximumf>, %32, %cst_19 [2] : vector<2x8x8xf32> to vector<2x8xf32>
    %34 = vector.shape_cast %33 : vector<2x8xf32> to vector<2x8x1xf32>
    %35 = vector.broadcast %34 : vector<2x8x1xf32> to vector<2x8x8xf32>
    %36 = arith.subf %32, %35 : vector<2x8x8xf32>
    %37 = math.exp %36 : vector<2x8x8xf32>
    %cst_20 = arith.constant dense<0.000000e+00> : vector<2x8xf32>
    %38 = vector.multi_reduction <add>, %37, %cst_20 [2] : vector<2x8x8xf32> to vector<2x8xf32>
    %39 = vector.shape_cast %38 : vector<2x8xf32> to vector<2x8x1xf32>
    %40 = tpu.reciprocal %39 {approx = true} : vector<2x8x1xf32> -> vector<2x8x1xf32>
    %41 = vector.broadcast %40 : vector<2x8x1xf32> to vector<2x8x8xf32>
    %42 = arith.mulf %37, %41 : vector<2x8x8xf32>
    %43 = arith.truncf %42 : vector<2x8x8xf32> to vector<2x8x8xbf16>
    "tpu.trace_start"() <{level = 10 : i32, message = "bqk,bke->bqe"}> : () -> ()
    %cst_21 = arith.constant dense<0.000000e+00> : vector<2x8x8xf32>
    %44 = tpu.matmul %43, %31, %cst_21 {dimension_numbers = #tpu.dot_dimension_numbers<[2], [1], [1], [2], [0, 0, 0, 1, 1, 2], [0], [0]>} : vector<2x8x8xbf16>, vector<2x8x8xbf16>, vector<2x8x8xf32> -> vector<2x8x8xf32>
    "tpu.trace_stop"() : () -> ()
    %45 = vector.shape_cast %44 : vector<2x8x8xf32> to vector<16x8xf32>
    %c0_22 = arith.constant 0 : index
    %c0_23 = arith.constant 0 : index
    %46 = vector.load %arg30[%c0_22, %c0_23] : memref<16x32xf32, #tpu.memory_space<vmem>>, vector<16x8xf32>
    tpu.vector_store %arg30[%c0_22, %c0_23], %45 {strides = array<i32>} : memref<16x32xf32, #tpu.memory_space<vmem>>, vector<16x8xf32>,
    %47 = vector.extract_strided_slice %17 {offsets = [0, 8], sizes = [16, 8], strides = [1, 1]} : vector<16x32xf32> to vector<16x8xf32>
    %48 = vector.shape_cast %47 : vector<16x8xf32> to vector<2x8x8xf32>
    %49 = arith.truncf %48 : vector<2x8x8xf32> to vector<2x8x8xbf16>
    %50 = vector.extract_strided_slice %18 {offsets = [0, 8], sizes = [16, 8], strides = [1, 1]} : vector<16x64xf32> to vector<16x8xf32>
    %51 = vector.shape_cast %50 : vector<16x8xf32> to vector<2x8x8xf32>
    %52 = arith.truncf %51 : vector<2x8x8xf32> to vector<2x8x8xbf16>
    %53 = vector.extract_strided_slice %18 {offsets = [0, 40], sizes = [16, 8], strides = [1, 1]} : vector<16x64xf32> to vector<16x8xf32>
    %54 = vector.shape_cast %53 : vector<16x8xf32> to vector<2x8x8xf32>
    %55 = arith.truncf %54 : vector<2x8x8xf32> to vector<2x8x8xbf16>
    "tpu.trace_start"() <{level = 10 : i32, message = "bqe,bke->bqk"}> : () -> ()
    %cst_24 = arith.constant dense<0.000000e+00> : vector<2x8x8xf32>
    %56 = tpu.matmul %49, %52, %cst_24 {dimension_numbers = #tpu.dot_dimension_numbers<[2], [2], [1], [1], [0, 0, 0, 1, 1, 1], [0], [0]>} : vector<2x8x8xbf16>, vector<2x8x8xbf16>, vector<2x8x8xf32> -> vector<2x8x8xf32>
    "tpu.trace_stop"() : () -> ()
    %cst_25 = arith.constant dense<0xFF800000> : vector<2x8xf32>
    %57 = vector.multi_reduction <maximumf>, %56, %cst_25 [2] : vector<2x8x8xf32> to vector<2x8xf32>
    %58 = vector.shape_cast %57 : vector<2x8xf32> to vector<2x8x1xf32>
    %59 = vector.broadcast %58 : vector<2x8x1xf32> to vector<2x8x8xf32>
    %60 = arith.subf %56, %59 : vector<2x8x8xf32>
    %61 = math.exp %60 : vector<2x8x8xf32>
    %cst_26 = arith.constant dense<0.000000e+00> : vector<2x8xf32>
    %62 = vector.multi_reduction <add>, %61, %cst_26 [2] : vector<2x8x8xf32> to vector<2x8xf32>
    %63 = vector.shape_cast %62 : vector<2x8xf32> to vector<2x8x1xf32>
    %64 = tpu.reciprocal %63 {approx = true} : vector<2x8x1xf32> -> vector<2x8x1xf32>
    %65 = vector.broadcast %64 : vector<2x8x1xf32> to vector<2x8x8xf32>
    %66 = arith.mulf %61, %65 : vector<2x8x8xf32>
    %67 = arith.addf %42, %66 : vector<2x8x8xf32>
    %68 = arith.truncf %66 : vector<2x8x8xf32> to vector<2x8x8xbf16>
    "tpu.trace_start"() <{level = 10 : i32, message = "bqk,bke->bqe"}> : () -> ()
    %cst_27 = arith.constant dense<0.000000e+00> : vector<2x8x8xf32>
    %69 = tpu.matmul %68, %55, %cst_27 {dimension_numbers = #tpu.dot_dimension_numbers<[2], [1], [1], [2], [0, 0, 0, 1, 1, 2], [0], [0]>} : vector<2x8x8xbf16>, vector<2x8x8xbf16>, vector<2x8x8xf32> -> vector<2x8x8xf32>
    "tpu.trace_stop"() : () -> ()
    %70 = vector.shape_cast %69 : vector<2x8x8xf32> to vector<16x8xf32>
    %c0_28 = arith.constant 0 : index
    %c8 = arith.constant 8 : index
    %71 = vector.load %arg30[%c0_28, %c8] : memref<16x32xf32, #tpu.memory_space<vmem>>, vector<16x8xf32>
    tpu.vector_store %arg30[%c0_28, %c8], %70 {strides = array<i32>} : memref<16x32xf32, #tpu.memory_space<vmem>>, vector<16x8xf32>,
    %72 = vector.extract_strided_slice %17 {offsets = [0, 16], sizes = [16, 8], strides = [1, 1]} : vector<16x32xf32> to vector<16x8xf32>
    %73 = vector.shape_cast %72 : vector<16x8xf32> to vector<2x8x8xf32>
    %74 = arith.truncf %73 : vector<2x8x8xf32> to vector<2x8x8xbf16>
    %75 = vector.extract_strided_slice %18 {offsets = [0, 16], sizes = [16, 8], strides = [1, 1]} : vector<16x64xf32> to vector<16x8xf32>
    %76 = vector.shape_cast %75 : vector<16x8xf32> to vector<2x8x8xf32>
    %77 = arith.truncf %76 : vector<2x8x8xf32> to vector<2x8x8xbf16>
    %78 = vector.extract_strided_slice %18 {offsets = [0, 48], sizes = [16, 8], strides = [1, 1]} : vector<16x64xf32> to vector<16x8xf32>
    %79 = vector.shape_cast %78 : vector<16x8xf32> to vector<2x8x8xf32>
    %80 = arith.truncf %79 : vector<2x8x8xf32> to vector<2x8x8xbf16>
    "tpu.trace_start"() <{level = 10 : i32, message = "bqe,bke->bqk"}> : () -> ()
    %cst_29 = arith.constant dense<0.000000e+00> : vector<2x8x8xf32>
    %81 = tpu.matmul %74, %77, %cst_29 {dimension_numbers = #tpu.dot_dimension_numbers<[2], [2], [1], [1], [0, 0, 0, 1, 1, 1], [0], [0]>} : vector<2x8x8xbf16>, vector<2x8x8xbf16>, vector<2x8x8xf32> -> vector<2x8x8xf32>
    "tpu.trace_stop"() : () -> ()
    %cst_30 = arith.constant dense<0xFF800000> : vector<2x8xf32>
    %82 = vector.multi_reduction <maximumf>, %81, %cst_30 [2] : vector<2x8x8xf32> to vector<2x8xf32>
    %83 = vector.shape_cast %82 : vector<2x8xf32> to vector<2x8x1xf32>
    %84 = vector.broadcast %83 : vector<2x8x1xf32> to vector<2x8x8xf32>
    %85 = arith.subf %81, %84 : vector<2x8x8xf32>
    %86 = math.exp %85 : vector<2x8x8xf32>
    %cst_31 = arith.constant dense<0.000000e+00> : vector<2x8xf32>
    %87 = vector.multi_reduction <add>, %86, %cst_31 [2] : vector<2x8x8xf32> to vector<2x8xf32>
    %88 = vector.shape_cast %87 : vector<2x8xf32> to vector<2x8x1xf32>
    %89 = tpu.reciprocal %88 {approx = true} : vector<2x8x1xf32> -> vector<2x8x1xf32>
    %90 = vector.broadcast %89 : vector<2x8x1xf32> to vector<2x8x8xf32>
    %91 = arith.mulf %86, %90 : vector<2x8x8xf32>
    %92 = arith.addf %67, %91 : vector<2x8x8xf32>
    %93 = arith.truncf %91 : vector<2x8x8xf32> to vector<2x8x8xbf16>
    "tpu.trace_start"() <{level = 10 : i32, message = "bqk,bke->bqe"}> : () -> ()
    %cst_32 = arith.constant dense<0.000000e+00> : vector<2x8x8xf32>
    %94 = tpu.matmul %93, %80, %cst_32 {dimension_numbers = #tpu.dot_dimension_numbers<[2], [1], [1], [2], [0, 0, 0, 1, 1, 2], [0], [0]>} : vector<2x8x8xbf16>, vector<2x8x8xbf16>, vector<2x8x8xf32> -> vector<2x8x8xf32>
    "tpu.trace_stop"() : () -> ()
    %95 = vector.shape_cast %94 : vector<2x8x8xf32> to vector<16x8xf32>
    %c0_33 = arith.constant 0 : index
    %c16 = arith.constant 16 : index
    %96 = vector.load %arg30[%c0_33, %c16] : memref<16x32xf32, #tpu.memory_space<vmem>>, vector<16x8xf32>
    tpu.vector_store %arg30[%c0_33, %c16], %95 {strides = array<i32>} : memref<16x32xf32, #tpu.memory_space<vmem>>, vector<16x8xf32>,
    %97 = vector.extract_strided_slice %17 {offsets = [0, 24], sizes = [16, 8], strides = [1, 1]} : vector<16x32xf32> to vector<16x8xf32>
    %98 = vector.shape_cast %97 : vector<16x8xf32> to vector<2x8x8xf32>
    %99 = arith.truncf %98 : vector<2x8x8xf32> to vector<2x8x8xbf16>
    %100 = vector.extract_strided_slice %18 {offsets = [0, 24], sizes = [16, 8], strides = [1, 1]} : vector<16x64xf32> to vector<16x8xf32>
    %101 = vector.shape_cast %100 : vector<16x8xf32> to vector<2x8x8xf32>
    %102 = arith.truncf %101 : vector<2x8x8xf32> to vector<2x8x8xbf16>
    %103 = vector.extract_strided_slice %18 {offsets = [0, 56], sizes = [16, 8], strides = [1, 1]} : vector<16x64xf32> to vector<16x8xf32>
    %104 = vector.shape_cast %103 : vector<16x8xf32> to vector<2x8x8xf32>
    %105 = arith.truncf %104 : vector<2x8x8xf32> to vector<2x8x8xbf16>
    "tpu.trace_start"() <{level = 10 : i32, message = "bqe,bke->bqk"}> : () -> ()
    %cst_34 = arith.constant dense<0.000000e+00> : vector<2x8x8xf32>
    %106 = tpu.matmul %99, %102, %cst_34 {dimension_numbers = #tpu.dot_dimension_numbers<[2], [2], [1], [1], [0, 0, 0, 1, 1, 1], [0], [0]>} : vector<2x8x8xbf16>, vector<2x8x8xbf16>, vector<2x8x8xf32> -> vector<2x8x8xf32>
    "tpu.trace_stop"() : () -> ()
    %cst_35 = arith.constant dense<0xFF800000> : vector<2x8xf32>
    %107 = vector.multi_reduction <maximumf>, %106, %cst_35 [2] : vector<2x8x8xf32> to vector<2x8xf32>
    %108 = vector.shape_cast %107 : vector<2x8xf32> to vector<2x8x1xf32>
    %109 = vector.broadcast %108 : vector<2x8x1xf32> to vector<2x8x8xf32>
    %110 = arith.subf %106, %109 : vector<2x8x8xf32>
    %111 = math.exp %110 : vector<2x8x8xf32>
    %cst_36 = arith.constant dense<0.000000e+00> : vector<2x8xf32>
    %112 = vector.multi_reduction <add>, %111, %cst_36 [2] : vector<2x8x8xf32> to vector<2x8xf32>
    %113 = vector.shape_cast %112 : vector<2x8xf32> to vector<2x8x1xf32>
    %114 = tpu.reciprocal %113 {approx = true} : vector<2x8x1xf32> -> vector<2x8x1xf32>
    %115 = vector.broadcast %114 : vector<2x8x1xf32> to vector<2x8x8xf32>
    %116 = arith.mulf %111, %115 : vector<2x8x8xf32>
    %117 = arith.addf %92, %116 : vector<2x8x8xf32>
    %118 = arith.truncf %116 : vector<2x8x8xf32> to vector<2x8x8xbf16>
    "tpu.trace_start"() <{level = 10 : i32, message = "bqk,bke->bqe"}> : () -> ()
    %cst_37 = arith.constant dense<0.000000e+00> : vector<2x8x8xf32>
    %119 = tpu.matmul %118, %105, %cst_37 {dimension_numbers = #tpu.dot_dimension_numbers<[2], [1], [1], [2], [0, 0, 0, 1, 1, 2], [0], [0]>} : vector<2x8x8xbf16>, vector<2x8x8xbf16>, vector<2x8x8xf32> -> vector<2x8x8xf32>
    "tpu.trace_stop"() : () -> ()
    %120 = vector.shape_cast %119 : vector<2x8x8xf32> to vector<16x8xf32>
    %c0_38 = arith.constant 0 : index
    %c24 = arith.constant 24 : index
    %121 = vector.load %arg30[%c0_38, %c24] : memref<16x32xf32, #tpu.memory_space<vmem>>, vector<16x8xf32>
    tpu.vector_store %arg30[%c0_38, %c24], %120 {strides = array<i32>} : memref<16x32xf32, #tpu.memory_space<vmem>>, vector<16x8xf32>,
    %c0_39 = arith.constant 0 : index
    %c0_40 = arith.constant 0 : index
    %122 = vector.load %arg30[%c0_39, %c0_40] : memref<16x32xf32, #tpu.memory_space<vmem>>, vector<16x32xf32>
    %123 = arith.truncf %122 : vector<16x32xf32> to vector<16x32xbf16>
    %cst_41 = arith.constant dense<0.000000e+00> : vector<16x32xf32>
    %124 = tpu.matmul %123, %20, %cst_41 {dimension_numbers = #tpu.dot_dimension_numbers<[1], [0], [0], [1], [0, 0, 1, 1], [], []>} : vector<16x32xbf16>, vector<32x32xbf16>, vector<16x32xf32> -> vector<16x32xf32>
    %125 = vector.broadcast %22 : vector<1x32xf32> to vector<16x32xf32>
    %126 = arith.addf %124, %125 : vector<16x32xf32>
    %cst_42 = arith.constant 2.500000e-01 : f32
    %127 = vector.broadcast %cst_42 : f32 to vector<2x8x8xf32>
    %128 = arith.mulf %117, %127 : vector<2x8x8xf32>
    %129 = arith.addf %3, %126 : vector<16x32xf32>
    %c0_43 = arith.constant 0 : index
    %c0_44 = arith.constant 0 : index
    %c0_45 = arith.constant 0 : index
    %130 = vector.load %arg18[%c0_43, %c0_44, %c0_45] : memref<1x1x32xf32, #tpu.memory_space<vmem>>, vector<1x1x32xf32>
    %131 = vector.shape_cast %130 : vector<1x1x32xf32> to vector<1x32xf32>
    %c0_46 = arith.constant 0 : index
    %c0_47 = arith.constant 0 : index
    %c0_48 = arith.constant 0 : index
    %132 = vector.load %arg19[%c0_46, %c0_47, %c0_48] : memref<1x1x32xf32, #tpu.memory_space<vmem>>, vector<1x1x32xf32>
    %133 = vector.shape_cast %132 : vector<1x1x32xf32> to vector<1x32xf32>
    %cst_49 = arith.constant dense<0.000000e+00> : vector<16xf32>
    %134 = vector.multi_reduction <add>, %129, %cst_49 [1] : vector<16x32xf32> to vector<16xf32>
    %135 = vector.shape_cast %134 : vector<16xf32> to vector<16x1xf32>
    %cst_50 = arith.constant 3.200000e+01 : f32
    %136 = vector.broadcast %cst_50 : f32 to vector<16x1xf32>
    %137 = arith.divf %135, %136 : vector<16x1xf32>
    %138 = vector.broadcast %137 : vector<16x1xf32> to vector<16x32xf32>
    %139 = arith.subf %129, %138 : vector<16x32xf32>
    %140 = arith.mulf %139, %139 : vector<16x32xf32>
    %cst_51 = arith.constant dense<0.000000e+00> : vector<16xf32>
    %141 = vector.multi_reduction <add>, %140, %cst_51 [1] : vector<16x32xf32> to vector<16xf32>
    %142 = vector.shape_cast %141 : vector<16xf32> to vector<16x1xf32>
    %cst_52 = arith.constant 3.200000e+01 : f32
    %143 = vector.broadcast %cst_52 : f32 to vector<16x1xf32>
    %144 = arith.divf %142, %143 : vector<16x1xf32>
    %145 = vector.broadcast %137 : vector<16x1xf32> to vector<16x32xf32>
    %146 = arith.subf %129, %145 : vector<16x32xf32>
    %cst_53 = arith.constant 9.99999997E-7 : f32
    %147 = vector.broadcast %cst_53 : f32 to vector<16x1xf32>
    %148 = arith.addf %144, %147 : vector<16x1xf32>
    %149 = math.rsqrt %148 : vector<16x1xf32>
    %150 = vector.broadcast %149 : vector<16x1xf32> to vector<16x32xf32>
    %151 = arith.mulf %146, %150 : vector<16x32xf32>
    %152 = vector.broadcast %131 : vector<1x32xf32> to vector<16x32xf32>
    %153 = arith.mulf %151, %152 : vector<16x32xf32>
    %154 = vector.broadcast %133 : vector<1x32xf32> to vector<16x32xf32>
    %155 = arith.addf %153, %154 : vector<16x32xf32>
    %156 = arith.truncf %155 : vector<16x32xf32> to vector<16x32xbf16>
    %c0_54 = arith.constant 0 : index
    %c0_55 = arith.constant 0 : index
    %c0_56 = arith.constant 0 : index
    %157 = vector.load %arg8[%c0_54, %c0_55, %c0_56] : memref<1x32x32xbf16, #tpu.memory_space<vmem>>, vector<1x32x32xbf16>
    %158 = vector.shape_cast %157 : vector<1x32x32xbf16> to vector<32x32xbf16>
    %cst_57 = arith.constant dense<0.000000e+00> : vector<16x32xf32>
    %159 = tpu.matmul %156, %158, %cst_57 {dimension_numbers = #tpu.dot_dimension_numbers<[1], [0], [0], [1], [0, 0, 1, 1], [], []>} : vector<16x32xbf16>, vector<32x32xbf16>, vector<16x32xf32> -> vector<16x32xf32>
    %c0_58 = arith.constant 0 : index
    %c0_59 = arith.constant 0 : index
    %c0_60 = arith.constant 0 : index
    %160 = vector.load %arg9[%c0_58, %c0_59, %c0_60] : memref<1x1x32xf32, #tpu.memory_space<vmem>>, vector<1x1x32xf32>
    %161 = vector.shape_cast %160 : vector<1x1x32xf32> to vector<1x32xf32>
    %162 = vector.broadcast %161 : vector<1x32xf32> to vector<16x32xf32>
    %163 = arith.addf %159, %162 : vector<16x32xf32>
    %cst_61 = arith.constant 0.353553385 : f32
    %164 = vector.broadcast %cst_61 : f32 to vector<16x32xf32>
    %165 = arith.mulf %163, %164 : vector<16x32xf32>
    %c0_62 = arith.constant 0 : index
    %c0_63 = arith.constant 0 : index
    %c0_64 = arith.constant 0 : index
    %166 = vector.load %arg10[%c0_62, %c0_63, %c0_64] : memref<1x32x64xbf16, #tpu.memory_space<vmem>>, vector<1x32x64xbf16>
    %167 = vector.shape_cast %166 : vector<1x32x64xbf16> to vector<32x64xbf16>
    %cst_65 = arith.constant dense<0.000000e+00> : vector<32x64xf32>
    %168 = tpu.matmul %6, %167, %cst_65 {dimension_numbers = #tpu.dot_dimension_numbers<[1], [0], [0], [1], [0, 0, 1, 1], [], []>} : vector<32x32xbf16>, vector<32x64xbf16>, vector<32x64xf32> -> vector<32x64xf32>
    %c0_66 = arith.constant 0 : index
    %c0_67 = arith.constant 0 : index
    %c0_68 = arith.constant 0 : index
    %169 = vector.load %arg11[%c0_66, %c0_67, %c0_68] : memref<1x1x64xf32, #tpu.memory_space<vmem>>, vector<1x1x64xf32>
    %170 = vector.shape_cast %169 : vector<1x1x64xf32> to vector<1x64xf32>
    %171 = vector.broadcast %170 : vector<1x64xf32> to vector<32x64xf32>
    %172 = arith.addf %168, %171 : vector<32x64xf32>
    %c0_69 = arith.constant 0 : index
    %c0_70 = arith.constant 0 : index
    %c0_71 = arith.constant 0 : index
    %173 = vector.load %arg12[%c0_69, %c0_70, %c0_71] : memref<1x32x32xbf16, #tpu.memory_space<vmem>>, vector<1x32x32xbf16>
    %174 = vector.shape_cast %173 : vector<1x32x32xbf16> to vector<32x32xbf16>
    %c0_72 = arith.constant 0 : index
    %c0_73 = arith.constant 0 : index
    %c0_74 = arith.constant 0 : index
    %175 = vector.load %arg13[%c0_72, %c0_73, %c0_74] : memref<1x1x32xf32, #tpu.memory_space<vmem>>, vector<1x1x32xf32>
    %176 = vector.shape_cast %175 : vector<1x1x32xf32> to vector<1x32xf32>
    %177 = vector.extract_strided_slice %165 {offsets = [0, 0], sizes = [16, 8], strides = [1, 1]} : vector<16x32xf32> to vector<16x8xf32>
    %178 = vector.shape_cast %177 : vector<16x8xf32> to vector<2x8x8xf32>
    %179 = arith.truncf %178 : vector<2x8x8xf32> to vector<2x8x8xbf16>
    %180 = vector.extract_strided_slice %172 {offsets = [0, 0], sizes = [32, 8], strides = [1, 1]} : vector<32x64xf32> to vector<32x8xf32>
    %181 = vector.shape_cast %180 : vector<32x8xf32> to vector<2x16x8xf32>
    %182 = arith.truncf %181 : vector<2x16x8xf32> to vector<2x16x8xbf16>
    %183 = vector.extract_strided_slice %172 {offsets = [0, 32], sizes = [32, 8], strides = [1, 1]} : vector<32x64xf32> to vector<32x8xf32>
    %184 = vector.shape_cast %183 : vector<32x8xf32> to vector<2x16x8xf32>
    %185 = arith.truncf %184 : vector<2x16x8xf32> to vector<2x16x8xbf16>
    "tpu.trace_start"() <{level = 10 : i32, message = "bqe,bke->bqk"}> : () -> ()
    %cst_75 = arith.constant dense<0.000000e+00> : vector<2x8x16xf32>
    %186 = tpu.matmul %179, %182, %cst_75 {dimension_numbers = #tpu.dot_dimension_numbers<[2], [2], [1], [1], [0, 0, 0, 1, 1, 1], [0], [0]>} : vector<2x8x8xbf16>, vector<2x16x8xbf16>, vector<2x8x16xf32> -> vector<2x8x16xf32>
    "tpu.trace_stop"() : () -> ()
    %cst_76 = arith.constant dense<0xFF800000> : vector<2x8xf32>
    %187 = vector.multi_reduction <maximumf>, %186, %cst_76 [2] : vector<2x8x16xf32> to vector<2x8xf32>
    %188 = vector.shape_cast %187 : vector<2x8xf32> to vector<2x8x1xf32>
    %189 = vector.broadcast %188 : vector<2x8x1xf32> to vector<2x8x16xf32>
    %190 = arith.subf %186, %189 : vector<2x8x16xf32>
    %191 = math.exp %190 : vector<2x8x16xf32>
    %cst_77 = arith.constant dense<0.000000e+00> : vector<2x8xf32>
    %192 = vector.multi_reduction <add>, %191, %cst_77 [2] : vector<2x8x16xf32> to vector<2x8xf32>
    %193 = vector.shape_cast %192 : vector<2x8xf32> to vector<2x8x1xf32>
    %194 = tpu.reciprocal %193 {approx = true} : vector<2x8x1xf32> -> vector<2x8x1xf32>
    %195 = vector.broadcast %194 : vector<2x8x1xf32> to vector<2x8x16xf32>
    %196 = arith.mulf %191, %195 : vector<2x8x16xf32>
    %197 = arith.truncf %196 : vector<2x8x16xf32> to vector<2x8x16xbf16>
    "tpu.trace_start"() <{level = 10 : i32, message = "bqk,bke->bqe"}> : () -> ()
    %cst_78 = arith.constant dense<0.000000e+00> : vector<2x8x8xf32>
    %198 = tpu.matmul %197, %185, %cst_78 {dimension_numbers = #tpu.dot_dimension_numbers<[2], [1], [1], [2], [0, 0, 0, 1, 1, 2], [0], [0]>} : vector<2x8x16xbf16>, vector<2x16x8xbf16>, vector<2x8x8xf32> -> vector<2x8x8xf32>
    "tpu.trace_stop"() : () -> ()
    %199 = vector.shape_cast %198 : vector<2x8x8xf32> to vector<16x8xf32>
    %c0_79 = arith.constant 0 : index
    %c0_80 = arith.constant 0 : index
    %200 = vector.load %arg30[%c0_79, %c0_80] : memref<16x32xf32, #tpu.memory_space<vmem>>, vector<16x8xf32>
    tpu.vector_store %arg30[%c0_79, %c0_80], %199 {strides = array<i32>} : memref<16x32xf32, #tpu.memory_space<vmem>>, vector<16x8xf32>,
    %201 = vector.extract_strided_slice %165 {offsets = [0, 8], sizes = [16, 8], strides = [1, 1]} : vector<16x32xf32> to vector<16x8xf32>
    %202 = vector.shape_cast %201 : vector<16x8xf32> to vector<2x8x8xf32>
    %203 = arith.truncf %202 : vector<2x8x8xf32> to vector<2x8x8xbf16>
    %204 = vector.extract_strided_slice %172 {offsets = [0, 8], sizes = [32, 8], strides = [1, 1]} : vector<32x64xf32> to vector<32x8xf32>
    %205 = vector.shape_cast %204 : vector<32x8xf32> to vector<2x16x8xf32>
    %206 = arith.truncf %205 : vector<2x16x8xf32> to vector<2x16x8xbf16>
    %207 = vector.extract_strided_slice %172 {offsets = [0, 40], sizes = [32, 8], strides = [1, 1]} : vector<32x64xf32> to vector<32x8xf32>
    %208 = vector.shape_cast %207 : vector<32x8xf32> to vector<2x16x8xf32>
    %209 = arith.truncf %208 : vector<2x16x8xf32> to vector<2x16x8xbf16>
    "tpu.trace_start"() <{level = 10 : i32, message = "bqe,bke->bqk"}> : () -> ()
    %cst_81 = arith.constant dense<0.000000e+00> : vector<2x8x16xf32>
    %210 = tpu.matmul %203, %206, %cst_81 {dimension_numbers = #tpu.dot_dimension_numbers<[2], [2], [1], [1], [0, 0, 0, 1, 1, 1], [0], [0]>} : vector<2x8x8xbf16>, vector<2x16x8xbf16>, vector<2x8x16xf32> -> vector<2x8x16xf32>
    "tpu.trace_stop"() : () -> ()
    %cst_82 = arith.constant dense<0xFF800000> : vector<2x8xf32>
    %211 = vector.multi_reduction <maximumf>, %210, %cst_82 [2] : vector<2x8x16xf32> to vector<2x8xf32>
    %212 = vector.shape_cast %211 : vector<2x8xf32> to vector<2x8x1xf32>
    %213 = vector.broadcast %212 : vector<2x8x1xf32> to vector<2x8x16xf32>
    %214 = arith.subf %210, %213 : vector<2x8x16xf32>
    %215 = math.exp %214 : vector<2x8x16xf32>
    %cst_83 = arith.constant dense<0.000000e+00> : vector<2x8xf32>
    %216 = vector.multi_reduction <add>, %215, %cst_83 [2] : vector<2x8x16xf32> to vector<2x8xf32>
    %217 = vector.shape_cast %216 : vector<2x8xf32> to vector<2x8x1xf32>
    %218 = tpu.reciprocal %217 {approx = true} : vector<2x8x1xf32> -> vector<2x8x1xf32>
    %219 = vector.broadcast %218 : vector<2x8x1xf32> to vector<2x8x16xf32>
    %220 = arith.mulf %215, %219 : vector<2x8x16xf32>
    %221 = arith.addf %196, %220 : vector<2x8x16xf32>
    %222 = arith.truncf %220 : vector<2x8x16xf32> to vector<2x8x16xbf16>
    "tpu.trace_start"() <{level = 10 : i32, message = "bqk,bke->bqe"}> : () -> ()
    %cst_84 = arith.constant dense<0.000000e+00> : vector<2x8x8xf32>
    %223 = tpu.matmul %222, %209, %cst_84 {dimension_numbers = #tpu.dot_dimension_numbers<[2], [1], [1], [2], [0, 0, 0, 1, 1, 2], [0], [0]>} : vector<2x8x16xbf16>, vector<2x16x8xbf16>, vector<2x8x8xf32> -> vector<2x8x8xf32>
    "tpu.trace_stop"() : () -> ()
    %224 = vector.shape_cast %223 : vector<2x8x8xf32> to vector<16x8xf32>
    %c0_85 = arith.constant 0 : index
    %c8_86 = arith.constant 8 : index
    %225 = vector.load %arg30[%c0_85, %c8_86] : memref<16x32xf32, #tpu.memory_space<vmem>>, vector<16x8xf32>
    tpu.vector_store %arg30[%c0_85, %c8_86], %224 {strides = array<i32>} : memref<16x32xf32, #tpu.memory_space<vmem>>, vector<16x8xf32>,
    %226 = vector.extract_strided_slice %165 {offsets = [0, 16], sizes = [16, 8], strides = [1, 1]} : vector<16x32xf32> to vector<16x8xf32>
    %227 = vector.shape_cast %226 : vector<16x8xf32> to vector<2x8x8xf32>
    %228 = arith.truncf %227 : vector<2x8x8xf32> to vector<2x8x8xbf16>
    %229 = vector.extract_strided_slice %172 {offsets = [0, 16], sizes = [32, 8], strides = [1, 1]} : vector<32x64xf32> to vector<32x8xf32>
    %230 = vector.shape_cast %229 : vector<32x8xf32> to vector<2x16x8xf32>
    %231 = arith.truncf %230 : vector<2x16x8xf32> to vector<2x16x8xbf16>
    %232 = vector.extract_strided_slice %172 {offsets = [0, 48], sizes = [32, 8], strides = [1, 1]} : vector<32x64xf32> to vector<32x8xf32>
    %233 = vector.shape_cast %232 : vector<32x8xf32> to vector<2x16x8xf32>
    %234 = arith.truncf %233 : vector<2x16x8xf32> to vector<2x16x8xbf16>
    "tpu.trace_start"() <{level = 10 : i32, message = "bqe,bke->bqk"}> : () -> ()
    %cst_87 = arith.constant dense<0.000000e+00> : vector<2x8x16xf32>
    %235 = tpu.matmul %228, %231, %cst_87 {dimension_numbers = #tpu.dot_dimension_numbers<[2], [2], [1], [1], [0, 0, 0, 1, 1, 1], [0], [0]>} : vector<2x8x8xbf16>, vector<2x16x8xbf16>, vector<2x8x16xf32> -> vector<2x8x16xf32>
    "tpu.trace_stop"() : () -> ()
    %cst_88 = arith.constant dense<0xFF800000> : vector<2x8xf32>
    %236 = vector.multi_reduction <maximumf>, %235, %cst_88 [2] : vector<2x8x16xf32> to vector<2x8xf32>
    %237 = vector.shape_cast %236 : vector<2x8xf32> to vector<2x8x1xf32>
    %238 = vector.broadcast %237 : vector<2x8x1xf32> to vector<2x8x16xf32>
    %239 = arith.subf %235, %238 : vector<2x8x16xf32>
    %240 = math.exp %239 : vector<2x8x16xf32>
    %cst_89 = arith.constant dense<0.000000e+00> : vector<2x8xf32>
    %241 = vector.multi_reduction <add>, %240, %cst_89 [2] : vector<2x8x16xf32> to vector<2x8xf32>
    %242 = vector.shape_cast %241 : vector<2x8xf32> to vector<2x8x1xf32>
    %243 = tpu.reciprocal %242 {approx = true} : vector<2x8x1xf32> -> vector<2x8x1xf32>
    %244 = vector.broadcast %243 : vector<2x8x1xf32> to vector<2x8x16xf32>
    %245 = arith.mulf %240, %244 : vector<2x8x16xf32>
    %246 = arith.addf %221, %245 : vector<2x8x16xf32>
    %247 = arith.truncf %245 : vector<2x8x16xf32> to vector<2x8x16xbf16>
    "tpu.trace_start"() <{level = 10 : i32, message = "bqk,bke->bqe"}> : () -> ()
    %cst_90 = arith.constant dense<0.000000e+00> : vector<2x8x8xf32>
    %248 = tpu.matmul %247, %234, %cst_90 {dimension_numbers = #tpu.dot_dimension_numbers<[2], [1], [1], [2], [0, 0, 0, 1, 1, 2], [0], [0]>} : vector<2x8x16xbf16>, vector<2x16x8xbf16>, vector<2x8x8xf32> -> vector<2x8x8xf32>
    "tpu.trace_stop"() : () -> ()
    %249 = vector.shape_cast %248 : vector<2x8x8xf32> to vector<16x8xf32>
    %c0_91 = arith.constant 0 : index
    %c16_92 = arith.constant 16 : index
    %250 = vector.load %arg30[%c0_91, %c16_92] : memref<16x32xf32, #tpu.memory_space<vmem>>, vector<16x8xf32>
    tpu.vector_store %arg30[%c0_91, %c16_92], %249 {strides = array<i32>} : memref<16x32xf32, #tpu.memory_space<vmem>>, vector<16x8xf32>,
    %251 = vector.extract_strided_slice %165 {offsets = [0, 24], sizes = [16, 8], strides = [1, 1]} : vector<16x32xf32> to vector<16x8xf32>
    %252 = vector.shape_cast %251 : vector<16x8xf32> to vector<2x8x8xf32>
    %253 = arith.truncf %252 : vector<2x8x8xf32> to vector<2x8x8xbf16>
    %254 = vector.extract_strided_slice %172 {offsets = [0, 24], sizes = [32, 8], strides = [1, 1]} : vector<32x64xf32> to vector<32x8xf32>
    %255 = vector.shape_cast %254 : vector<32x8xf32> to vector<2x16x8xf32>
    %256 = arith.truncf %255 : vector<2x16x8xf32> to vector<2x16x8xbf16>
    %257 = vector.extract_strided_slice %172 {offsets = [0, 56], sizes = [32, 8], strides = [1, 1]} : vector<32x64xf32> to vector<32x8xf32>
    %258 = vector.shape_cast %257 : vector<32x8xf32> to vector<2x16x8xf32>
    %259 = arith.truncf %258 : vector<2x16x8xf32> to vector<2x16x8xbf16>
    "tpu.trace_start"() <{level = 10 : i32, message = "bqe,bke->bqk"}> : () -> ()
    %cst_93 = arith.constant dense<0.000000e+00> : vector<2x8x16xf32>
    %260 = tpu.matmul %253, %256, %cst_93 {dimension_numbers = #tpu.dot_dimension_numbers<[2], [2], [1], [1], [0, 0, 0, 1, 1, 1], [0], [0]>} : vector<2x8x8xbf16>, vector<2x16x8xbf16>, vector<2x8x16xf32> -> vector<2x8x16xf32>
    "tpu.trace_stop"() : () -> ()
    %cst_94 = arith.constant dense<0xFF800000> : vector<2x8xf32>
    %261 = vector.multi_reduction <maximumf>, %260, %cst_94 [2] : vector<2x8x16xf32> to vector<2x8xf32>
    %262 = vector.shape_cast %261 : vector<2x8xf32> to vector<2x8x1xf32>
    %263 = vector.broadcast %262 : vector<2x8x1xf32> to vector<2x8x16xf32>
    %264 = arith.subf %260, %263 : vector<2x8x16xf32>
    %265 = math.exp %264 : vector<2x8x16xf32>
    %cst_95 = arith.constant dense<0.000000e+00> : vector<2x8xf32>
    %266 = vector.multi_reduction <add>, %265, %cst_95 [2] : vector<2x8x16xf32> to vector<2x8xf32>
    %267 = vector.shape_cast %266 : vector<2x8xf32> to vector<2x8x1xf32>
    %268 = tpu.reciprocal %267 {approx = true} : vector<2x8x1xf32> -> vector<2x8x1xf32>
    %269 = vector.broadcast %268 : vector<2x8x1xf32> to vector<2x8x16xf32>
    %270 = arith.mulf %265, %269 : vector<2x8x16xf32>
    %271 = arith.addf %246, %270 : vector<2x8x16xf32>
    %272 = arith.truncf %270 : vector<2x8x16xf32> to vector<2x8x16xbf16>
    "tpu.trace_start"() <{level = 10 : i32, message = "bqk,bke->bqe"}> : () -> ()
    %cst_96 = arith.constant dense<0.000000e+00> : vector<2x8x8xf32>
    %273 = tpu.matmul %272, %259, %cst_96 {dimension_numbers = #tpu.dot_dimension_numbers<[2], [1], [1], [2], [0, 0, 0, 1, 1, 2], [0], [0]>} : vector<2x8x16xbf16>, vector<2x16x8xbf16>, vector<2x8x8xf32> -> vector<2x8x8xf32>
    "tpu.trace_stop"() : () -> ()
    %274 = vector.shape_cast %273 : vector<2x8x8xf32> to vector<16x8xf32>
    %c0_97 = arith.constant 0 : index
    %c24_98 = arith.constant 24 : index
    %275 = vector.load %arg30[%c0_97, %c24_98] : memref<16x32xf32, #tpu.memory_space<vmem>>, vector<16x8xf32>
    tpu.vector_store %arg30[%c0_97, %c24_98], %274 {strides = array<i32>} : memref<16x32xf32, #tpu.memory_space<vmem>>, vector<16x8xf32>,
    %c0_99 = arith.constant 0 : index
    %c0_100 = arith.constant 0 : index
    %276 = vector.load %arg30[%c0_99, %c0_100] : memref<16x32xf32, #tpu.memory_space<vmem>>, vector<16x32xf32>
    %277 = arith.truncf %276 : vector<16x32xf32> to vector<16x32xbf16>
    %cst_101 = arith.constant dense<0.000000e+00> : vector<16x32xf32>
    %278 = tpu.matmul %277, %174, %cst_101 {dimension_numbers = #tpu.dot_dimension_numbers<[1], [0], [0], [1], [0, 0, 1, 1], [], []>} : vector<16x32xbf16>, vector<32x32xbf16>, vector<16x32xf32> -> vector<16x32xf32>
    %279 = vector.broadcast %176 : vector<1x32xf32> to vector<16x32xf32>
    %280 = arith.addf %278, %279 : vector<16x32xf32>
    %cst_102 = arith.constant 2.500000e-01 : f32
    %281 = vector.broadcast %cst_102 : f32 to vector<2x8x16xf32>
    %282 = arith.mulf %271, %281 : vector<2x8x16xf32>
    %283 = arith.addf %155, %280 : vector<16x32xf32>
    %c0_103 = arith.constant 0 : index
    %c0_104 = arith.constant 0 : index
    %c0_105 = arith.constant 0 : index
    %284 = vector.load %arg20[%c0_103, %c0_104, %c0_105] : memref<1x1x32xf32, #tpu.memory_space<vmem>>, vector<1x1x32xf32>
    %285 = vector.shape_cast %284 : vector<1x1x32xf32> to vector<1x32xf32>
    %c0_106 = arith.constant 0 : index
    %c0_107 = arith.constant 0 : index
    %c0_108 = arith.constant 0 : index
    %286 = vector.load %arg21[%c0_106, %c0_107, %c0_108] : memref<1x1x32xf32, #tpu.memory_space<vmem>>, vector<1x1x32xf32>
    %287 = vector.shape_cast %286 : vector<1x1x32xf32> to vector<1x32xf32>
    %cst_109 = arith.constant dense<0.000000e+00> : vector<16xf32>
    %288 = vector.multi_reduction <add>, %283, %cst_109 [1] : vector<16x32xf32> to vector<16xf32>
    %289 = vector.shape_cast %288 : vector<16xf32> to vector<16x1xf32>
    %cst_110 = arith.constant 3.200000e+01 : f32
    %290 = vector.broadcast %cst_110 : f32 to vector<16x1xf32>
    %291 = arith.divf %289, %290 : vector<16x1xf32>
    %292 = vector.broadcast %291 : vector<16x1xf32> to vector<16x32xf32>
    %293 = arith.subf %283, %292 : vector<16x32xf32>
    %294 = arith.mulf %293, %293 : vector<16x32xf32>
    %cst_111 = arith.constant dense<0.000000e+00> : vector<16xf32>
    %295 = vector.multi_reduction <add>, %294, %cst_111 [1] : vector<16x32xf32> to vector<16xf32>
    %296 = vector.shape_cast %295 : vector<16xf32> to vector<16x1xf32>
    %cst_112 = arith.constant 3.200000e+01 : f32
    %297 = vector.broadcast %cst_112 : f32 to vector<16x1xf32>
    %298 = arith.divf %296, %297 : vector<16x1xf32>
    %299 = vector.broadcast %291 : vector<16x1xf32> to vector<16x32xf32>
    %300 = arith.subf %283, %299 : vector<16x32xf32>
    %cst_113 = arith.constant 9.99999997E-7 : f32
    %301 = vector.broadcast %cst_113 : f32 to vector<16x1xf32>
    %302 = arith.addf %298, %301 : vector<16x1xf32>
    %303 = math.rsqrt %302 : vector<16x1xf32>
    %304 = vector.broadcast %303 : vector<16x1xf32> to vector<16x32xf32>
    %305 = arith.mulf %300, %304 : vector<16x32xf32>
    %306 = vector.broadcast %285 : vector<1x32xf32> to vector<16x32xf32>
    %307 = arith.mulf %305, %306 : vector<16x32xf32>
    %308 = vector.broadcast %287 : vector<1x32xf32> to vector<16x32xf32>
    %309 = arith.addf %307, %308 : vector<16x32xf32>
    %310 = arith.truncf %309 : vector<16x32xf32> to vector<16x32xbf16>
    %c0_114 = arith.constant 0 : index
    %c0_115 = arith.constant 0 : index
    %c0_116 = arith.constant 0 : index
    %311 = vector.load %arg14[%c0_114, %c0_115, %c0_116] : memref<1x32x64xbf16, #tpu.memory_space<vmem>>, vector<1x32x64xbf16>
    %312 = vector.shape_cast %311 : vector<1x32x64xbf16> to vector<32x64xbf16>
    %cst_117 = arith.constant dense<0.000000e+00> : vector<16x64xf32>
    %313 = tpu.matmul %310, %312, %cst_117 {dimension_numbers = #tpu.dot_dimension_numbers<[1], [0], [0], [1], [0, 0, 1, 1], [], []>} : vector<16x32xbf16>, vector<32x64xbf16>, vector<16x64xf32> -> vector<16x64xf32>
    %c0_118 = arith.constant 0 : index
    %c0_119 = arith.constant 0 : index
    %c0_120 = arith.constant 0 : index
    %314 = vector.load %arg15[%c0_118, %c0_119, %c0_120] : memref<1x1x64xf32, #tpu.memory_space<vmem>>, vector<1x1x64xf32>
    %315 = vector.shape_cast %314 : vector<1x1x64xf32> to vector<1x64xf32>
    %316 = vector.broadcast %315 : vector<1x64xf32> to vector<16x64xf32>
    %317 = arith.addf %313, %316 : vector<16x64xf32>
    %cst_121 = arith.constant 0.000000e+00 : f32
    %318 = vector.broadcast %cst_121 : f32 to vector<16x64xf32>
    %319 = arith.maximumf %317, %318 : vector<16x64xf32>
    %320 = arith.truncf %319 : vector<16x64xf32> to vector<16x64xbf16>
    %c0_122 = arith.constant 0 : index
    %c0_123 = arith.constant 0 : index
    %c0_124 = arith.constant 0 : index
    %321 = vector.load %arg16[%c0_122, %c0_123, %c0_124] : memref<1x64x32xbf16, #tpu.memory_space<vmem>>, vector<1x64x32xbf16>
    %322 = vector.shape_cast %321 : vector<1x64x32xbf16> to vector<64x32xbf16>
    %cst_125 = arith.constant dense<0.000000e+00> : vector<16x32xf32>
    %323 = tpu.matmul %320, %322, %cst_125 {dimension_numbers = #tpu.dot_dimension_numbers<[1], [0], [0], [1], [0, 0, 1, 1], [], []>} : vector<16x64xbf16>, vector<64x32xbf16>, vector<16x32xf32> -> vector<16x32xf32>
    %c0_126 = arith.constant 0 : index
    %c0_127 = arith.constant 0 : index
    %c0_128 = arith.constant 0 : index
    %324 = vector.load %arg17[%c0_126, %c0_127, %c0_128] : memref<1x1x32xf32, #tpu.memory_space<vmem>>, vector<1x1x32xf32>
    %325 = vector.shape_cast %324 : vector<1x1x32xf32> to vector<1x32xf32>
    %326 = vector.broadcast %325 : vector<1x32xf32> to vector<16x32xf32>
    %327 = arith.addf %323, %326 : vector<16x32xf32>
    %328 = arith.addf %309, %327 : vector<16x32xf32>
    %c0_129 = arith.constant 0 : index
    %c0_130 = arith.constant 0 : index
    %c0_131 = arith.constant 0 : index
    %329 = vector.load %arg22[%c0_129, %c0_130, %c0_131] : memref<1x1x32xf32, #tpu.memory_space<vmem>>, vector<1x1x32xf32>
    %330 = vector.shape_cast %329 : vector<1x1x32xf32> to vector<1x32xf32>
    %c0_132 = arith.constant 0 : index
    %c0_133 = arith.constant 0 : index
    %c0_134 = arith.constant 0 : index
    %331 = vector.load %arg23[%c0_132, %c0_133, %c0_134] : memref<1x1x32xf32, #tpu.memory_space<vmem>>, vector<1x1x32xf32>
    %332 = vector.shape_cast %331 : vector<1x1x32xf32> to vector<1x32xf32>
    %cst_135 = arith.constant dense<0.000000e+00> : vector<16xf32>
    %333 = vector.multi_reduction <add>, %328, %cst_135 [1] : vector<16x32xf32> to vector<16xf32>
    %334 = vector.shape_cast %333 : vector<16xf32> to vector<16x1xf32>
    %cst_136 = arith.constant 3.200000e+01 : f32
    %335 = vector.broadcast %cst_136 : f32 to vector<16x1xf32>
    %336 = arith.divf %334, %335 : vector<16x1xf32>
    %337 = vector.broadcast %336 : vector<16x1xf32> to vector<16x32xf32>
    %338 = arith.subf %328, %337 : vector<16x32xf32>
    %339 = arith.mulf %338, %338 : vector<16x32xf32>
    %cst_137 = arith.constant dense<0.000000e+00> : vector<16xf32>
    %340 = vector.multi_reduction <add>, %339, %cst_137 [1] : vector<16x32xf32> to vector<16xf32>
    %341 = vector.shape_cast %340 : vector<16xf32> to vector<16x1xf32>
    %cst_138 = arith.constant 3.200000e+01 : f32
    %342 = vector.broadcast %cst_138 : f32 to vector<16x1xf32>
    %343 = arith.divf %341, %342 : vector<16x1xf32>
    %344 = vector.broadcast %336 : vector<16x1xf32> to vector<16x32xf32>
    %345 = arith.subf %328, %344 : vector<16x32xf32>
    %cst_139 = arith.constant 9.99999997E-7 : f32
    %346 = vector.broadcast %cst_139 : f32 to vector<16x1xf32>
    %347 = arith.addf %343, %346 : vector<16x1xf32>
    %348 = math.rsqrt %347 : vector<16x1xf32>
    %349 = vector.broadcast %348 : vector<16x1xf32> to vector<16x32xf32>
    %350 = arith.mulf %345, %349 : vector<16x32xf32>
    %351 = vector.broadcast %330 : vector<1x32xf32> to vector<16x32xf32>
    %352 = arith.mulf %350, %351 : vector<16x32xf32>
    %353 = vector.broadcast %332 : vector<1x32xf32> to vector<16x32xf32>
    %354 = arith.addf %352, %353 : vector<16x32xf32>
    %c0_140 = arith.constant 0 : index
    %c0_141 = arith.constant 0 : index
    %355 = vector.load %arg29[%c0_140, %c0_141] : memref<16x32xf32, #tpu.memory_space<vmem>>, vector<16x32xf32>
    tpu.vector_store %arg29[%c0_140, %c0_141], %354 {strides = array<i32>} : memref<16x32xf32, #tpu.memory_space<vmem>>, vector<16x32xf32>,
    %c0_142 = arith.constant 0 : index
    %c0_143 = arith.constant 0 : index
    %c0_144 = arith.constant 0 : index
    %c0_145 = arith.constant 0 : index
    %356 = vector.load %arg27[%c0_142, %c0_143, %c0_144, %c0_145] : memref<1x2x8x8xf32, #tpu.memory_space<vmem>>, vector<1x2x8x8xf32>
    %357 = vector.shape_cast %356 : vector<1x2x8x8xf32> to vector<2x8x8xf32>
    %358 = vector.shape_cast %128 : vector<2x8x8xf32> to vector<1x2x8x8xf32>
    tpu.vector_store %arg27[%c0_142, %c0_143, %c0_144, %c0_145], %358 {strides = array<i32>} : memref<1x2x8x8xf32, #tpu.memory_space<vmem>>, vector<1x2x8x8xf32>,
    %c0_146 = arith.constant 0 : index
    %c0_147 = arith.constant 0 : index
    %c0_148 = arith.constant 0 : index
    %c0_149 = arith.constant 0 : index
    %359 = vector.load %arg28[%c0_146, %c0_147, %c0_148, %c0_149] : memref<1x2x8x16xf32, #tpu.memory_space<vmem>>, vector<1x2x8x16xf32>
    %360 = vector.shape_cast %359 : vector<1x2x8x16xf32> to vector<2x8x16xf32>
    %361 = vector.shape_cast %282 : vector<2x8x16xf32> to vector<1x2x8x16xf32>
    tpu.vector_store %arg28[%c0_146, %c0_147, %c0_148, %c0_149], %361 {strides = array<i32>} : memref<1x2x8x16xf32, #tpu.memory_space<vmem>>, vector<1x2x8x16xf32>,
    %c1_i32 = arith.constant 1 : i32
    %362 = arith.cmpi eq, %arg1, %c1_i32 : i32
    %363 = arith.extui %362 : i1 to i32
    %c0_i32_150 = arith.constant 0 : i32
    %364 = arith.cmpi ne, %363, %c0_i32_150 : i32
    scf.if %364 {
      %c0_151 = arith.constant 0 : index
      %c0_152 = arith.constant 0 : index
      %365 = vector.load %arg24[%c0_151, %c0_152] : memref<1x32xf32, #tpu.memory_space<vmem>>, vector<1x32xf32>
      %c0_153 = arith.constant 0 : index
      %c0_154 = arith.constant 0 : index
      %366 = vector.load %arg25[%c0_153, %c0_154] : memref<1x32xf32, #tpu.memory_space<vmem>>, vector<1x32xf32>
      %cst_155 = arith.constant dense<0.000000e+00> : vector<16xf32>
      %367 = vector.multi_reduction <add>, %354, %cst_155 [1] : vector<16x32xf32> to vector<16xf32>
      %368 = vector.shape_cast %367 : vector<16xf32> to vector<16x1xf32>
      %cst_156 = arith.constant 3.200000e+01 : f32
      %369 = vector.broadcast %cst_156 : f32 to vector<16x1xf32>
      %370 = arith.divf %368, %369 : vector<16x1xf32>
      %371 = vector.broadcast %370 : vector<16x1xf32> to vector<16x32xf32>
      %372 = arith.subf %354, %371 : vector<16x32xf32>
      %373 = arith.mulf %372, %372 : vector<16x32xf32>
      %cst_157 = arith.constant dense<0.000000e+00> : vector<16xf32>
      %374 = vector.multi_reduction <add>, %373, %cst_157 [1] : vector<16x32xf32> to vector<16xf32>
      %375 = vector.shape_cast %374 : vector<16xf32> to vector<16x1xf32>
      %cst_158 = arith.constant 3.200000e+01 : f32
      %376 = vector.broadcast %cst_158 : f32 to vector<16x1xf32>
      %377 = arith.divf %375, %376 : vector<16x1xf32>
      %378 = vector.broadcast %370 : vector<16x1xf32> to vector<16x32xf32>
      %379 = arith.subf %354, %378 : vector<16x32xf32>
      %cst_159 = arith.constant 9.99999997E-7 : f32
      %380 = vector.broadcast %cst_159 : f32 to vector<16x1xf32>
      %381 = arith.addf %377, %380 : vector<16x1xf32>
      %382 = math.rsqrt %381 : vector<16x1xf32>
      %383 = vector.broadcast %382 : vector<16x1xf32> to vector<16x32xf32>
      %384 = arith.mulf %379, %383 : vector<16x32xf32>
      %385 = vector.broadcast %365 : vector<1x32xf32> to vector<16x32xf32>
      %386 = arith.mulf %384, %385 : vector<16x32xf32>
      %387 = vector.broadcast %366 : vector<1x32xf32> to vector<16x32xf32>
      %388 = arith.addf %386, %387 : vector<16x32xf32>
      %389 = vector.shape_cast %388 : vector<16x32xf32> to vector<2x8x32xf32>
      %c0_160 = arith.constant 0 : index
      %c0_161 = arith.constant 0 : index
      %c0_162 = arith.constant 0 : index
      %390 = vector.load %arg26[%c0_160, %c0_161, %c0_162] : memref<2x8x32xf32, #tpu.memory_space<vmem>>, vector<2x8x32xf32>
      tpu.vector_store %arg26[%c0_160, %c0_161, %c0_162], %389 {strides = array<i32>} : memref<2x8x32xf32, #tpu.memory_space<vmem>>, vector<2x8x32xf32>,
    } else {
    }
    return
  }
  func.func @transform_0(%arg0: i32, %arg1: i32) -> (i32, i32, i32) {
    %c0_i32 = arith.constant 0 : i32
    %c0_i32_0 = arith.constant 0 : i32
    %c0_i32_1 = arith.constant 0 : i32
    return %arg0, %c0_i32, %c0_i32_0 : i32, i32, i32
  }
  func.func @transform_1(%arg0: i32, %arg1: i32) -> (i32, i32, i32) {
    %c0_i32 = arith.constant 0 : i32
    %c0_i32_0 = arith.constant 0 : i32
    %c0_i32_1 = arith.constant 0 : i32
    return %arg0, %c0_i32, %c0_i32_0 : i32, i32, i32
  }
  func.func @transform_2(%arg0: i32, %arg1: i32) -> (i32, i32, i32) {
    %c0_i32 = arith.constant 0 : i32
    %c0_i32_0 = arith.constant 0 : i32
    %c0_i32_1 = arith.constant 0 : i32
    return %arg1, %c0_i32, %c0_i32_0 : i32, i32, i32
  }
  func.func @transform_3(%arg0: i32, %arg1: i32) -> (i32, i32, i32) {
    %c0_i32 = arith.constant 0 : i32
    %c0_i32_0 = arith.constant 0 : i32
    %c0_i32_1 = arith.constant 0 : i32
    return %arg1, %c0_i32, %c0_i32_0 : i32, i32, i32
  }
  func.func @transform_4(%arg0: i32, %arg1: i32) -> (i32, i32, i32) {
    %c0_i32 = arith.constant 0 : i32
    %c0_i32_0 = arith.constant 0 : i32
    %c0_i32_1 = arith.constant 0 : i32
    return %arg1, %c0_i32, %c0_i32_0 : i32, i32, i32
  }
  func.func @transform_5(%arg0: i32, %arg1: i32) -> (i32, i32, i32) {
    %c0_i32 = arith.constant 0 : i32
    %c0_i32_0 = arith.constant 0 : i32
    %c0_i32_1 = arith.constant 0 : i32
    return %arg1, %c0_i32, %c0_i32_0 : i32, i32, i32
  }
  func.func @transform_6(%arg0: i32, %arg1: i32) -> (i32, i32, i32) {
    %c0_i32 = arith.constant 0 : i32
    %c0_i32_0 = arith.constant 0 : i32
    %c0_i32_1 = arith.constant 0 : i32
    return %arg1, %c0_i32, %c0_i32_0 : i32, i32, i32
  }
  func.func @transform_7(%arg0: i32, %arg1: i32) -> (i32, i32, i32) {
    %c0_i32 = arith.constant 0 : i32
    %c0_i32_0 = arith.constant 0 : i32
    %c0_i32_1 = arith.constant 0 : i32
    return %arg1, %c0_i32, %c0_i32_0 : i32, i32, i32
  }
  func.func @transform_8(%arg0: i32, %arg1: i32) -> (i32, i32, i32) {
    %c0_i32 = arith.constant 0 : i32
    %c0_i32_0 = arith.constant 0 : i32
    %c0_i32_1 = arith.constant 0 : i32
    return %arg1, %c0_i32, %c0_i32_0 : i32, i32, i32
  }
  func.func @transform_9(%arg0: i32, %arg1: i32) -> (i32, i32, i32) {
    %c0_i32 = arith.constant 0 : i32
    %c0_i32_0 = arith.constant 0 : i32
    %c0_i32_1 = arith.constant 0 : i32
    return %arg1, %c0_i32, %c0_i32_0 : i32, i32, i32
  }
  func.func @transform_10(%arg0: i32, %arg1: i32) -> (i32, i32, i32) {
    %c0_i32 = arith.constant 0 : i32
    %c0_i32_0 = arith.constant 0 : i32
    %c0_i32_1 = arith.constant 0 : i32
    return %arg1, %c0_i32, %c0_i32_0 : i32, i32, i32
  }
  func.func @transform_11(%arg0: i32, %arg1: i32) -> (i32, i32, i32) {
    %c0_i32 = arith.constant 0 : i32
    %c0_i32_0 = arith.constant 0 : i32
    %c0_i32_1 = arith.constant 0 : i32
    return %arg1, %c0_i32, %c0_i32_0 : i32, i32, i32
  }
  func.func @transform_12(%arg0: i32, %arg1: i32) -> (i32, i32, i32) {
    %c0_i32 = arith.constant 0 : i32
    %c0_i32_0 = arith.constant 0 : i32
    %c0_i32_1 = arith.constant 0 : i32
    return %arg1, %c0_i32, %c0_i32_0 : i32, i32, i32
  }
  func.func @transform_13(%arg0: i32, %arg1: i32) -> (i32, i32, i32) {
    %c0_i32 = arith.constant 0 : i32
    %c0_i32_0 = arith.constant 0 : i32
    %c0_i32_1 = arith.constant 0 : i32
    return %arg1, %c0_i32, %c0_i32_0 : i32, i32, i32
  }
  func.func @transform_14(%arg0: i32, %arg1: i32) -> (i32, i32, i32) {
    %c0_i32 = arith.constant 0 : i32
    %c0_i32_0 = arith.constant 0 : i32
    %c0_i32_1 = arith.constant 0 : i32
    return %arg1, %c0_i32, %c0_i32_0 : i32, i32, i32
  }
  func.func @transform_15(%arg0: i32, %arg1: i32) -> (i32, i32, i32) {
    %c0_i32 = arith.constant 0 : i32
    %c0_i32_0 = arith.constant 0 : i32
    %c0_i32_1 = arith.constant 0 : i32
    return %arg1, %c0_i32, %c0_i32_0 : i32, i32, i32
  }
  func.func @transform_16(%arg0: i32, %arg1: i32) -> (i32, i32, i32) {
    %c0_i32 = arith.constant 0 : i32
    %c0_i32_0 = arith.constant 0 : i32
    %c0_i32_1 = arith.constant 0 : i32
    return %arg1, %c0_i32, %c0_i32_0 : i32, i32, i32
  }
  func.func @transform_17(%arg0: i32, %arg1: i32) -> (i32, i32, i32) {
    %c0_i32 = arith.constant 0 : i32
    %c0_i32_0 = arith.constant 0 : i32
    %c0_i32_1 = arith.constant 0 : i32
    return %arg1, %c0_i32, %c0_i32_0 : i32, i32, i32
  }
  func.func @transform_18(%arg0: i32, %arg1: i32) -> (i32, i32, i32) {
    %c0_i32 = arith.constant 0 : i32
    %c0_i32_0 = arith.constant 0 : i32
    %c0_i32_1 = arith.constant 0 : i32
    return %arg1, %c0_i32, %c0_i32_0 : i32, i32, i32
  }
  func.func @transform_19(%arg0: i32, %arg1: i32) -> (i32, i32, i32) {
    %c0_i32 = arith.constant 0 : i32
    %c0_i32_0 = arith.constant 0 : i32
    %c0_i32_1 = arith.constant 0 : i32
    return %arg1, %c0_i32, %c0_i32_0 : i32, i32, i32
  }
  func.func @transform_20(%arg0: i32, %arg1: i32) -> (i32, i32, i32) {
    %c0_i32 = arith.constant 0 : i32
    %c0_i32_0 = arith.constant 0 : i32
    %c0_i32_1 = arith.constant 0 : i32
    return %arg1, %c0_i32, %c0_i32_0 : i32, i32, i32
  }
  func.func @transform_21(%arg0: i32, %arg1: i32) -> (i32, i32, i32) {
    %c0_i32 = arith.constant 0 : i32
    %c0_i32_0 = arith.constant 0 : i32
    %c0_i32_1 = arith.constant 0 : i32
    return %arg1, %c0_i32, %c0_i32_0 : i32, i32, i32
  }
  func.func @transform_22(%arg0: i32, %arg1: i32) -> (i32, i32) {
    %c0_i32 = arith.constant 0 : i32
    %c0_i32_0 = arith.constant 0 : i32
    %c0_i32_1 = arith.constant 0 : i32
    return %c0_i32, %c0_i32_0 : i32, i32
  }
  func.func @transform_23(%arg0: i32, %arg1: i32) -> (i32, i32) {
    %c0_i32 = arith.constant 0 : i32
    %c0_i32_0 = arith.constant 0 : i32
    %c0_i32_1 = arith.constant 0 : i32
    return %c0_i32, %c0_i32_0 : i32, i32
  }
  func.func @transform_24(%arg0: i32, %arg1: i32) -> (i32, i32, i32) {
    %c0_i32 = arith.constant 0 : i32
    %c0_i32_0 = arith.constant 0 : i32
    %c0_i32_1 = arith.constant 0 : i32
    return %arg0, %c0_i32, %c0_i32_0 : i32, i32, i32
  }
  func.func @transform_25(%arg0: i32, %arg1: i32) -> (i32, i32, i32, i32) {
    %c0_i32 = arith.constant 0 : i32
    %c0_i32_0 = arith.constant 0 : i32
    %c0_i32_1 = arith.constant 0 : i32
    return %arg1, %arg0, %c0_i32, %c0_i32_0 : i32, i32, i32, i32
  }
  func.func @transform_26(%arg0: i32, %arg1: i32) -> (i32, i32, i32, i32) {
    %c0_i32 = arith.constant 0 : i32
    %c0_i32_0 = arith.constant 0 : i32
    %c0_i32_1 = arith.constant 0 : i32
    return %arg1, %arg0, %c0_i32, %c0_i32_0 : i32, i32, i32, i32
  }
}

</mosaic_0001>

<llo_original>
// kernel: tpu_custom_call.1
$region0: #{tpu_custom_call.1}
  #allocation0 [shape = 'u32[]', space=smem, size = 0x4, offset = 0x4, fixed_abs, tag = 'smem constant byte address 0x4 - core index']
  #allocation1 [shape = 'u32[144,128]{1,0:T(1,128)}', space=vmem, size = 0x12000, scoped, tag = 'internal scratch']
  #allocation2 [shape = 'f32[16,32]{1,0:T(8,128)}', space=vmem, size = 0x2000, scoped, tag = 'scratch operand']
  #allocation3 [shape = 'f32[16,32]{1,0:T(8,128)}', space=vmem, size = 0x2000, scoped, tag = 'scratch operand']
  %s0 = inlined_call_operand.hbm [shape: f32[2,8,32], index: 0, kind: input, shape index: {}]
  %s1 = inlined_call_operand.vmem [shape: f32[2,16,32], index: 1, kind: input, shape index: {}]
  %s2 = inlined_call_operand.vmem [shape: bf16[2,32,96], index: 2, kind: input, shape index: {}]
  %s3 = inlined_call_operand.vmem [shape: f32[2,1,96], index: 3, kind: input, shape index: {}]
  %s4 = inlined_call_operand.vmem [shape: bf16[2,32,32], index: 4, kind: input, shape index: {}]
  %s5 = inlined_call_operand.vmem [shape: f32[2,1,32], index: 5, kind: input, shape index: {}]
  %s6 = inlined_call_operand.hbm [shape: bf16[2,32,32], index: 6, kind: input, shape index: {}]
  %s7 = inlined_call_operand.vmem [shape: f32[2,1,32], index: 7, kind: input, shape index: {}]
  %s8 = inlined_call_operand.hbm [shape: bf16[2,32,64], index: 8, kind: input, shape index: {}]
  %s9 = inlined_call_operand.vmem [shape: f32[2,1,64], index: 9, kind: input, shape index: {}]
  %s10 = inlined_call_operand.hbm [shape: bf16[2,32,32], index: 10, kind: input, shape index: {}]
  %s11 = inlined_call_operand.vmem [shape: f32[2,1,32], index: 11, kind: input, shape index: {}]
  %s12 = inlined_call_operand.hbm [shape: bf16[2,32,64], index: 12, kind: input, shape index: {}]
  %s13 = inlined_call_operand.vmem [shape: f32[2,1,64], index: 13, kind: input, shape index: {}]
  %s14 = inlined_call_operand.vmem [shape: bf16[2,64,32], index: 14, kind: input, shape index: {}]
  %s15 = inlined_call_operand.vmem [shape: f32[2,1,32], index: 15, kind: input, shape index: {}]
  %s16 = inlined_call_operand.vmem [shape: f32[2,1,32], index: 16, kind: input, shape index: {}]
  %s17 = inlined_call_operand.vmem [shape: f32[2,1,32], index: 17, kind: input, shape index: {}]
  %s18 = inlined_call_operand.vmem [shape: f32[2,1,32], index: 18, kind: input, shape index: {}]
  %s19 = inlined_call_operand.vmem [shape: f32[2,1,32], index: 19, kind: input, shape index: {}]
  %s20 = inlined_call_operand.vmem [shape: f32[2,1,32], index: 20, kind: input, shape index: {}]
  %s21 = inlined_call_operand.vmem [shape: f32[2,1,32], index: 21, kind: input, shape index: {}]
  %s22 = inlined_call_operand.vmem [shape: f32[1,32], index: 22, kind: input, shape index: {}]
  %s23 = inlined_call_operand.vmem [shape: f32[1,32], index: 23, kind: input, shape index: {}]
  %s24 = inlined_call_operand.hbm [shape: f32[2,8,32], index: 24, kind: output, shape index: {0}]
  %s25 = inlined_call_operand.hbm [shape: f32[2,2,8,8], index: 25, kind: output, shape index: {1}]
  %s26 = inlined_call_operand.hbm [shape: f32[2,2,8,16], index: 26, kind: output, shape index: {2}]
  %27 = xla_tuple %s24, %s25, %s26
  %s28 = sld [smem:[#allocation0]]
  $region173: #{tpu_custom_call.1} parent=0
    _
  %s30 = ssub.s32 1, %s28
  %s31 = scalar_select 0, %s30, %s28
  $region1: #{tpu_custom_call.1} parent=0
    #allocation4 [shape = 'u8[8192]{0}', space=vmem, size = 0x2000, scoped, tag = 'input window, operand 0, single buffered']
    #allocation5 [shape = 's32[2]{0}', space=sflag, size = 0x8, scoped, tag = 'scoped memory for tpu_custom_call.1']
    #allocation6 [shape = 's32[2]{0}', space=sflag, size = 0x8, scoped, tag = 'scoped memory for tpu_custom_call.1']
    #allocation7 [shape = 'u8[16384]{0}', space=vmem, size = 0x4000, scoped, tag = 'input window, operand 6']
    #allocation8 [shape = 's32[2]{0}', space=sflag, size = 0x8, scoped, tag = 'scoped memory for tpu_custom_call.1']
    #allocation9 [shape = 'u8[16384]{0}', space=vmem, size = 0x4000, scoped, tag = 'input window, operand 8']
    #allocation10 [shape = 'u8[16384]{0}', space=vmem, size = 0x4000, scoped, tag = 'input window, operand 10']
    #allocation11 [shape = 's32[2]{0}', space=sflag, size = 0x8, scoped, tag = 'scoped memory for tpu_custom_call.1']
    #allocation12 [shape = 'u8[16384]{0}', space=vmem, size = 0x4000, scoped, tag = 'input window, operand 12']
    #allocation13 [shape = 'u8[8192]{0}', space=vmem, size = 0x2000, scoped, tag = 'output window, operand 0, single buffered']
    #allocation14 [shape = 'u8[16384]{0}', space=vmem, size = 0x4000, scoped, tag = 'output window, operand 1']
    #allocation15 [shape = 's32[2]{0}', space=sflag, size = 0x8, scoped, tag = 'scoped memory for tpu_custom_call.1']
    #allocation16 [shape = 'u8[16384]{0}', space=vmem, size = 0x4000, scoped, tag = 'output window, operand 2']
    %32 = vsyncpa [#allocation5], 0
    %33 = vsyncpa [#allocation8], 0
    %s34 = scalar_lea.sflag [#allocation8], 1
    %35 = vsyncpa %s34, 0
    %36 = vsyncpa [#allocation11], 0
    %s37 = scalar_lea.sflag [#allocation11], 1
    %38 = vsyncpa %s37, 0
    %39 = vsyncpa [#allocation6], 0
    %40 = vsyncpa [#allocation15], 0
    %s41 = scalar_lea.sflag [#allocation15], 1
    %42 = vsyncpa %s41, 0
    loop: start=0, step=1, limit=4
    $region2: #{tpu_custom_call.1} parent=1 // loop_pre_header
      _
    $region3: #{tpu_custom_call.1} parent=1 // loop_header
      %s44 = sphi 0, %s48
      %p45 = scmp.ge.s32.totalorder %s44, 4
      %s51 = sphi 0, %s63
      %s52 = sphi 0, %s59
      %s53 = sphi 0, %s51
      %s54 = sphi 0, %s52
      %s55 = sphi 0, %s53
      %s56 = sphi 0, %s54
      %s66 = sphi 0, %s68
      %s69 = sphi 0, %s66
      %s70 = sphi 0, %s69
      %s86 = sphi 0, %s70
      %s92 = sphi 0, %s94
      %s95 = sphi 0, %s92
      %s96 = sphi 0, %s95
      %s112 = sphi 0, %s96
      %s118 = sphi 0, %s120
      %s121 = sphi 0, %s118
      %s122 = sphi 0, %s121
      %s138 = sphi 0, %s122
      %s144 = sphi 0, %s146
      %s147 = sphi 0, %s144
      %s148 = sphi 0, %s147
      %s164 = sphi 0, %s148
      %s170 = sphi 0, %s172
      %s173 = sphi 0, %s170
      %s174 = sphi 0, %s173
      %s190 = sphi 0, %s174
      %s196 = sphi 0, %s198
      %s199 = sphi 0, %s196
      %s200 = sphi 0, %s199
      %s216 = sphi 0, %s200
      %s222 = sphi 0, %s224
      %s225 = sphi 0, %s222
      %s226 = sphi 0, %s225
      %s242 = sphi 0, %s226
      %s248 = sphi 0, %s250
      %s251 = sphi 0, %s248
      %s252 = sphi 0, %s251
      %s268 = sphi 0, %s252
      %s274 = sphi 0, %s276
      %s277 = sphi 0, %s274
      %s278 = sphi 0, %s277
      %s294 = sphi 0, %s278
      %s300 = sphi 0, %s302
      %s303 = sphi 0, %s300
      %s304 = sphi 0, %s303
      %s320 = sphi 0, %s304
      %s326 = sphi 0, %s328
      %s329 = sphi 0, %s326
      %s330 = sphi 0, %s329
      %s346 = sphi 0, %s330
      %s352 = sphi 0, %s354
      %s355 = sphi 0, %s352
      %s356 = sphi 0, %s355
      %s372 = sphi 0, %s356
      %s378 = sphi 0, %s380
      %s381 = sphi 0, %s378
      %s382 = sphi 0, %s381
      %s398 = sphi 0, %s382
      %s404 = sphi 0, %s406
      %s407 = sphi 0, %s404
      %s408 = sphi 0, %s407
      %s424 = sphi 0, %s408
      %s430 = sphi 0, %s432
      %s433 = sphi 0, %s430
      %s434 = sphi 0, %s433
      %s450 = sphi 0, %s434
      %s456 = sphi 0, %s458
      %s459 = sphi 0, %s456
      %s460 = sphi 0, %s459
      %s476 = sphi 0, %s460
      %s482 = sphi 0, %s484
      %s485 = sphi 0, %s482
      %s486 = sphi 0, %s485
      %s502 = sphi 0, %s486
      %s508 = sphi 0, %s510
      %s511 = sphi 0, %s508
      %s512 = sphi 0, %s511
      %s528 = sphi 0, %s512
      %s534 = sphi 0, %s536
      %s537 = sphi 0, %s534
      %s538 = sphi 0, %s537
      %s554 = sphi 0, %s538
      %s560 = sphi 0, %s562
      %s563 = sphi 0, %s560
      %s564 = sphi 0, %s563
      %s580 = sphi 0, %s564
      %s586 = sphi 0, %s588
      %s589 = sphi 0, %s586
      %s590 = sphi 0, %s589
      %s606 = sphi 0, %s590
      %s612 = sphi 0, %s614
      %s615 = sphi 0, %s612
      %s616 = sphi 0, %s615
      %s632 = sphi 0, %s616
      %s636 = sphi 0, %s636
      %s638 = sphi 0, %s636
      %s639 = sphi 0, %s638
      %s653 = sphi 0, %s639
      %s657 = sphi 0, %s657
      %s659 = sphi 0, %s657
      %s660 = sphi 0, %s659
      %s674 = sphi 0, %s660
      %s680 = sphi 0, %s682
      %s683 = sphi 0, %s680
      %s684 = sphi 0, %s683
      %s700 = sphi 0, %s684
      %s708 = sphi 0, %s710
      %s711 = sphi 0, %s708
      %s712 = sphi 0, %s711
      %s728 = sphi 0, %s712
      %s736 = sphi 0, %s738
      %s739 = sphi 0, %s736
      %s740 = sphi 0, %s739
      %s756 = sphi 0, %s740
    $region4: #{tpu_custom_call.1} parent=1 // loop_header_branch
      %47 = sbr.rel (%p45) target = $region8
    $region5: #{tpu_custom_call.1} parent=1 // loop_body
      %s49 = ssub.s32 %s44, 1
      %s50 = ssub.s32 %s44, 2
      %s57 = sadd.s32 1, %s52
      %p58 = scmp.ge.s32.totalorder %s57, 2
      %s59 = scalar_select %p58, 0, %s57
      %s60 = sadd.s32 1, %s51
      %s61 = scalar_select %p58, %s60, %s51
      %p62 = scmp.ge.s32.totalorder %s61, 1
      %s63 = scalar_select %p62, 0, %s61
      %s64 = ssub.s32 %s51, %s63
      %p65 = scmp.eq.s32.totalorder %s64, 0
      %s67 = sadd.s32 %s66, 1
      %s68 = scalar_select %p65, %s66, %s67
      %p71 = pneg %p65
      %p72 = scmp.eq.s32.totalorder %s44, 1
      %p73 = por %p71, %p72
      %p74 = scmp.ne.s32.totalorder %s66, %s69
      %p75 = scmp.eq.s32.totalorder %s44, 0
      %p76 = por %p74, %p75
      %p77 = scmp.ne.s32.totalorder %s66, %s69
      %p78 = scmp.eq.s32.totalorder %s49, 1
      %p79 = por %p77, %p78
      %p80 = scmp.ne.s32.totalorder %s69, %s70
      %p81 = scmp.eq.s32.totalorder %s49, 0
      %p82 = por %p80, %p81
      %p83 = scmp.ne.s32.totalorder %s69, %s70
      %p84 = scmp.eq.s32.totalorder %s50, 1
      %p85 = por %p83, %p84
      %p87 = scmp.ne.s32.totalorder %s70, %s86
      %p88 = scmp.eq.s32.totalorder %s50, 0
      %p89 = por %p87, %p88
      %s90 = ssub.s32 %s51, %s63
      %p91 = scmp.eq.s32.totalorder %s90, 0
      %s93 = sadd.s32 %s92, 1
      %s94 = scalar_select %p91, %s92, %s93
      %p97 = pneg %p91
      %p98 = scmp.eq.s32.totalorder %s44, 1
      %p99 = por %p97, %p98
      %p100 = scmp.ne.s32.totalorder %s92, %s95
      %p101 = scmp.eq.s32.totalorder %s44, 0
      %p102 = por %p100, %p101
      %p103 = scmp.ne.s32.totalorder %s92, %s95
      %p104 = scmp.eq.s32.totalorder %s49, 1
      %p105 = por %p103, %p104
      %p106 = scmp.ne.s32.totalorder %s95, %s96
      %p107 = scmp.eq.s32.totalorder %s49, 0
      %p108 = por %p106, %p107
      %p109 = scmp.ne.s32.totalorder %s95, %s96
      %p110 = scmp.eq.s32.totalorder %s50, 1
      %p111 = por %p109, %p110
      %p113 = scmp.ne.s32.totalorder %s96, %s112
      %p114 = scmp.eq.s32.totalorder %s50, 0
      %p115 = por %p113, %p114
      %s116 = ssub.s32 %s52, %s59
      %p117 = scmp.eq.s32.totalorder %s116, 0
      %s119 = sadd.s32 %s118, 1
      %s120 = scalar_select %p117, %s118, %s119
      %p123 = pneg %p117
      %p124 = scmp.eq.s32.totalorder %s44, 1
      %p125 = por %p123, %p124
      %p126 = scmp.ne.s32.totalorder %s118, %s121
      %p127 = scmp.eq.s32.totalorder %s44, 0
      %p128 = por %p126, %p127
      %p129 = scmp.ne.s32.totalorder %s118, %s121
      %p130 = scmp.eq.s32.totalorder %s49, 1
      %p131 = por %p129, %p130
      %p132 = scmp.ne.s32.totalorder %s121, %s122
      %p133 = scmp.eq.s32.totalorder %s49, 0
      %p134 = por %p132, %p133
      %p135 = scmp.ne.s32.totalorder %s121, %s122
      %p136 = scmp.eq.s32.totalorder %s50, 1
      %p137 = por %p135, %p136
      %p139 = scmp.ne.s32.totalorder %s122, %s138
      %p140 = scmp.eq.s32.totalorder %s50, 0
      %p141 = por %p139, %p140
      %s142 = ssub.s32 %s52, %s59
      %p143 = scmp.eq.s32.totalorder %s142, 0
      %s145 = sadd.s32 %s144, 1
      %s146 = scalar_select %p143, %s144, %s145
      %p149 = pneg %p143
      %p150 = scmp.eq.s32.totalorder %s44, 1
      %p151 = por %p149, %p150
      %p152 = scmp.ne.s32.totalorder %s144, %s147
      %p153 = scmp.eq.s32.totalorder %s44, 0
      %p154 = por %p152, %p153
      %p155 = scmp.ne.s32.totalorder %s144, %s147
      %p156 = scmp.eq.s32.totalorder %s49, 1
      %p157 = por %p155, %p156
      %p158 = scmp.ne.s32.totalorder %s147, %s148
      %p159 = scmp.eq.s32.totalorder %s49, 0
      %p160 = por %p158, %p159
      %p161 = scmp.ne.s32.totalorder %s147, %s148
      %p162 = scmp.eq.s32.totalorder %s50, 1
      %p163 = por %p161, %p162
      %p165 = scmp.ne.s32.totalorder %s148, %s164
      %p166 = scmp.eq.s32.totalorder %s50, 0
      %p167 = por %p165, %p166
      %s168 = ssub.s32 %s52, %s59
      %p169 = scmp.eq.s32.totalorder %s168, 0
      %s171 = sadd.s32 %s170, 1
      %s172 = scalar_select %p169, %s170, %s171
      %p175 = pneg %p169
      %p176 = scmp.eq.s32.totalorder %s44, 1
      %p177 = por %p175, %p176
      %p178 = scmp.ne.s32.totalorder %s170, %s173
      %p179 = scmp.eq.s32.totalorder %s44, 0
      %p180 = por %p178, %p179
      %p181 = scmp.ne.s32.totalorder %s170, %s173
      %p182 = scmp.eq.s32.totalorder %s49, 1
      %p183 = por %p181, %p182
      %p184 = scmp.ne.s32.totalorder %s173, %s174
      %p185 = scmp.eq.s32.totalorder %s49, 0
      %p186 = por %p184, %p185
      %p187 = scmp.ne.s32.totalorder %s173, %s174
      %p188 = scmp.eq.s32.totalorder %s50, 1
      %p189 = por %p187, %p188
      %p191 = scmp.ne.s32.totalorder %s174, %s190
      %p192 = scmp.eq.s32.totalorder %s50, 0
      %p193 = por %p191, %p192
      %s194 = ssub.s32 %s52, %s59
      %p195 = scmp.eq.s32.totalorder %s194, 0
      %s197 = sadd.s32 %s196, 1
      %s198 = scalar_select %p195, %s196, %s197
      %p201 = pneg %p195
      %p202 = scmp.eq.s32.totalorder %s44, 1
      %p203 = por %p201, %p202
      %p204 = scmp.ne.s32.totalorder %s196, %s199
      %p205 = scmp.eq.s32.totalorder %s44, 0
      %p206 = por %p204, %p205
      %p207 = scmp.ne.s32.totalorder %s196, %s199
      %p208 = scmp.eq.s32.totalorder %s49, 1
      %p209 = por %p207, %p208
      %p210 = scmp.ne.s32.totalorder %s199, %s200
      %p211 = scmp.eq.s32.totalorder %s49, 0
      %p212 = por %p210, %p211
      %p213 = scmp.ne.s32.totalorder %s199, %s200
      %p214 = scmp.eq.s32.totalorder %s50, 1
      %p215 = por %p213, %p214
      %p217 = scmp.ne.s32.totalorder %s200, %s216
      %p218 = scmp.eq.s32.totalorder %s50, 0
      %p219 = por %p217, %p218
      %s220 = ssub.s32 %s52, %s59
      %p221 = scmp.eq.s32.totalorder %s220, 0
      %s223 = sadd.s32 %s222, 1
      %s224 = scalar_select %p221, %s222, %s223
      %p227 = pneg %p221
      %p228 = scmp.eq.s32.totalorder %s44, 1
      %p229 = por %p227, %p228
      %p230 = scmp.ne.s32.totalorder %s222, %s225
      %p231 = scmp.eq.s32.totalorder %s44, 0
      %p232 = por %p230, %p231
      %p233 = scmp.ne.s32.totalorder %s222, %s225
      %p234 = scmp.eq.s32.totalorder %s49, 1
      %p235 = por %p233, %p234
      %p236 = scmp.ne.s32.totalorder %s225, %s226
      %p237 = scmp.eq.s32.totalorder %s49, 0
      %p238 = por %p236, %p237
      %p239 = scmp.ne.s32.totalorder %s225, %s226
      %p240 = scmp.eq.s32.totalorder %s50, 1
      %p241 = por %p239, %p240
      %p243 = scmp.ne.s32.totalorder %s226, %s242
      %p244 = scmp.eq.s32.totalorder %s50, 0
      %p245 = por %p243, %p244
      %s246 = ssub.s32 %s52, %s59
      %p247 = scmp.eq.s32.totalorder %s246, 0
      %s249 = sadd.s32 %s248, 1
      %s250 = scalar_select %p247, %s248, %s249
      %p253 = pneg %p247
      %p254 = scmp.eq.s32.totalorder %s44, 1
      %p255 = por %p253, %p254
      %p256 = scmp.ne.s32.totalorder %s248, %s251
      %p257 = scmp.eq.s32.totalorder %s44, 0
      %p258 = por %p256, %p257
      %p259 = scmp.ne.s32.totalorder %s248, %s251
      %p260 = scmp.eq.s32.totalorder %s49, 1
      %p261 = por %p259, %p260
      %p262 = scmp.ne.s32.totalorder %s251, %s252
      %p263 = scmp.eq.s32.totalorder %s49, 0
      %p264 = por %p262, %p263
      %p265 = scmp.ne.s32.totalorder %s251, %s252
      %p266 = scmp.eq.s32.totalorder %s50, 1
      %p267 = por %p265, %p266
      %p269 = scmp.ne.s32.totalorder %s252, %s268
      %p270 = scmp.eq.s32.totalorder %s50, 0
      %p271 = por %p269, %p270
      %s272 = ssub.s32 %s52, %s59
      %p273 = scmp.eq.s32.totalorder %s272, 0
      %s275 = sadd.s32 %s274, 1
      %s276 = scalar_select %p273, %s274, %s275
      %p279 = pneg %p273
      %p280 = scmp.eq.s32.totalorder %s44, 1
      %p281 = por %p279, %p280
      %p282 = scmp.ne.s32.totalorder %s274, %s277
      %p283 = scmp.eq.s32.totalorder %s44, 0
      %p284 = por %p282, %p283
      %p285 = scmp.ne.s32.totalorder %s274, %s277
      %p286 = scmp.eq.s32.totalorder %s49, 1
      %p287 = por %p285, %p286
      %p288 = scmp.ne.s32.totalorder %s277, %s278
      %p289 = scmp.eq.s32.totalorder %s49, 0
      %p290 = por %p288, %p289
      %p291 = scmp.ne.s32.totalorder %s277, %s278
      %p292 = scmp.eq.s32.totalorder %s50, 1
      %p293 = por %p291, %p292
      %p295 = scmp.ne.s32.totalorder %s278, %s294
      %p296 = scmp.eq.s32.totalorder %s50, 0
      %p297 = por %p295, %p296
      %s298 = ssub.s32 %s52, %s59
      %p299 = scmp.eq.s32.totalorder %s298, 0
      %s301 = sadd.s32 %s300, 1
      %s302 = scalar_select %p299, %s300, %s301
      %p305 = pneg %p299
      %p306 = scmp.eq.s32.totalorder %s44, 1
      %p307 = por %p305, %p306
      %p308 = scmp.ne.s32.totalorder %s300, %s303
      %p309 = scmp.eq.s32.totalorder %s44, 0
      %p310 = por %p308, %p309
      %p311 = scmp.ne.s32.totalorder %s300, %s303
      %p312 = scmp.eq.s32.totalorder %s49, 1
      %p313 = por %p311, %p312
      %p314 = scmp.ne.s32.totalorder %s303, %s304
      %p315 = scmp.eq.s32.totalorder %s49, 0
      %p316 = por %p314, %p315
      %p317 = scmp.ne.s32.totalorder %s303, %s304
      %p318 = scmp.eq.s32.totalorder %s50, 1
      %p319 = por %p317, %p318
      %p321 = scmp.ne.s32.totalorder %s304, %s320
      %p322 = scmp.eq.s32.totalorder %s50, 0
      %p323 = por %p321, %p322
      %s324 = ssub.s32 %s52, %s59
      %p325 = scmp.eq.s32.totalorder %s324, 0
      %s327 = sadd.s32 %s326, 1
      %s328 = scalar_select %p325, %s326, %s327
      %p331 = pneg %p325
      %p332 = scmp.eq.s32.totalorder %s44, 1
      %p333 = por %p331, %p332
      %p334 = scmp.ne.s32.totalorder %s326, %s329
      %p335 = scmp.eq.s32.totalorder %s44, 0
      %p336 = por %p334, %p335
      %p337 = scmp.ne.s32.totalorder %s326, %s329
      %p338 = scmp.eq.s32.totalorder %s49, 1
      %p339 = por %p337, %p338
      %p340 = scmp.ne.s32.totalorder %s329, %s330
      %p341 = scmp.eq.s32.totalorder %s49, 0
      %p342 = por %p340, %p341
      %p343 = scmp.ne.s32.totalorder %s329, %s330
      %p344 = scmp.eq.s32.totalorder %s50, 1
      %p345 = por %p343, %p344
      %p347 = scmp.ne.s32.totalorder %s330, %s346
      %p348 = scmp.eq.s32.totalorder %s50, 0
      %p349 = por %p347, %p348
      %s350 = ssub.s32 %s52, %s59
      %p351 = scmp.eq.s32.totalorder %s350, 0
      %s353 = sadd.s32 %s352, 1
      %s354 = scalar_select %p351, %s352, %s353
      %p357 = pneg %p351
      %p358 = scmp.eq.s32.totalorder %s44, 1
      %p359 = por %p357, %p358
      %p360 = scmp.ne.s32.totalorder %s352, %s355
      %p361 = scmp.eq.s32.totalorder %s44, 0
      %p362 = por %p360, %p361
      %p363 = scmp.ne.s32.totalorder %s352, %s355
      %p364 = scmp.eq.s32.totalorder %s49, 1
      %p365 = por %p363, %p364
      %p366 = scmp.ne.s32.totalorder %s355, %s356
      %p367 = scmp.eq.s32.totalorder %s49, 0
      %p368 = por %p366, %p367
      %p369 = scmp.ne.s32.totalorder %s355, %s356
      %p370 = scmp.eq.s32.totalorder %s50, 1
      %p371 = por %p369, %p370
      %p373 = scmp.ne.s32.totalorder %s356, %s372
      %p374 = scmp.eq.s32.totalorder %s50, 0
      %p375 = por %p373, %p374
      %s376 = ssub.s32 %s52, %s59
      %p377 = scmp.eq.s32.totalorder %s376, 0
      %s379 = sadd.s32 %s378, 1
      %s380 = scalar_select %p377, %s378, %s379
      %p383 = pneg %p377
      %p384 = scmp.eq.s32.totalorder %s44, 1
      %p385 = por %p383, %p384
      %p386 = scmp.ne.s32.totalorder %s378, %s381
      %p387 = scmp.eq.s32.totalorder %s44, 0
      %p388 = por %p386, %p387
      %p389 = scmp.ne.s32.totalorder %s378, %s381
      %p390 = scmp.eq.s32.totalorder %s49, 1
      %p391 = por %p389, %p390
      %p392 = scmp.ne.s32.totalorder %s381, %s382
      %p393 = scmp.eq.s32.totalorder %s49, 0
      %p394 = por %p392, %p393
      %p395 = scmp.ne.s32.totalorder %s381, %s382
      %p396 = scmp.eq.s32.totalorder %s50, 1
      %p397 = por %p395, %p396
      %p399 = scmp.ne.s32.totalorder %s382, %s398
      %p400 = scmp.eq.s32.totalorder %s50, 0
      %p401 = por %p399, %p400
      %s402 = ssub.s32 %s52, %s59
      %p403 = scmp.eq.s32.totalorder %s402, 0
      %s405 = sadd.s32 %s404, 1
      %s406 = scalar_select %p403, %s404, %s405
      %p409 = pneg %p403
      %p410 = scmp.eq.s32.totalorder %s44, 1
      %p411 = por %p409, %p410
      %p412 = scmp.ne.s32.totalorder %s404, %s407
      %p413 = scmp.eq.s32.totalorder %s44, 0
      %p414 = por %p412, %p413
      %p415 = scmp.ne.s32.totalorder %s404, %s407
      %p416 = scmp.eq.s32.totalorder %s49, 1
      %p417 = por %p415, %p416
      %p418 = scmp.ne.s32.totalorder %s407, %s408
      %p419 = scmp.eq.s32.totalorder %s49, 0
      %p420 = por %p418, %p419
      %p421 = scmp.ne.s32.totalorder %s407, %s408
      %p422 = scmp.eq.s32.totalorder %s50, 1
      %p423 = por %p421, %p422
      %p425 = scmp.ne.s32.totalorder %s408, %s424
      %p426 = scmp.eq.s32.totalorder %s50, 0
      %p427 = por %p425, %p426
      %s428 = ssub.s32 %s52, %s59
      %p429 = scmp.eq.s32.totalorder %s428, 0
      %s431 = sadd.s32 %s430, 1
      %s432 = scalar_select %p429, %s430, %s431
      %p435 = pneg %p429
      %p436 = scmp.eq.s32.totalorder %s44, 1
      %p437 = por %p435, %p436
      %p438 = scmp.ne.s32.totalorder %s430, %s433
      %p439 = scmp.eq.s32.totalorder %s44, 0
      %p440 = por %p438, %p439
      %p441 = scmp.ne.s32.totalorder %s430, %s433
      %p442 = scmp.eq.s32.totalorder %s49, 1
      %p443 = por %p441, %p442
      %p444 = scmp.ne.s32.totalorder %s433, %s434
      %p445 = scmp.eq.s32.totalorder %s49, 0
      %p446 = por %p444, %p445
      %p447 = scmp.ne.s32.totalorder %s433, %s434
      %p448 = scmp.eq.s32.totalorder %s50, 1
      %p449 = por %p447, %p448
      %p451 = scmp.ne.s32.totalorder %s434, %s450
      %p452 = scmp.eq.s32.totalorder %s50, 0
      %p453 = por %p451, %p452
      %s454 = ssub.s32 %s52, %s59
      %p455 = scmp.eq.s32.totalorder %s454, 0
      %s457 = sadd.s32 %s456, 1
      %s458 = scalar_select %p455, %s456, %s457
      %p461 = pneg %p455
      %p462 = scmp.eq.s32.totalorder %s44, 1
      %p463 = por %p461, %p462
      %p464 = scmp.ne.s32.totalorder %s456, %s459
      %p465 = scmp.eq.s32.totalorder %s44, 0
      %p466 = por %p464, %p465
      %p467 = scmp.ne.s32.totalorder %s456, %s459
      %p468 = scmp.eq.s32.totalorder %s49, 1
      %p469 = por %p467, %p468
      %p470 = scmp.ne.s32.totalorder %s459, %s460
      %p471 = scmp.eq.s32.totalorder %s49, 0
      %p472 = por %p470, %p471
      %p473 = scmp.ne.s32.totalorder %s459, %s460
      %p474 = scmp.eq.s32.totalorder %s50, 1
      %p475 = por %p473, %p474
      %p477 = scmp.ne.s32.totalorder %s460, %s476
      %p478 = scmp.eq.s32.totalorder %s50, 0
      %p479 = por %p477, %p478
      %s480 = ssub.s32 %s52, %s59
      %p481 = scmp.eq.s32.totalorder %s480, 0
      %s483 = sadd.s32 %s482, 1
      %s484 = scalar_select %p481, %s482, %s483
      %p487 = pneg %p481
      %p488 = scmp.eq.s32.totalorder %s44, 1
      %p489 = por %p487, %p488
      %p490 = scmp.ne.s32.totalorder %s482, %s485
      %p491 = scmp.eq.s32.totalorder %s44, 0
      %p492 = por %p490, %p491
      %p493 = scmp.ne.s32.totalorder %s482, %s485
      %p494 = scmp.eq.s32.totalorder %s49, 1
      %p495 = por %p493, %p494
      %p496 = scmp.ne.s32.totalorder %s485, %s486
      %p497 = scmp.eq.s32.totalorder %s49, 0
      %p498 = por %p496, %p497
      %p499 = scmp.ne.s32.totalorder %s485, %s486
      %p500 = scmp.eq.s32.totalorder %s50, 1
      %p501 = por %p499, %p500
      %p503 = scmp.ne.s32.totalorder %s486, %s502
      %p504 = scmp.eq.s32.totalorder %s50, 0
      %p505 = por %p503, %p504
      %s506 = ssub.s32 %s52, %s59
      %p507 = scmp.eq.s32.totalorder %s506, 0
      %s509 = sadd.s32 %s508, 1
      %s510 = scalar_select %p507, %s508, %s509
      %p513 = pneg %p507
      %p514 = scmp.eq.s32.totalorder %s44, 1
      %p515 = por %p513, %p514
      %p516 = scmp.ne.s32.totalorder %s508, %s511
      %p517 = scmp.eq.s32.totalorder %s44, 0
      %p518 = por %p516, %p517
      %p519 = scmp.ne.s32.totalorder %s508, %s511
      %p520 = scmp.eq.s32.totalorder %s49, 1
      %p521 = por %p519, %p520
      %p522 = scmp.ne.s32.totalorder %s511, %s512
      %p523 = scmp.eq.s32.totalorder %s49, 0
      %p524 = por %p522, %p523
      %p525 = scmp.ne.s32.totalorder %s511, %s512
      %p526 = scmp.eq.s32.totalorder %s50, 1
      %p527 = por %p525, %p526
      %p529 = scmp.ne.s32.totalorder %s512, %s528
      %p530 = scmp.eq.s32.totalorder %s50, 0
      %p531 = por %p529, %p530
      %s532 = ssub.s32 %s52, %s59
      %p533 = scmp.eq.s32.totalorder %s532, 0
      %s535 = sadd.s32 %s534, 1
      %s536 = scalar_select %p533, %s534, %s535
      %p539 = pneg %p533
      %p540 = scmp.eq.s32.totalorder %s44, 1
      %p541 = por %p539, %p540
      %p542 = scmp.ne.s32.totalorder %s534, %s537
      %p543 = scmp.eq.s32.totalorder %s44, 0
      %p544 = por %p542, %p543
      %p545 = scmp.ne.s32.totalorder %s534, %s537
      %p546 = scmp.eq.s32.totalorder %s49, 1
      %p547 = por %p545, %p546
      %p548 = scmp.ne.s32.totalorder %s537, %s538
      %p549 = scmp.eq.s32.totalorder %s49, 0
      %p550 = por %p548, %p549
      %p551 = scmp.ne.s32.totalorder %s537, %s538
      %p552 = scmp.eq.s32.totalorder %s50, 1
      %p553 = por %p551, %p552
      %p555 = scmp.ne.s32.totalorder %s538, %s554
      %p556 = scmp.eq.s32.totalorder %s50, 0
      %p557 = por %p555, %p556
      %s558 = ssub.s32 %s52, %s59
      %p559 = scmp.eq.s32.totalorder %s558, 0
      %s561 = sadd.s32 %s560, 1
      %s562 = scalar_select %p559, %s560, %s561
      %p565 = pneg %p559
      %p566 = scmp.eq.s32.totalorder %s44, 1
      %p567 = por %p565, %p566
      %p568 = scmp.ne.s32.totalorder %s560, %s563
      %p569 = scmp.eq.s32.totalorder %s44, 0
      %p570 = por %p568, %p569
      %p571 = scmp.ne.s32.totalorder %s560, %s563
      %p572 = scmp.eq.s32.totalorder %s49, 1
      %p573 = por %p571, %p572
      %p574 = scmp.ne.s32.totalorder %s563, %s564
      %p575 = scmp.eq.s32.totalorder %s49, 0
      %p576 = por %p574, %p575
      %p577 = scmp.ne.s32.totalorder %s563, %s564
      %p578 = scmp.eq.s32.totalorder %s50, 1
      %p579 = por %p577, %p578
      %p581 = scmp.ne.s32.totalorder %s564, %s580
      %p582 = scmp.eq.s32.totalorder %s50, 0
      %p583 = por %p581, %p582
      %s584 = ssub.s32 %s52, %s59
      %p585 = scmp.eq.s32.totalorder %s584, 0
      %s587 = sadd.s32 %s586, 1
      %s588 = scalar_select %p585, %s586, %s587
      %p591 = pneg %p585
      %p592 = scmp.eq.s32.totalorder %s44, 1
      %p593 = por %p591, %p592
      %p594 = scmp.ne.s32.totalorder %s586, %s589
      %p595 = scmp.eq.s32.totalorder %s44, 0
      %p596 = por %p594, %p595
      %p597 = scmp.ne.s32.totalorder %s586, %s589
      %p598 = scmp.eq.s32.totalorder %s49, 1
      %p599 = por %p597, %p598
      %p600 = scmp.ne.s32.totalorder %s589, %s590
      %p601 = scmp.eq.s32.totalorder %s49, 0
      %p602 = por %p600, %p601
      %p603 = scmp.ne.s32.totalorder %s589, %s590
      %p604 = scmp.eq.s32.totalorder %s50, 1
      %p605 = por %p603, %p604
      %p607 = scmp.ne.s32.totalorder %s590, %s606
      %p608 = scmp.eq.s32.totalorder %s50, 0
      %p609 = por %p607, %p608
      %s610 = ssub.s32 %s52, %s59
      %p611 = scmp.eq.s32.totalorder %s610, 0
      %s613 = sadd.s32 %s612, 1
      %s614 = scalar_select %p611, %s612, %s613
      %p617 = pneg %p611
      %p618 = scmp.eq.s32.totalorder %s44, 1
      %p619 = por %p617, %p618
      %p620 = scmp.ne.s32.totalorder %s612, %s615
      %p621 = scmp.eq.s32.totalorder %s44, 0
      %p622 = por %p620, %p621
      %p623 = scmp.ne.s32.totalorder %s612, %s615
      %p624 = scmp.eq.s32.totalorder %s49, 1
      %p625 = por %p623, %p624
      %p626 = scmp.ne.s32.totalorder %s615, %s616
      %p627 = scmp.eq.s32.totalorder %s49, 0
      %p628 = por %p626, %p627
      %p629 = scmp.ne.s32.totalorder %s615, %s616
      %p630 = scmp.eq.s32.totalorder %s50, 1
      %p631 = por %p629, %p630
      %p633 = scmp.ne.s32.totalorder %s616, %s632
      %p634 = scmp.eq.s32.totalorder %s50, 0
      %p635 = por %p633, %p634
      %s637 = sadd.s32 %s636, 1
      %p640 = scmp.eq.s32.totalorder %s44, 1
      %p641 = scmp.ne.s32.totalorder %s636, %s638
      %p642 = scmp.eq.s32.totalorder %s44, 0
      %p643 = por %p641, %p642
      %p644 = scmp.ne.s32.totalorder %s636, %s638
      %p645 = scmp.eq.s32.totalorder %s49, 1
      %p646 = por %p644, %p645
      %p647 = scmp.ne.s32.totalorder %s638, %s639
      %p648 = scmp.eq.s32.totalorder %s49, 0
      %p649 = por %p647, %p648
      %p650 = scmp.ne.s32.totalorder %s638, %s639
      %p651 = scmp.eq.s32.totalorder %s50, 1
      %p652 = por %p650, %p651
      %p654 = scmp.ne.s32.totalorder %s639, %s653
      %p655 = scmp.eq.s32.totalorder %s50, 0
      %p656 = por %p654, %p655
      %s658 = sadd.s32 %s657, 1
      %p661 = scmp.eq.s32.totalorder %s44, 1
      %p662 = scmp.ne.s32.totalorder %s657, %s659
      %p663 = scmp.eq.s32.totalorder %s44, 0
      %p664 = por %p662, %p663
      %p665 = scmp.ne.s32.totalorder %s657, %s659
      %p666 = scmp.eq.s32.totalorder %s49, 1
      %p667 = por %p665, %p666
      %p668 = scmp.ne.s32.totalorder %s659, %s660
      %p669 = scmp.eq.s32.totalorder %s49, 0
      %p670 = por %p668, %p669
      %p671 = scmp.ne.s32.totalorder %s659, %s660
      %p672 = scmp.eq.s32.totalorder %s50, 1
      %p673 = por %p671, %p672
      %p675 = scmp.ne.s32.totalorder %s660, %s674
      %p676 = scmp.eq.s32.totalorder %s50, 0
      %p677 = por %p675, %p676
      %s678 = ssub.s32 %s51, %s63
      %p679 = scmp.eq.s32.totalorder %s678, 0
      %s681 = sadd.s32 %s680, 1
      %s682 = scalar_select %p679, %s680, %s681
      %p685 = pneg %p679
      %p686 = scmp.eq.s32.totalorder %s44, 1
      %p687 = por %p685, %p686
      %p688 = scmp.ne.s32.totalorder %s680, %s683
      %p689 = scmp.eq.s32.totalorder %s44, 0
      %p690 = por %p688, %p689
      %p691 = scmp.ne.s32.totalorder %s680, %s683
      %p692 = scmp.eq.s32.totalorder %s49, 1
      %p693 = por %p691, %p692
      %p694 = scmp.ne.s32.totalorder %s683, %s684
      %p695 = scmp.eq.s32.totalorder %s49, 0
      %p696 = por %p694, %p695
      %p697 = scmp.ne.s32.totalorder %s683, %s684
      %p698 = scmp.eq.s32.totalorder %s50, 1
      %p699 = por %p697, %p698
      %p701 = scmp.ne.s32.totalorder %s684, %s700
      %p702 = scmp.eq.s32.totalorder %s50, 0
      %p703 = por %p701, %p702
      %s704 = ssub.s32 %s52, %s59
      %s705 = ssub.s32 %s51, %s63
      %s706 = sor.u32 %s704, %s705
      %p707 = scmp.eq.s32.totalorder %s706, 0
      %s709 = sadd.s32 %s708, 1
      %s710 = scalar_select %p707, %s708, %s709
      %p713 = pneg %p707
      %p714 = scmp.eq.s32.totalorder %s44, 1
      %p715 = por %p713, %p714
      %p716 = scmp.ne.s32.totalorder %s708, %s711
      %p717 = scmp.eq.s32.totalorder %s44, 0
      %p718 = por %p716, %p717
      %p719 = scmp.ne.s32.totalorder %s708, %s711
      %p720 = scmp.eq.s32.totalorder %s49, 1
      %p721 = por %p719, %p720
      %p722 = scmp.ne.s32.totalorder %s711, %s712
      %p723 = scmp.eq.s32.totalorder %s49, 0
      %p724 = por %p722, %p723
      %p725 = scmp.ne.s32.totalorder %s711, %s712
      %p726 = scmp.eq.s32.totalorder %s50, 1
      %p727 = por %p725, %p726
      %p729 = scmp.ne.s32.totalorder %s712, %s728
      %p730 = scmp.eq.s32.totalorder %s50, 0
      %p731 = por %p729, %p730
      %s732 = ssub.s32 %s52, %s59
      %s733 = ssub.s32 %s51, %s63
      %s734 = sor.u32 %s732, %s733
      %p735 = scmp.eq.s32.totalorder %s734, 0
      %s737 = sadd.s32 %s736, 1
      %s738 = scalar_select %p735, %s736, %s737
      %p741 = pneg %p735
      %p742 = scmp.eq.s32.totalorder %s44, 1
      %p743 = por %p741, %p742
      %p744 = scmp.ne.s32.totalorder %s736, %s739
      %p745 = scmp.eq.s32.totalorder %s44, 0
      %p746 = por %p744, %p745
      %p747 = scmp.ne.s32.totalorder %s736, %s739
      %p748 = scmp.eq.s32.totalorder %s49, 1
      %p749 = por %p747, %p748
      %p750 = scmp.ne.s32.totalorder %s739, %s740
      %p751 = scmp.eq.s32.totalorder %s49, 0
      %p752 = por %p750, %p751
      %p753 = scmp.ne.s32.totalorder %s739, %s740
      %p754 = scmp.eq.s32.totalorder %s50, 1
      %p755 = por %p753, %p754
      %p757 = scmp.ne.s32.totalorder %s740, %s756
      %p758 = scmp.eq.s32.totalorder %s50, 0
      %p759 = por %p757, %p758
      %p760 = scmp.le.s32.totalorder 1, %s44
      %p761 = scmp.lt.s32.totalorder %s44, 3
      %p762 = pnand %p760, %p761
      %p763 = pneg %p762
      // Predicated region
      $region9: #{tpu_custom_call.1} parent=5 // pred_check
        _
      $region10: #{tpu_custom_call.1} parent=5 // pred_check_branch
        %765 = sbr.rel (%p762) target = $region12
      $region11: #{tpu_custom_call.1} parent=5 // pred_region
        %s766 = ssub.s32 %s44, 1
        // Predicated region
        $region13: #{tpu_custom_call.1} parent=11 // pred_check
          %p767 = pneg %p82
        $region14: #{tpu_custom_call.1} parent=11 // pred_check_branch
          %769 = sbr.rel (%p767) target = $region16
        $region15: #{tpu_custom_call.1} parent=11 // pred_region
          %s770 = smul.u32 2, %s53
          %s772 = ssub.s32 256, 256
          %773 = vsyncadd [#allocation5], %s772
          %s774 = smul.addr %s770, 128
          %s775 = scalar_lea.hbm %s0, %s774
          %s776 = sshll.u32 [#allocation4], 4
          %s777 = int_to_ptr.vmem [resolvable:$true] %s776
          %782 = dma.hbm_to_vmem [thread:$0]  %s775, 256, %s777, [#allocation5], 128, 128, 8
        $region16: #{tpu_custom_call.1} parent=11 // pred_fallthru
          _
        // Predicated region
        $region17: #{tpu_custom_call.1} parent=11 // pred_check
          %p783 = pneg %p108
        $region18: #{tpu_custom_call.1} parent=11 // pred_check_branch
          %785 = sbr.rel (%p783) target = $region20
        $region19: #{tpu_custom_call.1} parent=11 // pred_region
          %s786 = smul.u32 2, %s53
          %p787 = scmp.lt.s32.totalorder %s786, 1
          %s788 = scalar_select %p787, %s786, 1
          %s789 = smul.addr %s788, 2
          %s790 = smul.addr %s789, 8
          %s791 = scalar_lea.vmem %s1, %s790
          %s792 = smul.u32 2, %s53
        $region20: #{tpu_custom_call.1} parent=11 // pred_fallthru
          _
        // Predicated region
        $region21: #{tpu_custom_call.1} parent=11 // pred_check
          %p793 = pneg %p649
        $region22: #{tpu_custom_call.1} parent=11 // pred_check_branch
          %795 = sbr.rel (%p793) target = $region24
        $region23: #{tpu_custom_call.1} parent=11 // pred_region
          _
        $region24: #{tpu_custom_call.1} parent=11 // pred_fallthru
          _
        // Predicated region
        $region25: #{tpu_custom_call.1} parent=11 // pred_check
          %p796 = pneg %p670
        $region26: #{tpu_custom_call.1} parent=11 // pred_check_branch
          %798 = sbr.rel (%p796) target = $region28
        $region27: #{tpu_custom_call.1} parent=11 // pred_region
          _
        $region28: #{tpu_custom_call.1} parent=11 // pred_fallthru
          _
      $region12: #{tpu_custom_call.1} parent=5 // pred_fallthru
        _
      %p799 = scmp.lt.s32.totalorder %s44, 2
      // Predicated region
      $region29: #{tpu_custom_call.1} parent=5 // pred_check
        %p800 = pneg %p799
      $region30: #{tpu_custom_call.1} parent=5 // pred_check_branch
        %802 = sbr.rel (%p800) target = $region32
      $region31: #{tpu_custom_call.1} parent=5 // pred_region
        // Predicated region
        $region33: #{tpu_custom_call.1} parent=31 // pred_check
          %p803 = pneg %p128
        $region34: #{tpu_custom_call.1} parent=31 // pred_check_branch
          %805 = sbr.rel (%p803) target = $region36
        $region35: #{tpu_custom_call.1} parent=31 // pred_region
          %p806 = scmp.lt.s32.totalorder %s52, 1
          %s807 = scalar_select %p806, %s52, 1
          %s808 = smul.addr %s807, 4
          %s809 = smul.addr %s808, 4
          %s810 = scalar_lea.vmem %s2, %s809
        $region36: #{tpu_custom_call.1} parent=31 // pred_fallthru
          _
        // Predicated region
        $region37: #{tpu_custom_call.1} parent=31 // pred_check
          %p811 = pneg %p154
        $region38: #{tpu_custom_call.1} parent=31 // pred_check_branch
          %813 = sbr.rel (%p811) target = $region40
        $region39: #{tpu_custom_call.1} parent=31 // pred_region
          %p814 = scmp.lt.s32.totalorder %s52, 1
          %s815 = scalar_select %p814, %s52, 1
          %s816 = scalar_lea.vmem %s3, %s815
        $region40: #{tpu_custom_call.1} parent=31 // pred_fallthru
          _
        // Predicated region
        $region41: #{tpu_custom_call.1} parent=31 // pred_check
          %p817 = pneg %p180
        $region42: #{tpu_custom_call.1} parent=31 // pred_check_branch
          %819 = sbr.rel (%p817) target = $region44
        $region43: #{tpu_custom_call.1} parent=31 // pred_region
          %p820 = scmp.lt.s32.totalorder %s52, 1
          %s821 = scalar_select %p820, %s52, 1
          %s822 = smul.addr %s821, 4
          %s823 = smul.addr %s822, 4
          %s824 = scalar_lea.vmem %s4, %s823
        $region44: #{tpu_custom_call.1} parent=31 // pred_fallthru
          _
        // Predicated region
        $region45: #{tpu_custom_call.1} parent=31 // pred_check
          %p825 = pneg %p206
        $region46: #{tpu_custom_call.1} parent=31 // pred_check_branch
          %827 = sbr.rel (%p825) target = $region48
        $region47: #{tpu_custom_call.1} parent=31 // pred_region
          %p828 = scmp.lt.s32.totalorder %s52, 1
          %s829 = scalar_select %p828, %s52, 1
          %s830 = scalar_lea.vmem %s5, %s829
        $region48: #{tpu_custom_call.1} parent=31 // pred_fallthru
          _
        // Predicated region
        $region49: #{tpu_custom_call.1} parent=31 // pred_check
          %p831 = pneg %p232
        $region50: #{tpu_custom_call.1} parent=31 // pred_check_branch
          %833 = sbr.rel (%p831) target = $region52
        $region51: #{tpu_custom_call.1} parent=31 // pred_region
          %s834 = sand.u32 %s44, 1
          %s835 = scalar_lea.sflag [#allocation8], %s834
          %s836 = sand.u32 %s222, 1
          %s837 = smul.addr %s836, 16
          %s838 = scalar_lea.vmem [#allocation7], %s837
          %s840 = ssub.s32 256, 256
          %841 = vsyncadd %s835, %s840
          %s842 = smul.addr %s52, 4
          %s843 = smul.addr %s842, 64
          %s844 = scalar_lea.hbm %s6, %s843
          %s845 = sshll.u32 %s838, 4
          %s846 = int_to_ptr.vmem [resolvable:$true] %s845
          %851 = dma.hbm_to_vmem [thread:$0]  %s844, 256, %s846, %s835, 64, 64, 4
        $region52: #{tpu_custom_call.1} parent=31 // pred_fallthru
          _
        // Predicated region
        $region53: #{tpu_custom_call.1} parent=31 // pred_check
          %p852 = pneg %p258
        $region54: #{tpu_custom_call.1} parent=31 // pred_check_branch
          %854 = sbr.rel (%p852) target = $region56
        $region55: #{tpu_custom_call.1} parent=31 // pred_region
          %p855 = scmp.lt.s32.totalorder %s52, 1
          %s856 = scalar_select %p855, %s52, 1
          %s857 = scalar_lea.vmem %s7, %s856
        $region56: #{tpu_custom_call.1} parent=31 // pred_fallthru
          _
        // Predicated region
        $region57: #{tpu_custom_call.1} parent=31 // pred_check
          %p858 = pneg %p284
        $region58: #{tpu_custom_call.1} parent=31 // pred_check_branch
          %860 = sbr.rel (%p858) target = $region60
        $region59: #{tpu_custom_call.1} parent=31 // pred_region
          %s861 = sand.u32 %s44, 1
          %s862 = scalar_lea.sflag [#allocation8], %s861
          %s863 = sand.u32 %s274, 1
          %s864 = smul.addr %s863, 16
          %s865 = scalar_lea.vmem [#allocation9], %s864
          %s867 = ssub.s32 256, 256
          %868 = vsyncadd %s862, %s867
          %s869 = smul.addr %s52, 4
          %s870 = smul.addr %s869, 64
          %s871 = scalar_lea.hbm %s8, %s870
          %s872 = sshll.u32 %s865, 4
          %s873 = int_to_ptr.vmem [resolvable:$true] %s872
          %878 = dma.hbm_to_vmem [thread:$0]  %s871, 256, %s873, %s862, 64, 64, 4
        $region60: #{tpu_custom_call.1} parent=31 // pred_fallthru
          _
        // Predicated region
        $region61: #{tpu_custom_call.1} parent=31 // pred_check
          %p879 = pneg %p310
        $region62: #{tpu_custom_call.1} parent=31 // pred_check_branch
          %881 = sbr.rel (%p879) target = $region64
        $region63: #{tpu_custom_call.1} parent=31 // pred_region
          %p882 = scmp.lt.s32.totalorder %s52, 1
          %s883 = scalar_select %p882, %s52, 1
          %s884 = scalar_lea.vmem %s9, %s883
        $region64: #{tpu_custom_call.1} parent=31 // pred_fallthru
          _
        // Predicated region
        $region65: #{tpu_custom_call.1} parent=31 // pred_check
          %p885 = pneg %p336
        $region66: #{tpu_custom_call.1} parent=31 // pred_check_branch
          %887 = sbr.rel (%p885) target = $region68
        $region67: #{tpu_custom_call.1} parent=31 // pred_region
          %s888 = sand.u32 %s44, 1
          %s889 = scalar_lea.sflag [#allocation11], %s888
          %s890 = sand.u32 %s326, 1
          %s891 = smul.addr %s890, 16
          %s892 = scalar_lea.vmem [#allocation10], %s891
          %s894 = ssub.s32 256, 256
          %895 = vsyncadd %s889, %s894
          %s896 = smul.addr %s52, 4
          %s897 = smul.addr %s896, 64
          %s898 = scalar_lea.hbm %s10, %s897
          %s899 = sshll.u32 %s892, 4
          %s900 = int_to_ptr.vmem [resolvable:$true] %s899
          %905 = dma.hbm_to_vmem [thread:$0]  %s898, 256, %s900, %s889, 64, 64, 4
        $region68: #{tpu_custom_call.1} parent=31 // pred_fallthru
          _
        // Predicated region
        $region69: #{tpu_custom_call.1} parent=31 // pred_check
          %p906 = pneg %p362
        $region70: #{tpu_custom_call.1} parent=31 // pred_check_branch
          %908 = sbr.rel (%p906) target = $region72
        $region71: #{tpu_custom_call.1} parent=31 // pred_region
          %p909 = scmp.lt.s32.totalorder %s52, 1
          %s910 = scalar_select %p909, %s52, 1
          %s911 = scalar_lea.vmem %s11, %s910
        $region72: #{tpu_custom_call.1} parent=31 // pred_fallthru
          _
        // Predicated region
        $region73: #{tpu_custom_call.1} parent=31 // pred_check
          %p912 = pneg %p388
        $region74: #{tpu_custom_call.1} parent=31 // pred_check_branch
          %914 = sbr.rel (%p912) target = $region76
        $region75: #{tpu_custom_call.1} parent=31 // pred_region
          %s915 = sand.u32 %s44, 1
          %s916 = scalar_lea.sflag [#allocation11], %s915
          %s917 = sand.u32 %s378, 1
          %s918 = smul.addr %s917, 16
          %s919 = scalar_lea.vmem [#allocation12], %s918
          %s921 = ssub.s32 256, 256
          %922 = vsyncadd %s916, %s921
          %s923 = smul.addr %s52, 4
          %s924 = smul.addr %s923, 64
          %s925 = scalar_lea.hbm %s12, %s924
          %s926 = sshll.u32 %s919, 4
          %s927 = int_to_ptr.vmem [resolvable:$true] %s926
          %932 = dma.hbm_to_vmem [thread:$0]  %s925, 256, %s927, %s916, 64, 64, 4
        $region76: #{tpu_custom_call.1} parent=31 // pred_fallthru
          _
        // Predicated region
        $region77: #{tpu_custom_call.1} parent=31 // pred_check
          %p933 = pneg %p414
        $region78: #{tpu_custom_call.1} parent=31 // pred_check_branch
          %935 = sbr.rel (%p933) target = $region80
        $region79: #{tpu_custom_call.1} parent=31 // pred_region
          %p936 = scmp.lt.s32.totalorder %s52, 1
          %s937 = scalar_select %p936, %s52, 1
          %s938 = scalar_lea.vmem %s13, %s937
        $region80: #{tpu_custom_call.1} parent=31 // pred_fallthru
          _
        // Predicated region
        $region81: #{tpu_custom_call.1} parent=31 // pred_check
          %p939 = pneg %p440
        $region82: #{tpu_custom_call.1} parent=31 // pred_check_branch
          %941 = sbr.rel (%p939) target = $region84
        $region83: #{tpu_custom_call.1} parent=31 // pred_region
          %p942 = scmp.lt.s32.totalorder %s52, 1
          %s943 = scalar_select %p942, %s52, 1
          %s944 = smul.addr %s943, 8
          %s945 = smul.addr %s944, 4
          %s946 = scalar_lea.vmem %s14, %s945
        $region84: #{tpu_custom_call.1} parent=31 // pred_fallthru
          _
        // Predicated region
        $region85: #{tpu_custom_call.1} parent=31 // pred_check
          %p947 = pneg %p466
        $region86: #{tpu_custom_call.1} parent=31 // pred_check_branch
          %949 = sbr.rel (%p947) target = $region88
        $region87: #{tpu_custom_call.1} parent=31 // pred_region
          %p950 = scmp.lt.s32.totalorder %s52, 1
          %s951 = scalar_select %p950, %s52, 1
          %s952 = scalar_lea.vmem %s15, %s951
        $region88: #{tpu_custom_call.1} parent=31 // pred_fallthru
          _
        // Predicated region
        $region89: #{tpu_custom_call.1} parent=31 // pred_check
          %p953 = pneg %p492
        $region90: #{tpu_custom_call.1} parent=31 // pred_check_branch
          %955 = sbr.rel (%p953) target = $region92
        $region91: #{tpu_custom_call.1} parent=31 // pred_region
          %p956 = scmp.lt.s32.totalorder %s52, 1
          %s957 = scalar_select %p956, %s52, 1
          %s958 = scalar_lea.vmem %s16, %s957
        $region92: #{tpu_custom_call.1} parent=31 // pred_fallthru
          _
        // Predicated region
        $region93: #{tpu_custom_call.1} parent=31 // pred_check
          %p959 = pneg %p518
        $region94: #{tpu_custom_call.1} parent=31 // pred_check_branch
          %961 = sbr.rel (%p959) target = $region96
        $region95: #{tpu_custom_call.1} parent=31 // pred_region
          %p962 = scmp.lt.s32.totalorder %s52, 1
          %s963 = scalar_select %p962, %s52, 1
          %s964 = scalar_lea.vmem %s17, %s963
        $region96: #{tpu_custom_call.1} parent=31 // pred_fallthru
          _
        // Predicated region
        $region97: #{tpu_custom_call.1} parent=31 // pred_check
          %p965 = pneg %p544
        $region98: #{tpu_custom_call.1} parent=31 // pred_check_branch
          %967 = sbr.rel (%p965) target = $region100
        $region99: #{tpu_custom_call.1} parent=31 // pred_region
          %p968 = scmp.lt.s32.totalorder %s52, 1
          %s969 = scalar_select %p968, %s52, 1
          %s970 = scalar_lea.vmem %s18, %s969
        $region100: #{tpu_custom_call.1} parent=31 // pred_fallthru
          _
        // Predicated region
        $region101: #{tpu_custom_call.1} parent=31 // pred_check
          %p971 = pneg %p570
        $region102: #{tpu_custom_call.1} parent=31 // pred_check_branch
          %973 = sbr.rel (%p971) target = $region104
        $region103: #{tpu_custom_call.1} parent=31 // pred_region
          %p974 = scmp.lt.s32.totalorder %s52, 1
          %s975 = scalar_select %p974, %s52, 1
          %s976 = scalar_lea.vmem %s19, %s975
        $region104: #{tpu_custom_call.1} parent=31 // pred_fallthru
          _
        // Predicated region
        $region105: #{tpu_custom_call.1} parent=31 // pred_check
          %p977 = pneg %p596
        $region106: #{tpu_custom_call.1} parent=31 // pred_check_branch
          %979 = sbr.rel (%p977) target = $region108
        $region107: #{tpu_custom_call.1} parent=31 // pred_region
          %p980 = scmp.lt.s32.totalorder %s52, 1
          %s981 = scalar_select %p980, %s52, 1
          %s982 = scalar_lea.vmem %s20, %s981
        $region108: #{tpu_custom_call.1} parent=31 // pred_fallthru
          _
        // Predicated region
        $region109: #{tpu_custom_call.1} parent=31 // pred_check
          %p983 = pneg %p622
        $region110: #{tpu_custom_call.1} parent=31 // pred_check_branch
          %985 = sbr.rel (%p983) target = $region112
        $region111: #{tpu_custom_call.1} parent=31 // pred_region
          %p986 = scmp.lt.s32.totalorder %s52, 1
          %s987 = scalar_select %p986, %s52, 1
          %s988 = scalar_lea.vmem %s21, %s987
        $region112: #{tpu_custom_call.1} parent=31 // pred_fallthru
          _
      $region32: #{tpu_custom_call.1} parent=5 // pred_fallthru
        _
      %p989 = scmp.le.s32.totalorder 1, %s44
      %p990 = scmp.lt.s32.totalorder %s44, 3
      %p991 = pnand %p989, %p990
      %p992 = pneg %p991
      // Predicated region
      $region113: #{tpu_custom_call.1} parent=5 // pred_check
        _
      $region114: #{tpu_custom_call.1} parent=5 // pred_check_branch
        %994 = sbr.rel (%p991) target = $region116
      $region115: #{tpu_custom_call.1} parent=5 // pred_region
        %s995 = ssub.s32 %s44, 1
        // Predicated region
        $region117: #{tpu_custom_call.1} parent=115 // pred_check
          %p996 = pneg %p82
        $region118: #{tpu_custom_call.1} parent=115 // pred_check_branch
          %998 = sbr.rel (%p996) target = $region120
        $region119: #{tpu_custom_call.1} parent=115 // pred_region
          %999 = dma.done [#allocation5], 256
        $region120: #{tpu_custom_call.1} parent=115 // pred_fallthru
          _
        %s1000 = sand.u32 %s49, 1
        %s1001 = scalar_lea.sflag [#allocation8], %s1000
        %s1002 = sand.u32 %s225, 1
        %s1003 = smul.addr %s1002, 16
        %s1004 = scalar_lea.vmem [#allocation7], %s1003
        // Predicated region
        $region121: #{tpu_custom_call.1} parent=115 // pred_check
          %p1005 = pneg %p238
        $region122: #{tpu_custom_call.1} parent=115 // pred_check_branch
          %1007 = sbr.rel (%p1005) target = $region124
        $region123: #{tpu_custom_call.1} parent=115 // pred_region
          %1008 = dma.done %s1001, 256
        $region124: #{tpu_custom_call.1} parent=115 // pred_fallthru
          _
        %s1009 = sand.u32 %s49, 1
        %s1010 = scalar_lea.sflag [#allocation8], %s1009
        %s1011 = sand.u32 %s277, 1
        %s1012 = smul.addr %s1011, 16
        %s1013 = scalar_lea.vmem [#allocation9], %s1012
        // Predicated region
        $region125: #{tpu_custom_call.1} parent=115 // pred_check
          %p1014 = pneg %p290
        $region126: #{tpu_custom_call.1} parent=115 // pred_check_branch
          %1016 = sbr.rel (%p1014) target = $region128
        $region127: #{tpu_custom_call.1} parent=115 // pred_region
          %1017 = dma.done %s1010, 256
        $region128: #{tpu_custom_call.1} parent=115 // pred_fallthru
          _
        %s1018 = sand.u32 %s49, 1
        %s1019 = scalar_lea.sflag [#allocation11], %s1018
        %s1020 = sand.u32 %s329, 1
        %s1021 = smul.addr %s1020, 16
        %s1022 = scalar_lea.vmem [#allocation10], %s1021
        // Predicated region
        $region129: #{tpu_custom_call.1} parent=115 // pred_check
          %p1023 = pneg %p342
        $region130: #{tpu_custom_call.1} parent=115 // pred_check_branch
          %1025 = sbr.rel (%p1023) target = $region132
        $region131: #{tpu_custom_call.1} parent=115 // pred_region
          %1026 = dma.done %s1019, 256
        $region132: #{tpu_custom_call.1} parent=115 // pred_fallthru
          _
        %s1027 = sand.u32 %s49, 1
        %s1028 = scalar_lea.sflag [#allocation11], %s1027
        %s1029 = sand.u32 %s381, 1
        %s1030 = smul.addr %s1029, 16
        %s1031 = scalar_lea.vmem [#allocation12], %s1030
        // Predicated region
        $region133: #{tpu_custom_call.1} parent=115 // pred_check
          %p1032 = pneg %p394
        $region134: #{tpu_custom_call.1} parent=115 // pred_check_branch
          %1034 = sbr.rel (%p1032) target = $region136
        $region135: #{tpu_custom_call.1} parent=115 // pred_region
          %1035 = dma.done %s1028, 256
        $region136: #{tpu_custom_call.1} parent=115 // pred_fallthru
          _
        %p1036 = pneg %p82
        %p1037 = pneg %p79
        %s1038 = smul.u32 2, %s53
        %p1039 = scmp.lt.s32.totalorder %s1038, 1
        %s1040 = scalar_select %p1039, %s1038, 1
        %s1041 = smul.addr %s1040, 2
        %s1042 = smul.addr %s1041, 8
        %s1043 = scalar_lea.vmem %s1, %s1042
        %p1044 = pneg %p108
        %p1045 = pneg %p105
        %p1046 = scmp.lt.s32.totalorder %s54, 1
        %s1047 = scalar_select %p1046, %s54, 1
        %s1048 = smul.addr %s1047, 4
        %s1049 = smul.addr %s1048, 4
        %s1050 = scalar_lea.vmem %s2, %s1049
        %p1051 = pneg %p134
        %p1052 = pneg %p131
        %p1053 = scmp.lt.s32.totalorder %s54, 1
        %s1054 = scalar_select %p1053, %s54, 1
        %s1055 = scalar_lea.vmem %s3, %s1054
        %p1056 = pneg %p160
        %p1057 = pneg %p157
        %p1058 = scmp.lt.s32.totalorder %s54, 1
        %s1059 = scalar_select %p1058, %s54, 1
        %s1060 = smul.addr %s1059, 4
        %s1061 = smul.addr %s1060, 4
        %s1062 = scalar_lea.vmem %s4, %s1061
        %p1063 = pneg %p186
        %p1064 = pneg %p183
        %p1065 = scmp.lt.s32.totalorder %s54, 1
        %s1066 = scalar_select %p1065, %s54, 1
        %s1067 = scalar_lea.vmem %s5, %s1066
        %p1068 = pneg %p212
        %p1069 = pneg %p209
        %s1070 = sand.u32 %s49, 1
        %s1071 = scalar_lea.sflag [#allocation8], %s1070
        %s1072 = sand.u32 %s225, 1
        %s1073 = smul.addr %s1072, 16
        %s1074 = scalar_lea.vmem [#allocation7], %s1073
        %p1075 = pneg %p238
        %p1076 = pneg %p235
        %p1077 = scmp.lt.s32.totalorder %s54, 1
        %s1078 = scalar_select %p1077, %s54, 1
        %s1079 = scalar_lea.vmem %s7, %s1078
        %p1080 = pneg %p264
        %p1081 = pneg %p261
        %s1082 = sand.u32 %s49, 1
        %s1083 = scalar_lea.sflag [#allocation8], %s1082
        %s1084 = sand.u32 %s277, 1
        %s1085 = smul.addr %s1084, 16
        %s1086 = scalar_lea.vmem [#allocation9], %s1085
        %p1087 = pneg %p290
        %p1088 = pneg %p287
        %p1089 = scmp.lt.s32.totalorder %s54, 1
        %s1090 = scalar_select %p1089, %s54, 1
        %s1091 = scalar_lea.vmem %s9, %s1090
        %p1092 = pneg %p316
        %p1093 = pneg %p313
        %s1094 = sand.u32 %s49, 1
        %s1095 = scalar_lea.sflag [#allocation11], %s1094
        %s1096 = sand.u32 %s329, 1
        %s1097 = smul.addr %s1096, 16
        %s1098 = scalar_lea.vmem [#allocation10], %s1097
        %p1099 = pneg %p342
        %p1100 = pneg %p339
        %p1101 = scmp.lt.s32.totalorder %s54, 1
        %s1102 = scalar_select %p1101, %s54, 1
        %s1103 = scalar_lea.vmem %s11, %s1102
        %p1104 = pneg %p368
        %p1105 = pneg %p365
        %s1106 = sand.u32 %s49, 1
        %s1107 = scalar_lea.sflag [#allocation11], %s1106
        %s1108 = sand.u32 %s381, 1
        %s1109 = smul.addr %s1108, 16
        %s1110 = scalar_lea.vmem [#allocation12], %s1109
        %p1111 = pneg %p394
        %p1112 = pneg %p391
        %p1113 = scmp.lt.s32.totalorder %s54, 1
        %s1114 = scalar_select %p1113, %s54, 1
        %s1115 = scalar_lea.vmem %s13, %s1114
        %p1116 = pneg %p420
        %p1117 = pneg %p417
        %p1118 = scmp.lt.s32.totalorder %s54, 1
        %s1119 = scalar_select %p1118, %s54, 1
        %s1120 = smul.addr %s1119, 8
        %s1121 = smul.addr %s1120, 4
        %s1122 = scalar_lea.vmem %s14, %s1121
        %p1123 = pneg %p446
        %p1124 = pneg %p443
        %p1125 = scmp.lt.s32.totalorder %s54, 1
        %s1126 = scalar_select %p1125, %s54, 1
        %s1127 = scalar_lea.vmem %s15, %s1126
        %p1128 = pneg %p472
        %p1129 = pneg %p469
        %p1130 = scmp.lt.s32.totalorder %s54, 1
        %s1131 = scalar_select %p1130, %s54, 1
        %s1132 = scalar_lea.vmem %s16, %s1131
        %p1133 = pneg %p498
        %p1134 = pneg %p495
        %p1135 = scmp.lt.s32.totalorder %s54, 1
        %s1136 = scalar_select %p1135, %s54, 1
        %s1137 = scalar_lea.vmem %s17, %s1136
        %p1138 = pneg %p524
        %p1139 = pneg %p521
        %p1140 = scmp.lt.s32.totalorder %s54, 1
        %s1141 = scalar_select %p1140, %s54, 1
        %s1142 = scalar_lea.vmem %s18, %s1141
        %p1143 = pneg %p550
        %p1144 = pneg %p547
        %p1145 = scmp.lt.s32.totalorder %s54, 1
        %s1146 = scalar_select %p1145, %s54, 1
        %s1147 = scalar_lea.vmem %s19, %s1146
        %p1148 = pneg %p576
        %p1149 = pneg %p573
        %p1150 = scmp.lt.s32.totalorder %s54, 1
        %s1151 = scalar_select %p1150, %s54, 1
        %s1152 = scalar_lea.vmem %s20, %s1151
        %p1153 = pneg %p602
        %p1154 = pneg %p599
        %p1155 = scmp.lt.s32.totalorder %s54, 1
        %s1156 = scalar_select %p1155, %s54, 1
        %s1157 = scalar_lea.vmem %s21, %s1156
        %p1158 = pneg %p628
        %p1159 = pneg %p625
        %p1160 = pneg %p649
        %p1161 = pneg %p646
        %p1162 = pneg %p670
        %p1163 = pneg %p667
        %p1164 = pneg %p696
        %p1165 = pneg %p693
        %p1166 = pneg %p724
        %p1167 = pneg %p721
        %s1168 = sand.u32 %s49, 1
        %s1169 = scalar_lea.sflag [#allocation15], %s1168
        %s1170 = sand.u32 %s711, 1
        %s1171 = smul.addr %s1170, 16
        %s1172 = scalar_lea.vmem [#allocation14], %s1171
        %p1173 = pneg %p752
        %p1174 = pneg %p749
        %s1175 = sand.u32 %s49, 1
        %s1176 = scalar_lea.sflag [#allocation15], %s1175
        %s1177 = sand.u32 %s739, 1
        %s1178 = smul.addr %s1177, 16
        %s1179 = scalar_lea.vmem [#allocation16], %s1178
        %s1180 = smul.u32 2, %s53
        %s1181 = smul.u32 2, %s53
        %p1182 = scmp.lt.s32.totalorder %s1181, 1
        %s1183 = scalar_select %p1182, %s1181, 1
        %s1184 = smul.addr %s1183, 2
        %s1185 = smul.addr %s1184, 8
        %s1186 = scalar_lea.vmem %s1, %s1185
        %s1187 = smul.u32 2, %s53
        %p1188 = scmp.lt.s32.totalorder %s54, 1
        %s1189 = scalar_select %p1188, %s54, 1
        %s1190 = smul.addr %s1189, 4
        %s1191 = smul.addr %s1190, 4
        %s1192 = scalar_lea.vmem %s2, %s1191
        %p1193 = scmp.lt.s32.totalorder %s54, 1
        %s1194 = scalar_select %p1193, %s54, 1
        %s1195 = scalar_lea.vmem %s3, %s1194
        %p1196 = scmp.lt.s32.totalorder %s54, 1
        %s1197 = scalar_select %p1196, %s54, 1
        %s1198 = smul.addr %s1197, 4
        %s1199 = smul.addr %s1198, 4
        %s1200 = scalar_lea.vmem %s4, %s1199
        %p1201 = scmp.lt.s32.totalorder %s54, 1
        %s1202 = scalar_select %p1201, %s54, 1
        %s1203 = scalar_lea.vmem %s5, %s1202
        %p1204 = scmp.lt.s32.totalorder %s54, 1
        %s1205 = scalar_select %p1204, %s54, 1
        %s1206 = scalar_lea.vmem %s7, %s1205
        %p1207 = scmp.lt.s32.totalorder %s54, 1
        %s1208 = scalar_select %p1207, %s54, 1
        %s1209 = scalar_lea.vmem %s9, %s1208
        %p1210 = scmp.lt.s32.totalorder %s54, 1
        %s1211 = scalar_select %p1210, %s54, 1
        %s1212 = scalar_lea.vmem %s11, %s1211
        %p1213 = scmp.lt.s32.totalorder %s54, 1
        %s1214 = scalar_select %p1213, %s54, 1
        %s1215 = scalar_lea.vmem %s13, %s1214
        %p1216 = scmp.lt.s32.totalorder %s54, 1
        %s1217 = scalar_select %p1216, %s54, 1
        %s1218 = smul.addr %s1217, 8
        %s1219 = smul.addr %s1218, 4
        %s1220 = scalar_lea.vmem %s14, %s1219
        %p1221 = scmp.lt.s32.totalorder %s54, 1
        %s1222 = scalar_select %p1221, %s54, 1
        %s1223 = scalar_lea.vmem %s15, %s1222
        %p1224 = scmp.lt.s32.totalorder %s54, 1
        %s1225 = scalar_select %p1224, %s54, 1
        %s1226 = scalar_lea.vmem %s16, %s1225
        %p1227 = scmp.lt.s32.totalorder %s54, 1
        %s1228 = scalar_select %p1227, %s54, 1
        %s1229 = scalar_lea.vmem %s17, %s1228
        %p1230 = scmp.lt.s32.totalorder %s54, 1
        %s1231 = scalar_select %p1230, %s54, 1
        %s1232 = scalar_lea.vmem %s18, %s1231
        %p1233 = scmp.lt.s32.totalorder %s54, 1
        %s1234 = scalar_select %p1233, %s54, 1
        %s1235 = scalar_lea.vmem %s19, %s1234
        %p1236 = scmp.lt.s32.totalorder %s54, 1
        %s1237 = scalar_select %p1236, %s54, 1
        %s1238 = scalar_lea.vmem %s20, %s1237
        %p1239 = scmp.lt.s32.totalorder %s54, 1
        %s1240 = scalar_select %p1239, %s54, 1
        %s1241 = scalar_lea.vmem %s21, %s1240
        %s1242 = smul.u32 2, %s53
        %s1243 = smul.u32 2, %s53
        %s1244 = smul.u32 2, %s53
        %p1246 = scmp.eq.s32.totalorder %s54, 0
        // Predicated region
        $region137: #{tpu_custom_call.1} parent=115 // pred_check
          %p1247 = pneg %p1246
        $region138: #{tpu_custom_call.1} parent=115 // pred_check_branch
          %1249 = sbr.rel (%p1247) target = $region140
        $region139: #{tpu_custom_call.1} parent=115 // pred_region
          %v1250 = vld [vmem:[#allocation4] sm:$0xff]
          %v1251 = vld [vmem:[#allocation4 + $0x8] sm:$0xff]
          %vm1252 = vcmask 261120
          %1253 = vst.msk [vmem:[#allocation2] sm:$0xff] %vm1252, %v1250
          %1254 = vst.msk [vmem:[#allocation2 + $0x8] sm:$0xff] %vm1252, %v1251
        $region140: #{tpu_custom_call.1} parent=115 // pred_fallthru
          _
        %v1255 = vld [vmem:[#allocation2] sm:$0xff]
        %v1256 = vld [vmem:[#allocation2 + $0x8] sm:$0xff]
        %v1257 = vld [vmem:[%s1186] sm:$0xff]
        %v1258 = vld [vmem:[%s1186 + $0x8] sm:$0xff]
        %v1259 = vld [vmem:[%s1186 + $0x10] sm:$0xff]
        %v1260 = vld [vmem:[%s1186 + $0x18] sm:$0xff]
        %v1261 = vpack.c.bf16 %v1258, %v1257
        %v1262 = vpack.c.bf16 %v1260, %v1259
        %v1263 = vpack.c.bf16 %v1256, %v1255
        %v1264 = vld [vmem:[%s1192] sm:$0xf]
        %v1265 = vld [vmem:[%s1192 + $0x4] sm:$0xf]
        %v1266 = vld [vmem:[%s1192 + $0x8] sm:$0xf]
        %v1267 = vld [vmem:[%s1192 + $0xc] sm:$0xf]
        %v1268 = vld [vmem:[%s1195] sm:$0x1]
        %v1270 = vlaneseq
        %v1271 = vshrl.u32 %v1270, 7
        %v1272 = vsub.s32 0, %v1271
        %v1273 = vrot.slane %v1268, %v1272
        %v1279 = vunpack.c.l.b16 %v1264
        %v1280 = vunpack.c.l.b16 %v1265
        %v1281 = vunpack.c.l.b16 %v1266
        %v1282 = vunpack.c.l.b16 %v1267
        %v1283 = vpack.c.b16 %v1280, %v1279
        %v1284 = vpack.c.b16 %v1282, %v1281
        %vm1287 = vcmask 261120
        %v1289 = vsel %vm1287, %v1263, 0
        %1291 = vmatprep.subr.bf16.mxu0 0
        %1292 = vmatpush1.bf16.msra.mxu0 0
        %1293 = vmatprep.subr.bf16.mxu0 0
        %1294 = vmatpush1.bf16.msra.mxu0 0
        %1295 = vmatprep.subr.bf16.mxu0 0
        %1296 = vmatpush1.bf16.msra.mxu0 0
        %1297 = vmatprep.subr.bf16.mxu0 0
        %1298 = vmatpush1.bf16.msra.mxu0 0
        %1299 = vmatprep.subr.bf16.mxu0 0
        %1300 = vmatpush1.bf16.msra.mxu0 0
        %1301 = vmatprep.subr.bf16.mxu0 0
        %1302 = vmatpush1.bf16.msra.mxu0 0
        %1303 = vmatprep.subr.bf16.mxu0 0
        %1304 = vmatpush1.bf16.msra.mxu0 %v1284
        %1305 = vmatprep.subr.bf16.mxu0 0
        %1306 = vmatpush1.bf16.msra.mxu0 %v1283
        %1307 = vmatprep.subr.bf16.mxu0 0
        %1308 = vmatpush2.bf16.msra.mxu0 0
        %1309 = vmatprep.subr.bf16.mxu0 0
        %1310 = vmatpush2.bf16.msra.mxu0 0
        %1311 = vmatprep.subr.bf16.mxu0 0
        %1312 = vmatpush2.bf16.msra.mxu0 0
        %1313 = vmatprep.subr.bf16.mxu0 0
        %1314 = vmatpush2.bf16.msra.mxu0 0
        %1315 = vmatprep.subr.bf16.mxu0 0
        %1316 = vmatpush2.bf16.msra.mxu0 0
        %1317 = vmatprep.subr.bf16.mxu0 0
        %1318 = vmatpush2.bf16.msra.mxu0 0
        %1319 = vmatprep.subr.bf16.mxu0 0
        %1320 = vmatpush2.bf16.msra.mxu0 0
        %1321 = vmatprep.subr.bf16.mxu0 0
        %1322 = vmatpush2.bf16.msra.mxu0 0
        %1323 = vmatprep.mubr.bf16.mxu0 0
        %1324 = vmatmul.mubr.bf16.gmra.mxu0 %v1289
        %v1325 = vpop.f32.mrf.mxu0
        %v1326 = vadd.f32 %v1273, %v1325
        %v1327 = vpop.f32.mrf.mxu0
        %v1328 = vpop.f32.mrf.mxu0
        %v1329 = vadd.f32 %v1273, %v1328
        %v1330 = vpop.f32.mrf.mxu0
        %1331 = vdwg.mxu0
        %v1332 = vmul.f32 %v1326, 0.35355338
        %v1333 = vmul.f32 %v1329, 0.35355338
        %v1334 = vld [vmem:[%s1200] sm:$0xf]
        %v1335 = vld [vmem:[%s1200 + $0x4] sm:$0xf]
        %v1336 = vld [vmem:[%s1200 + $0x8] sm:$0xf]
        %v1337 = vld [vmem:[%s1200 + $0xc] sm:$0xf]
        %v1338 = vld [vmem:[%s1203] sm:$0x1]
        %v1339 = vpack.c.bf16 %v1332, %v1332
        %v1340 = vpack.c.bf16 %v1333, %v1333
        %v1341 = vpack.c.bf16 %v1326, %v1326
        %v1342 = vpack.c.bf16 %v1329, %v1329
        %1344 = vrot.lane.b32.xlu0 %v1341, 96
        %v1345 = vpop.permute.xlu0 %1344
        %vm1346 = vcmask 64512
        %v1348 = vsel %vm1346, %v1339, 0
        %v1351 = vsel %vm1346, %v1345, 0
        %1353 = vmatprep.subr.bf16.mxu0 0
        %1354 = vmatpush1.bf16.xpose.msra.mxu0 0
        %1355 = vmatprep.subr.bf16.mxu0 0
        %1356 = vmatpush1.bf16.xpose.msra.mxu0 0
        %1357 = vmatprep.subr.bf16.mxu0 0
        %1358 = vmatpush1.bf16.xpose.msra.mxu0 0
        %1359 = vmatprep.subr.bf16.mxu0 0
        %1360 = vmatpush1.bf16.xpose.msra.mxu0 0
        %1361 = vmatprep.subr.bf16.mxu0 0
        %1362 = vmatpush1.bf16.xpose.msra.mxu0 0
        %1363 = vmatprep.subr.bf16.mxu0 0
        %1364 = vmatpush1.bf16.xpose.msra.mxu0 0
        %1365 = vmatprep.subr.bf16.mxu0 0
        %1366 = vmatpush1.bf16.xpose.msra.mxu0 0
        %1367 = vmatprep.subr.bf16.mxu0 0
        %1368 = vmatpush1.bf16.xpose.msra.mxu0 %v1351
        %1369 = vmatprep.subr.bf16.mxu0 0
        %1370 = vmatpush2.bf16.xpose.msra.mxu0 0
        %1371 = vmatprep.subr.bf16.mxu0 0
        %1372 = vmatpush2.bf16.xpose.msra.mxu0 0
        %1373 = vmatprep.subr.bf16.mxu0 0
        %1374 = vmatpush2.bf16.xpose.msra.mxu0 0
        %1375 = vmatprep.subr.bf16.mxu0 0
        %1376 = vmatpush2.bf16.xpose.msra.mxu0 0
        %1377 = vmatprep.subr.bf16.mxu0 0
        %1378 = vmatpush2.bf16.xpose.msra.mxu0 0
        %1379 = vmatprep.subr.bf16.mxu0 0
        %1380 = vmatpush2.bf16.xpose.msra.mxu0 0
        %1381 = vmatprep.subr.bf16.mxu0 0
        %1382 = vmatpush2.bf16.xpose.msra.mxu0 0
        %1383 = vmatprep.subr.bf16.mxu0 0
        %1384 = vmatpush2.bf16.xpose.msra.mxu0 0
        %1385 = vmatprep.mubr.bf16.mxu0 0
        %1386 = vmatmul.mubr.bf16.gmra.mxu0 %v1348
        %v1387 = vpop.f32.mrf.mxu0
        %v1388 = vadd.f32 0.0, %v1387
        %v1389 = vpop.f32.mrf.mxu0
        %v1390 = vpop.f32.mrf.mxu0
        %v1391 = vpop.f32.mrf.mxu0
        %1392 = vdwg.mxu0
        %1394 = vrot.lane.b32.xlu0 %v1342, 96
        %v1395 = vpop.permute.xlu0 %1394
        %v1397 = vsel %vm1346, %v1340, 0
        %v1400 = vsel %vm1346, %v1395, 0
        %1402 = vmatprep.subr.bf16.mxu0 0
        %1403 = vmatpush1.bf16.xpose.msra.mxu0 0
        %1404 = vmatprep.subr.bf16.mxu0 0
        %1405 = vmatpush1.bf16.xpose.msra.mxu0 0
        %1406 = vmatprep.subr.bf16.mxu0 0
        %1407 = vmatpush1.bf16.xpose.msra.mxu0 0
        %1408 = vmatprep.subr.bf16.mxu0 0
        %1409 = vmatpush1.bf16.xpose.msra.mxu0 0
        %1410 = vmatprep.subr.bf16.mxu0 0
        %1411 = vmatpush1.bf16.xpose.msra.mxu0 0
        %1412 = vmatprep.subr.bf16.mxu0 0
        %1413 = vmatpush1.bf16.xpose.msra.mxu0 0
        %1414 = vmatprep.subr.bf16.mxu0 0
        %1415 = vmatpush1.bf16.xpose.msra.mxu0 0
        %1416 = vmatprep.subr.bf16.mxu0 0
        %1417 = vmatpush1.bf16.xpose.msra.mxu0 %v1400
        %1418 = vmatprep.subr.bf16.mxu0 0
        %1419 = vmatpush2.bf16.xpose.msra.mxu0 0
        %1420 = vmatprep.subr.bf16.mxu0 0
        %1421 = vmatpush2.bf16.xpose.msra.mxu0 0
        %1422 = vmatprep.subr.bf16.mxu0 0
        %1423 = vmatpush2.bf16.xpose.msra.mxu0 0
        %1424 = vmatprep.subr.bf16.mxu0 0
        %1425 = vmatpush2.bf16.xpose.msra.mxu0 0
        %1426 = vmatprep.subr.bf16.mxu0 0
        %1427 = vmatpush2.bf16.xpose.msra.mxu0 0
        %1428 = vmatprep.subr.bf16.mxu0 0
        %1429 = vmatpush2.bf16.xpose.msra.mxu0 0
        %1430 = vmatprep.subr.bf16.mxu0 0
        %1431 = vmatpush2.bf16.xpose.msra.mxu0 0
        %1432 = vmatprep.subr.bf16.mxu0 0
        %1433 = vmatpush2.bf16.xpose.msra.mxu0 0
        %1434 = vmatprep.mubr.bf16.mxu0 0
        %1435 = vmatmul.mubr.bf16.gmra.mxu0 %v1397
        %v1436 = vpop.f32.mrf.mxu0
        %v1437 = vadd.f32 0.0, %v1436
        %v1438 = vpop.f32.mrf.mxu0
        %v1439 = vpop.f32.mrf.mxu0
        %v1440 = vpop.f32.mrf.mxu0
        %1441 = vdwg.mxu0
        %v1442 = vsel %vm1346, %v1388, -inf
        %1443 = vmax.xlane.f32.xlu0 %v1442
        %v1444 = vpop.xlane.xlu0 %1443
        %v1445 = vsel %vm1346, %v1437, -inf
        %1446 = vmax.xlane.f32.xlu0 %v1445
        %v1447 = vpop.xlane.xlu0 %1446
        %v1448 = vsub.f32 %v1388, %v1444
        %v1449 = vsub.f32 %v1437, %v1447
        %v1450 = vmul.f32 %v1448, 1.442695
        %v1451 = vpow.pop %v1450
        %v1452 = vmul.f32 %v1449, 1.442695
        %v1453 = vpow.pop %v1452
        %v1454 = vsel %vm1346, %v1451, 0.0
        %1455 = vadd.xlane.f32.xlu0 %v1454
        %v1456 = vpop.xlane.xlu0 %1455
        %v1457 = vsel %vm1346, %v1453, 0.0
        %1458 = vadd.xlane.f32.xlu0 %v1457
        %v1459 = vpop.xlane.xlu0 %1458
        %v1460 = vrcp.pop %v1456
        %v1461 = vrcp.pop %v1459
        %v1462 = vmul.f32 %v1451, %v1460
        %v1463 = vmul.f32 %v1453, %v1461
        %v1464 = vpack.c.bf16 %v1462, %v1462
        %v1465 = vpack.c.bf16 %v1463, %v1463
        %1466 = vrot.lane.b32.xlu0 %v1341, 64
        %v1467 = vpop.permute.xlu0 %1466
        %v1469 = vsel %vm1346, %v1464, 0
        %vm1471 = vcmask 1043456
        %v1473 = vsel %vm1471, %v1467, 0
        %1475 = vmatprep.subr.bf16.mxu0 0
        %1476 = vmatpush1.bf16.msra.mxu0 0
        %1477 = vmatprep.subr.bf16.mxu0 0
        %1478 = vmatpush1.bf16.msra.mxu0 0
        %1479 = vmatprep.subr.bf16.mxu0 0
        %1480 = vmatpush1.bf16.msra.mxu0 0
        %1481 = vmatprep.subr.bf16.mxu0 0
        %1482 = vmatpush1.bf16.msra.mxu0 0
        %1483 = vmatprep.subr.bf16.mxu0 0
        %1484 = vmatpush1.bf16.msra.mxu0 0
        %1485 = vmatprep.subr.bf16.mxu0 0
        %1486 = vmatpush1.bf16.msra.mxu0 0
        %1487 = vmatprep.subr.bf16.mxu0 0
        %1488 = vmatpush1.bf16.msra.mxu0 0
        %1489 = vmatprep.subr.bf16.mxu0 0
        %1490 = vmatpush1.bf16.msra.mxu0 %v1473
        %1491 = vmatprep.subr.bf16.mxu0 0
        %1492 = vmatpush2.bf16.msra.mxu0 0
        %1493 = vmatprep.subr.bf16.mxu0 0
        %1494 = vmatpush2.bf16.msra.mxu0 0
        %1495 = vmatprep.subr.bf16.mxu0 0
        %1496 = vmatpush2.bf16.msra.mxu0 0
        %1497 = vmatprep.subr.bf16.mxu0 0
        %1498 = vmatpush2.bf16.msra.mxu0 0
        %1499 = vmatprep.subr.bf16.mxu0 0
        %1500 = vmatpush2.bf16.msra.mxu0 0
        %1501 = vmatprep.subr.bf16.mxu0 0
        %1502 = vmatpush2.bf16.msra.mxu0 0
        %1503 = vmatprep.subr.bf16.mxu0 0
        %1504 = vmatpush2.bf16.msra.mxu0 0
        %1505 = vmatprep.subr.bf16.mxu0 0
        %1506 = vmatpush2.bf16.msra.mxu0 0
        %1507 = vmatprep.mubr.bf16.mxu0 0
        %1508 = vmatmul.mubr.bf16.gmra.mxu0 %v1469
        %v1509 = vpop.f32.mrf.mxu0
        %v1510 = vadd.f32 0.0, %v1509
        %v1511 = vpop.f32.mrf.mxu0
        %v1512 = vpop.f32.mrf.mxu0
        %v1513 = vpop.f32.mrf.mxu0
        %1514 = vdwg.mxu0
        %1515 = vrot.lane.b32.xlu0 %v1342, 64
        %v1516 = vpop.permute.xlu0 %1515
        %v1518 = vsel %vm1346, %v1465, 0
        %v1521 = vsel %vm1471, %v1516, 0
        %1523 = vmatprep.subr.bf16.mxu0 0
        %1524 = vmatpush1.bf16.msra.mxu0 0
        %1525 = vmatprep.subr.bf16.mxu0 0
        %1526 = vmatpush1.bf16.msra.mxu0 0
        %1527 = vmatprep.subr.bf16.mxu0 0
        %1528 = vmatpush1.bf16.msra.mxu0 0
        %1529 = vmatprep.subr.bf16.mxu0 0
        %1530 = vmatpush1.bf16.msra.mxu0 0
        %1531 = vmatprep.subr.bf16.mxu0 0
        %1532 = vmatpush1.bf16.msra.mxu0 0
        %1533 = vmatprep.subr.bf16.mxu0 0
        %1534 = vmatpush1.bf16.msra.mxu0 0
        %1535 = vmatprep.subr.bf16.mxu0 0
        %1536 = vmatpush1.bf16.msra.mxu0 0
        %1537 = vmatprep.subr.bf16.mxu0 0
        %1538 = vmatpush1.bf16.msra.mxu0 %v1521
        %1539 = vmatprep.subr.bf16.mxu0 0
        %1540 = vmatpush2.bf16.msra.mxu0 0
        %1541 = vmatprep.subr.bf16.mxu0 0
        %1542 = vmatpush2.bf16.msra.mxu0 0
        %1543 = vmatprep.subr.bf16.mxu0 0
        %1544 = vmatpush2.bf16.msra.mxu0 0
        %1545 = vmatprep.subr.bf16.mxu0 0
        %1546 = vmatpush2.bf16.msra.mxu0 0
        %1547 = vmatprep.subr.bf16.mxu0 0
        %1548 = vmatpush2.bf16.msra.mxu0 0
        %1549 = vmatprep.subr.bf16.mxu0 0
        %1550 = vmatpush2.bf16.msra.mxu0 0
        %1551 = vmatprep.subr.bf16.mxu0 0
        %1552 = vmatpush2.bf16.msra.mxu0 0
        %1553 = vmatprep.subr.bf16.mxu0 0
        %1554 = vmatpush2.bf16.msra.mxu0 0
        %1555 = vmatprep.mubr.bf16.mxu0 0
        %1556 = vmatmul.mubr.bf16.gmra.mxu0 %v1518
        %v1557 = vpop.f32.mrf.mxu0
        %v1558 = vadd.f32 0.0, %v1557
        %v1559 = vpop.f32.mrf.mxu0
        %v1560 = vpop.f32.mrf.mxu0
        %v1561 = vpop.f32.mrf.mxu0
        %1562 = vdwg.mxu0
        %1563 = vst.msk [vmem:[#allocation3] sm:$0xff] %vm1346, %v1510
        %1564 = vst.msk [vmem:[#allocation3 + $0x8] sm:$0xff] %vm1346, %v1558
        %1566 = vrot.lane.b32.xlu0 %v1339, 120
        %v1567 = vpop.permute.xlu0 %1566
        %1568 = vrot.lane.b32.xlu0 %v1341, 88
        %v1569 = vpop.permute.xlu0 %1568
        %v1571 = vsel %vm1346, %v1567, 0
        %v1574 = vsel %vm1346, %v1569, 0
        %1576 = vmatprep.subr.bf16.mxu0 0
        %1577 = vmatpush1.bf16.xpose.msra.mxu0 0
        %1578 = vmatprep.subr.bf16.mxu0 0
        %1579 = vmatpush1.bf16.xpose.msra.mxu0 0
        %1580 = vmatprep.subr.bf16.mxu0 0
        %1581 = vmatpush1.bf16.xpose.msra.mxu0 0
        %1582 = vmatprep.subr.bf16.mxu0 0
        %1583 = vmatpush1.bf16.xpose.msra.mxu0 0
        %1584 = vmatprep.subr.bf16.mxu0 0
        %1585 = vmatpush1.bf16.xpose.msra.mxu0 0
        %1586 = vmatprep.subr.bf16.mxu0 0
        %1587 = vmatpush1.bf16.xpose.msra.mxu0 0
        %1588 = vmatprep.subr.bf16.mxu0 0
        %1589 = vmatpush1.bf16.xpose.msra.mxu0 0
        %1590 = vmatprep.subr.bf16.mxu0 0
        %1591 = vmatpush1.bf16.xpose.msra.mxu0 %v1574
        %1592 = vmatprep.subr.bf16.mxu0 0
        %1593 = vmatpush2.bf16.xpose.msra.mxu0 0
        %1594 = vmatprep.subr.bf16.mxu0 0
        %1595 = vmatpush2.bf16.xpose.msra.mxu0 0
        %1596 = vmatprep.subr.bf16.mxu0 0
        %1597 = vmatpush2.bf16.xpose.msra.mxu0 0
        %1598 = vmatprep.subr.bf16.mxu0 0
        %1599 = vmatpush2.bf16.xpose.msra.mxu0 0
        %1600 = vmatprep.subr.bf16.mxu0 0
        %1601 = vmatpush2.bf16.xpose.msra.mxu0 0
        %1602 = vmatprep.subr.bf16.mxu0 0
        %1603 = vmatpush2.bf16.xpose.msra.mxu0 0
        %1604 = vmatprep.subr.bf16.mxu0 0
        %1605 = vmatpush2.bf16.xpose.msra.mxu0 0
        %1606 = vmatprep.subr.bf16.mxu0 0
        %1607 = vmatpush2.bf16.xpose.msra.mxu0 0
        %1608 = vmatprep.mubr.bf16.mxu0 0
        %1609 = vmatmul.mubr.bf16.gmra.mxu0 %v1571
        %v1610 = vpop.f32.mrf.mxu0
        %v1611 = vadd.f32 0.0, %v1610
        %v1612 = vpop.f32.mrf.mxu0
        %v1613 = vpop.f32.mrf.mxu0
        %v1614 = vpop.f32.mrf.mxu0
        %1615 = vdwg.mxu0
        %1617 = vrot.lane.b32.xlu0 %v1340, 120
        %v1618 = vpop.permute.xlu0 %1617
        %1619 = vrot.lane.b32.xlu0 %v1342, 88
        %v1620 = vpop.permute.xlu0 %1619
        %v1622 = vsel %vm1346, %v1618, 0
        %v1625 = vsel %vm1346, %v1620, 0
        %1627 = vmatprep.subr.bf16.mxu0 0
        %1628 = vmatpush1.bf16.xpose.msra.mxu0 0
        %1629 = vmatprep.subr.bf16.mxu0 0
        %1630 = vmatpush1.bf16.xpose.msra.mxu0 0
        %1631 = vmatprep.subr.bf16.mxu0 0
        %1632 = vmatpush1.bf16.xpose.msra.mxu0 0
        %1633 = vmatprep.subr.bf16.mxu0 0
        %1634 = vmatpush1.bf16.xpose.msra.mxu0 0
        %1635 = vmatprep.subr.bf16.mxu0 0
        %1636 = vmatpush1.bf16.xpose.msra.mxu0 0
        %1637 = vmatprep.subr.bf16.mxu0 0
        %1638 = vmatpush1.bf16.xpose.msra.mxu0 0
        %1639 = vmatprep.subr.bf16.mxu0 0
        %1640 = vmatpush1.bf16.xpose.msra.mxu0 0
        %1641 = vmatprep.subr.bf16.mxu0 0
        %1642 = vmatpush1.bf16.xpose.msra.mxu0 %v1625
        %1643 = vmatprep.subr.bf16.mxu0 0
        %1644 = vmatpush2.bf16.xpose.msra.mxu0 0
        %1645 = vmatprep.subr.bf16.mxu0 0
        %1646 = vmatpush2.bf16.xpose.msra.mxu0 0
        %1647 = vmatprep.subr.bf16.mxu0 0
        %1648 = vmatpush2.bf16.xpose.msra.mxu0 0
        %1649 = vmatprep.subr.bf16.mxu0 0
        %1650 = vmatpush2.bf16.xpose.msra.mxu0 0
        %1651 = vmatprep.subr.bf16.mxu0 0
        %1652 = vmatpush2.bf16.xpose.msra.mxu0 0
        %1653 = vmatprep.subr.bf16.mxu0 0
        %1654 = vmatpush2.bf16.xpose.msra.mxu0 0
        %1655 = vmatprep.subr.bf16.mxu0 0
        %1656 = vmatpush2.bf16.xpose.msra.mxu0 0
        %1657 = vmatprep.subr.bf16.mxu0 0
        %1658 = vmatpush2.bf16.xpose.msra.mxu0 0
        %1659 = vmatprep.mubr.bf16.mxu0 0
        %1660 = vmatmul.mubr.bf16.gmra.mxu0 %v1622
        %v1661 = vpop.f32.mrf.mxu0
        %v1662 = vadd.f32 0.0, %v1661
        %v1663 = vpop.f32.mrf.mxu0
        %v1664 = vpop.f32.mrf.mxu0
        %v1665 = vpop.f32.mrf.mxu0
        %1666 = vdwg.mxu0
        %v1667 = vsel %vm1346, %v1611, -inf
        %1668 = vmax.xlane.f32.xlu0 %v1667
        %v1669 = vpop.xlane.xlu0 %1668
        %v1670 = vsel %vm1346, %v1662, -inf
        %1671 = vmax.xlane.f32.xlu0 %v1670
        %v1672 = vpop.xlane.xlu0 %1671
        %v1673 = vsub.f32 %v1611, %v1669
        %v1674 = vsub.f32 %v1662, %v1672
        %v1675 = vmul.f32 %v1673, 1.442695
        %v1676 = vpow.pop %v1675
        %v1677 = vmul.f32 %v1674, 1.442695
        %v1678 = vpow.pop %v1677
        %v1679 = vsel %vm1346, %v1676, 0.0
        %1680 = vadd.xlane.f32.xlu0 %v1679
        %v1681 = vpop.xlane.xlu0 %1680
        %v1682 = vsel %vm1346, %v1678, 0.0
        %1683 = vadd.xlane.f32.xlu0 %v1682
        %v1684 = vpop.xlane.xlu0 %1683
        %v1685 = vrcp.pop %v1681
        %v1686 = vrcp.pop %v1684
        %v1687 = vmul.f32 %v1676, %v1685
        %v1688 = vmul.f32 %v1678, %v1686
        %v1689 = vadd.f32 %v1462, %v1687
        %v1690 = vadd.f32 %v1463, %v1688
        %v1691 = vpack.c.bf16 %v1687, %v1687
        %v1692 = vpack.c.bf16 %v1688, %v1688
        %1693 = vrot.lane.b32.xlu0 %v1341, 56
        %v1694 = vpop.permute.xlu0 %1693
        %v1696 = vsel %vm1346, %v1691, 0
        %v1699 = vsel %vm1471, %v1694, 0
        %1701 = vmatprep.subr.bf16.mxu0 0
        %1702 = vmatpush1.bf16.msra.mxu0 0
        %1703 = vmatprep.subr.bf16.mxu0 0
        %1704 = vmatpush1.bf16.msra.mxu0 0
        %1705 = vmatprep.subr.bf16.mxu0 0
        %1706 = vmatpush1.bf16.msra.mxu0 0
        %1707 = vmatprep.subr.bf16.mxu0 0
        %1708 = vmatpush1.bf16.msra.mxu0 0
        %1709 = vmatprep.subr.bf16.mxu0 0
        %1710 = vmatpush1.bf16.msra.mxu0 0
        %1711 = vmatprep.subr.bf16.mxu0 0
        %1712 = vmatpush1.bf16.msra.mxu0 0
        %1713 = vmatprep.subr.bf16.mxu0 0
        %1714 = vmatpush1.bf16.msra.mxu0 0
        %1715 = vmatprep.subr.bf16.mxu0 0
        %1716 = vmatpush1.bf16.msra.mxu0 %v1699
        %1717 = vmatprep.subr.bf16.mxu0 0
        %1718 = vmatpush2.bf16.msra.mxu0 0
        %1719 = vmatprep.subr.bf16.mxu0 0
        %1720 = vmatpush2.bf16.msra.mxu0 0
        %1721 = vmatprep.subr.bf16.mxu0 0
        %1722 = vmatpush2.bf16.msra.mxu0 0
        %1723 = vmatprep.subr.bf16.mxu0 0
        %1724 = vmatpush2.bf16.msra.mxu0 0
        %1725 = vmatprep.subr.bf16.mxu0 0
        %1726 = vmatpush2.bf16.msra.mxu0 0
        %1727 = vmatprep.subr.bf16.mxu0 0
        %1728 = vmatpush2.bf16.msra.mxu0 0
        %1729 = vmatprep.subr.bf16.mxu0 0
        %1730 = vmatpush2.bf16.msra.mxu0 0
        %1731 = vmatprep.subr.bf16.mxu0 0
        %1732 = vmatpush2.bf16.msra.mxu0 0
        %1733 = vmatprep.mubr.bf16.mxu0 0
        %1734 = vmatmul.mubr.bf16.gmra.mxu0 %v1696
        %v1735 = vpop.f32.mrf.mxu0
        %v1736 = vadd.f32 0.0, %v1735
        %v1737 = vpop.f32.mrf.mxu0
        %v1738 = vpop.f32.mrf.mxu0
        %v1739 = vpop.f32.mrf.mxu0
        %1740 = vdwg.mxu0
        %1741 = vrot.lane.b32.xlu0 %v1342, 56
        %v1742 = vpop.permute.xlu0 %1741
        %v1744 = vsel %vm1346, %v1692, 0
        %v1747 = vsel %vm1471, %v1742, 0
        %1749 = vmatprep.subr.bf16.mxu0 0
        %1750 = vmatpush1.bf16.msra.mxu0 0
        %1751 = vmatprep.subr.bf16.mxu0 0
        %1752 = vmatpush1.bf16.msra.mxu0 0
        %1753 = vmatprep.subr.bf16.mxu0 0
        %1754 = vmatpush1.bf16.msra.mxu0 0
        %1755 = vmatprep.subr.bf16.mxu0 0
        %1756 = vmatpush1.bf16.msra.mxu0 0
        %1757 = vmatprep.subr.bf16.mxu0 0
        %1758 = vmatpush1.bf16.msra.mxu0 0
        %1759 = vmatprep.subr.bf16.mxu0 0
        %1760 = vmatpush1.bf16.msra.mxu0 0
        %1761 = vmatprep.subr.bf16.mxu0 0
        %1762 = vmatpush1.bf16.msra.mxu0 0
        %1763 = vmatprep.subr.bf16.mxu0 0
        %1764 = vmatpush1.bf16.msra.mxu0 %v1747
        %1765 = vmatprep.subr.bf16.mxu0 0
        %1766 = vmatpush2.bf16.msra.mxu0 0
        %1767 = vmatprep.subr.bf16.mxu0 0
        %1768 = vmatpush2.bf16.msra.mxu0 0
        %1769 = vmatprep.subr.bf16.mxu0 0
        %1770 = vmatpush2.bf16.msra.mxu0 0
        %1771 = vmatprep.subr.bf16.mxu0 0
        %1772 = vmatpush2.bf16.msra.mxu0 0
        %1773 = vmatprep.subr.bf16.mxu0 0
        %1774 = vmatpush2.bf16.msra.mxu0 0
        %1775 = vmatprep.subr.bf16.mxu0 0
        %1776 = vmatpush2.bf16.msra.mxu0 0
        %1777 = vmatprep.subr.bf16.mxu0 0
        %1778 = vmatpush2.bf16.msra.mxu0 0
        %1779 = vmatprep.subr.bf16.mxu0 0
        %1780 = vmatpush2.bf16.msra.mxu0 0
        %1781 = vmatprep.mubr.bf16.mxu0 0
        %1782 = vmatmul.mubr.bf16.gmra.mxu0 %v1744
        %v1783 = vpop.f32.mrf.mxu0
        %v1784 = vadd.f32 0.0, %v1783
        %v1785 = vpop.f32.mrf.mxu0
        %v1786 = vpop.f32.mrf.mxu0
        %v1787 = vpop.f32.mrf.mxu0
        %1788 = vdwg.mxu0
        %1791 = vrot.lane.b32.xlu0 %v1736, 8
        %v1792 = vpop.permute.xlu0 %1791
        %1793 = vrot.lane.b32.xlu0 %v1784, 8
        %v1794 = vpop.permute.xlu0 %1793
        %vm1797 = vcmask 130112
        %1798 = vst.msk [vmem:[#allocation3] sm:$0xff] %vm1797, %v1792
        %1799 = vst.msk [vmem:[#allocation3 + $0x8] sm:$0xff] %vm1797, %v1794
        %1800 = vrot.lane.b32.xlu0 %v1339, 112
        %v1801 = vpop.permute.xlu0 %1800
        %1802 = vrot.lane.b32.xlu0 %v1341, 80
        %v1803 = vpop.permute.xlu0 %1802
        %v1805 = vsel %vm1346, %v1801, 0
        %v1808 = vsel %vm1346, %v1803, 0
        %1810 = vmatprep.subr.bf16.mxu0 0
        %1811 = vmatpush1.bf16.xpose.msra.mxu0 0
        %1812 = vmatprep.subr.bf16.mxu0 0
        %1813 = vmatpush1.bf16.xpose.msra.mxu0 0
        %1814 = vmatprep.subr.bf16.mxu0 0
        %1815 = vmatpush1.bf16.xpose.msra.mxu0 0
        %1816 = vmatprep.subr.bf16.mxu0 0
        %1817 = vmatpush1.bf16.xpose.msra.mxu0 0
        %1818 = vmatprep.subr.bf16.mxu0 0
        %1819 = vmatpush1.bf16.xpose.msra.mxu0 0
        %1820 = vmatprep.subr.bf16.mxu0 0
        %1821 = vmatpush1.bf16.xpose.msra.mxu0 0
        %1822 = vmatprep.subr.bf16.mxu0 0
        %1823 = vmatpush1.bf16.xpose.msra.mxu0 0
        %1824 = vmatprep.subr.bf16.mxu0 0
        %1825 = vmatpush1.bf16.xpose.msra.mxu0 %v1808
        %1826 = vmatprep.subr.bf16.mxu0 0
        %1827 = vmatpush2.bf16.xpose.msra.mxu0 0
        %1828 = vmatprep.subr.bf16.mxu0 0
        %1829 = vmatpush2.bf16.xpose.msra.mxu0 0
        %1830 = vmatprep.subr.bf16.mxu0 0
        %1831 = vmatpush2.bf16.xpose.msra.mxu0 0
        %1832 = vmatprep.subr.bf16.mxu0 0
        %1833 = vmatpush2.bf16.xpose.msra.mxu0 0
        %1834 = vmatprep.subr.bf16.mxu0 0
        %1835 = vmatpush2.bf16.xpose.msra.mxu0 0
        %1836 = vmatprep.subr.bf16.mxu0 0
        %1837 = vmatpush2.bf16.xpose.msra.mxu0 0
        %1838 = vmatprep.subr.bf16.mxu0 0
        %1839 = vmatpush2.bf16.xpose.msra.mxu0 0
        %1840 = vmatprep.subr.bf16.mxu0 0
        %1841 = vmatpush2.bf16.xpose.msra.mxu0 0
        %1842 = vmatprep.mubr.bf16.mxu0 0
        %1843 = vmatmul.mubr.bf16.gmra.mxu0 %v1805
        %v1844 = vpop.f32.mrf.mxu0
        %v1845 = vadd.f32 0.0, %v1844
        %v1846 = vpop.f32.mrf.mxu0
        %v1847 = vpop.f32.mrf.mxu0
        %v1848 = vpop.f32.mrf.mxu0
        %1849 = vdwg.mxu0
        %1850 = vrot.lane.b32.xlu0 %v1340, 112
        %v1851 = vpop.permute.xlu0 %1850
        %1852 = vrot.lane.b32.xlu0 %v1342, 80
        %v1853 = vpop.permute.xlu0 %1852
        %v1855 = vsel %vm1346, %v1851, 0
        %v1858 = vsel %vm1346, %v1853, 0
        %1860 = vmatprep.subr.bf16.mxu0 0
        %1861 = vmatpush1.bf16.xpose.msra.mxu0 0
        %1862 = vmatprep.subr.bf16.mxu0 0
        %1863 = vmatpush1.bf16.xpose.msra.mxu0 0
        %1864 = vmatprep.subr.bf16.mxu0 0
        %1865 = vmatpush1.bf16.xpose.msra.mxu0 0
        %1866 = vmatprep.subr.bf16.mxu0 0
        %1867 = vmatpush1.bf16.xpose.msra.mxu0 0
        %1868 = vmatprep.subr.bf16.mxu0 0
        %1869 = vmatpush1.bf16.xpose.msra.mxu0 0
        %1870 = vmatprep.subr.bf16.mxu0 0
        %1871 = vmatpush1.bf16.xpose.msra.mxu0 0
        %1872 = vmatprep.subr.bf16.mxu0 0
        %1873 = vmatpush1.bf16.xpose.msra.mxu0 0
        %1874 = vmatprep.subr.bf16.mxu0 0
        %1875 = vmatpush1.bf16.xpose.msra.mxu0 %v1858
        %1876 = vmatprep.subr.bf16.mxu0 0
        %1877 = vmatpush2.bf16.xpose.msra.mxu0 0
        %1878 = vmatprep.subr.bf16.mxu0 0
        %1879 = vmatpush2.bf16.xpose.msra.mxu0 0
        %1880 = vmatprep.subr.bf16.mxu0 0
        %1881 = vmatpush2.bf16.xpose.msra.mxu0 0
        %1882 = vmatprep.subr.bf16.mxu0 0
        %1883 = vmatpush2.bf16.xpose.msra.mxu0 0
        %1884 = vmatprep.subr.bf16.mxu0 0
        %1885 = vmatpush2.bf16.xpose.msra.mxu0 0
        %1886 = vmatprep.subr.bf16.mxu0 0
        %1887 = vmatpush2.bf16.xpose.msra.mxu0 0
        %1888 = vmatprep.subr.bf16.mxu0 0
        %1889 = vmatpush2.bf16.xpose.msra.mxu0 0
        %1890 = vmatprep.subr.bf16.mxu0 0
        %1891 = vmatpush2.bf16.xpose.msra.mxu0 0
        %1892 = vmatprep.mubr.bf16.mxu0 0
        %1893 = vmatmul.mubr.bf16.gmra.mxu0 %v1855
        %v1894 = vpop.f32.mrf.mxu0
        %v1895 = vadd.f32 0.0, %v1894
        %v1896 = vpop.f32.mrf.mxu0
        %v1897 = vpop.f32.mrf.mxu0
        %v1898 = vpop.f32.mrf.mxu0
        %1899 = vdwg.mxu0
        %v1900 = vsel %vm1346, %v1845, -inf
        %1901 = vmax.xlane.f32.xlu0 %v1900
        %v1902 = vpop.xlane.xlu0 %1901
        %v1903 = vsel %vm1346, %v1895, -inf
        %1904 = vmax.xlane.f32.xlu0 %v1903
        %v1905 = vpop.xlane.xlu0 %1904
        %v1906 = vsub.f32 %v1845, %v1902
        %v1907 = vsub.f32 %v1895, %v1905
        %v1908 = vmul.f32 %v1906, 1.442695
        %v1909 = vpow.pop %v1908
        %v1910 = vmul.f32 %v1907, 1.442695
        %v1911 = vpow.pop %v1910
        %v1912 = vsel %vm1346, %v1909, 0.0
        %1913 = vadd.xlane.f32.xlu0 %v1912
        %v1914 = vpop.xlane.xlu0 %1913
        %v1915 = vsel %vm1346, %v1911, 0.0
        %1916 = vadd.xlane.f32.xlu0 %v1915
        %v1917 = vpop.xlane.xlu0 %1916
        %v1918 = vrcp.pop %v1914
        %v1919 = vrcp.pop %v1917
        %v1920 = vmul.f32 %v1909, %v1918
        %v1921 = vmul.f32 %v1911, %v1919
        %v1922 = vadd.f32 %v1689, %v1920
        %v1923 = vadd.f32 %v1690, %v1921
        %v1924 = vpack.c.bf16 %v1920, %v1920
        %v1925 = vpack.c.bf16 %v1921, %v1921
        %1926 = vrot.lane.b32.xlu0 %v1341, 48
        %v1927 = vpop.permute.xlu0 %1926
        %v1929 = vsel %vm1346, %v1924, 0
        %v1932 = vsel %vm1471, %v1927, 0
        %1934 = vmatprep.subr.bf16.mxu0 0
        %1935 = vmatpush1.bf16.msra.mxu0 0
        %1936 = vmatprep.subr.bf16.mxu0 0
        %1937 = vmatpush1.bf16.msra.mxu0 0
        %1938 = vmatprep.subr.bf16.mxu0 0
        %1939 = vmatpush1.bf16.msra.mxu0 0
        %1940 = vmatprep.subr.bf16.mxu0 0
        %1941 = vmatpush1.bf16.msra.mxu0 0
        %1942 = vmatprep.subr.bf16.mxu0 0
        %1943 = vmatpush1.bf16.msra.mxu0 0
        %1944 = vmatprep.subr.bf16.mxu0 0
        %1945 = vmatpush1.bf16.msra.mxu0 0
        %1946 = vmatprep.subr.bf16.mxu0 0
        %1947 = vmatpush1.bf16.msra.mxu0 0
        %1948 = vmatprep.subr.bf16.mxu0 0
        %1949 = vmatpush1.bf16.msra.mxu0 %v1932
        %1950 = vmatprep.subr.bf16.mxu0 0
        %1951 = vmatpush2.bf16.msra.mxu0 0
        %1952 = vmatprep.subr.bf16.mxu0 0
        %1953 = vmatpush2.bf16.msra.mxu0 0
        %1954 = vmatprep.subr.bf16.mxu0 0
        %1955 = vmatpush2.bf16.msra.mxu0 0
        %1956 = vmatprep.subr.bf16.mxu0 0
        %1957 = vmatpush2.bf16.msra.mxu0 0
        %1958 = vmatprep.subr.bf16.mxu0 0
        %1959 = vmatpush2.bf16.msra.mxu0 0
        %1960 = vmatprep.subr.bf16.mxu0 0
        %1961 = vmatpush2.bf16.msra.mxu0 0
        %1962 = vmatprep.subr.bf16.mxu0 0
        %1963 = vmatpush2.bf16.msra.mxu0 0
        %1964 = vmatprep.subr.bf16.mxu0 0
        %1965 = vmatpush2.bf16.msra.mxu0 0
        %1966 = vmatprep.mubr.bf16.mxu0 0
        %1967 = vmatmul.mubr.bf16.gmra.mxu0 %v1929
        %v1968 = vpop.f32.mrf.mxu0
        %v1969 = vadd.f32 0.0, %v1968
        %v1970 = vpop.f32.mrf.mxu0
        %v1971 = vpop.f32.mrf.mxu0
        %v1972 = vpop.f32.mrf.mxu0
        %1973 = vdwg.mxu0
        %1974 = vrot.lane.b32.xlu0 %v1342, 48
        %v1975 = vpop.permute.xlu0 %1974
        %v1977 = vsel %vm1346, %v1925, 0
        %v1980 = vsel %vm1471, %v1975, 0
        %1982 = vmatprep.subr.bf16.mxu0 0
        %1983 = vmatpush1.bf16.msra.mxu0 0
        %1984 = vmatprep.subr.bf16.mxu0 0
        %1985 = vmatpush1.bf16.msra.mxu0 0
        %1986 = vmatprep.subr.bf16.mxu0 0
        %1987 = vmatpush1.bf16.msra.mxu0 0
        %1988 = vmatprep.subr.bf16.mxu0 0
        %1989 = vmatpush1.bf16.msra.mxu0 0
        %1990 = vmatprep.subr.bf16.mxu0 0
        %1991 = vmatpush1.bf16.msra.mxu0 0
        %1992 = vmatprep.subr.bf16.mxu0 0
        %1993 = vmatpush1.bf16.msra.mxu0 0
        %1994 = vmatprep.subr.bf16.mxu0 0
        %1995 = vmatpush1.bf16.msra.mxu0 0
        %1996 = vmatprep.subr.bf16.mxu0 0
        %1997 = vmatpush1.bf16.msra.mxu0 %v1980
        %1998 = vmatprep.subr.bf16.mxu0 0
        %1999 = vmatpush2.bf16.msra.mxu0 0
        %2000 = vmatprep.subr.bf16.mxu0 0
        %2001 = vmatpush2.bf16.msra.mxu0 0
        %2002 = vmatprep.subr.bf16.mxu0 0
        %2003 = vmatpush2.bf16.msra.mxu0 0
        %2004 = vmatprep.subr.bf16.mxu0 0
        %2005 = vmatpush2.bf16.msra.mxu0 0
        %2006 = vmatprep.subr.bf16.mxu0 0
        %2007 = vmatpush2.bf16.msra.mxu0 0
        %2008 = vmatprep.subr.bf16.mxu0 0
        %2009 = vmatpush2.bf16.msra.mxu0 0
        %2010 = vmatprep.subr.bf16.mxu0 0
        %2011 = vmatpush2.bf16.msra.mxu0 0
        %2012 = vmatprep.subr.bf16.mxu0 0
        %2013 = vmatpush2.bf16.msra.mxu0 0
        %2014 = vmatprep.mubr.bf16.mxu0 0
        %2015 = vmatmul.mubr.bf16.gmra.mxu0 %v1977
        %v2016 = vpop.f32.mrf.mxu0
        %v2017 = vadd.f32 0.0, %v2016
        %v2018 = vpop.f32.mrf.mxu0
        %v2019 = vpop.f32.mrf.mxu0
        %v2020 = vpop.f32.mrf.mxu0
        %2021 = vdwg.mxu0
        %2024 = vrot.lane.b32.xlu0 %v1969, 16
        %v2025 = vpop.permute.xlu0 %2024
        %2026 = vrot.lane.b32.xlu0 %v2017, 16
        %v2027 = vpop.permute.xlu0 %2026
        %vm2030 = vcmask 195712
        %2031 = vst.msk [vmem:[#allocation3] sm:$0xff] %vm2030, %v2025
        %2032 = vst.msk [vmem:[#allocation3 + $0x8] sm:$0xff] %vm2030, %v2027
        %2033 = vrot.lane.b32.xlu0 %v1339, 104
        %v2034 = vpop.permute.xlu0 %2033
        %2035 = vrot.lane.b32.xlu0 %v1341, 72
        %v2036 = vpop.permute.xlu0 %2035
        %v2038 = vsel %vm1346, %v2034, 0
        %v2041 = vsel %vm1346, %v2036, 0
        %2043 = vmatprep.subr.bf16.mxu0 0
        %2044 = vmatpush1.bf16.xpose.msra.mxu0 0
        %2045 = vmatprep.subr.bf16.mxu0 0
        %2046 = vmatpush1.bf16.xpose.msra.mxu0 0
        %2047 = vmatprep.subr.bf16.mxu0 0
        %2048 = vmatpush1.bf16.xpose.msra.mxu0 0
        %2049 = vmatprep.subr.bf16.mxu0 0
        %2050 = vmatpush1.bf16.xpose.msra.mxu0 0
        %2051 = vmatprep.subr.bf16.mxu0 0
        %2052 = vmatpush1.bf16.xpose.msra.mxu0 0
        %2053 = vmatprep.subr.bf16.mxu0 0
        %2054 = vmatpush1.bf16.xpose.msra.mxu0 0
        %2055 = vmatprep.subr.bf16.mxu0 0
        %2056 = vmatpush1.bf16.xpose.msra.mxu0 0
        %2057 = vmatprep.subr.bf16.mxu0 0
        %2058 = vmatpush1.bf16.xpose.msra.mxu0 %v2041
        %2059 = vmatprep.subr.bf16.mxu0 0
        %2060 = vmatpush2.bf16.xpose.msra.mxu0 0
        %2061 = vmatprep.subr.bf16.mxu0 0
        %2062 = vmatpush2.bf16.xpose.msra.mxu0 0
        %2063 = vmatprep.subr.bf16.mxu0 0
        %2064 = vmatpush2.bf16.xpose.msra.mxu0 0
        %2065 = vmatprep.subr.bf16.mxu0 0
        %2066 = vmatpush2.bf16.xpose.msra.mxu0 0
        %2067 = vmatprep.subr.bf16.mxu0 0
        %2068 = vmatpush2.bf16.xpose.msra.mxu0 0
        %2069 = vmatprep.subr.bf16.mxu0 0
        %2070 = vmatpush2.bf16.xpose.msra.mxu0 0
        %2071 = vmatprep.subr.bf16.mxu0 0
        %2072 = vmatpush2.bf16.xpose.msra.mxu0 0
        %2073 = vmatprep.subr.bf16.mxu0 0
        %2074 = vmatpush2.bf16.xpose.msra.mxu0 0
        %2075 = vmatprep.mubr.bf16.mxu0 0
        %2076 = vmatmul.mubr.bf16.gmra.mxu0 %v2038
        %v2077 = vpop.f32.mrf.mxu0
        %v2078 = vadd.f32 0.0, %v2077
        %v2079 = vpop.f32.mrf.mxu0
        %v2080 = vpop.f32.mrf.mxu0
        %v2081 = vpop.f32.mrf.mxu0
        %2082 = vdwg.mxu0
        %2083 = vrot.lane.b32.xlu0 %v1340, 104
        %v2084 = vpop.permute.xlu0 %2083
        %2085 = vrot.lane.b32.xlu0 %v1342, 72
        %v2086 = vpop.permute.xlu0 %2085
        %v2088 = vsel %vm1346, %v2084, 0
        %v2091 = vsel %vm1346, %v2086, 0
        %2093 = vmatprep.subr.bf16.mxu0 0
        %2094 = vmatpush1.bf16.xpose.msra.mxu0 0
        %2095 = vmatprep.subr.bf16.mxu0 0
        %2096 = vmatpush1.bf16.xpose.msra.mxu0 0
        %2097 = vmatprep.subr.bf16.mxu0 0
        %2098 = vmatpush1.bf16.xpose.msra.mxu0 0
        %2099 = vmatprep.subr.bf16.mxu0 0
        %2100 = vmatpush1.bf16.xpose.msra.mxu0 0
        %2101 = vmatprep.subr.bf16.mxu0 0
        %2102 = vmatpush1.bf16.xpose.msra.mxu0 0
        %2103 = vmatprep.subr.bf16.mxu0 0
        %2104 = vmatpush1.bf16.xpose.msra.mxu0 0
        %2105 = vmatprep.subr.bf16.mxu0 0
        %2106 = vmatpush1.bf16.xpose.msra.mxu0 0
        %2107 = vmatprep.subr.bf16.mxu0 0
        %2108 = vmatpush1.bf16.xpose.msra.mxu0 %v2091
        %2109 = vmatprep.subr.bf16.mxu0 0
        %2110 = vmatpush2.bf16.xpose.msra.mxu0 0
        %2111 = vmatprep.subr.bf16.mxu0 0
        %2112 = vmatpush2.bf16.xpose.msra.mxu0 0
        %2113 = vmatprep.subr.bf16.mxu0 0
        %2114 = vmatpush2.bf16.xpose.msra.mxu0 0
        %2115 = vmatprep.subr.bf16.mxu0 0
        %2116 = vmatpush2.bf16.xpose.msra.mxu0 0
        %2117 = vmatprep.subr.bf16.mxu0 0
        %2118 = vmatpush2.bf16.xpose.msra.mxu0 0
        %2119 = vmatprep.subr.bf16.mxu0 0
        %2120 = vmatpush2.bf16.xpose.msra.mxu0 0
        %2121 = vmatprep.subr.bf16.mxu0 0
        %2122 = vmatpush2.bf16.xpose.msra.mxu0 0
        %2123 = vmatprep.subr.bf16.mxu0 0
        %2124 = vmatpush2.bf16.xpose.msra.mxu0 0
        %2125 = vmatprep.mubr.bf16.mxu0 0
        %2126 = vmatmul.mubr.bf16.gmra.mxu0 %v2088
        %v2127 = vpop.f32.mrf.mxu0
        %v2128 = vadd.f32 0.0, %v2127
        %v2129 = vpop.f32.mrf.mxu0
        %v2130 = vpop.f32.mrf.mxu0
        %v2131 = vpop.f32.mrf.mxu0
        %2132 = vdwg.mxu0
        %v2133 = vsel %vm1346, %v2078, -inf
        %2134 = vmax.xlane.f32.xlu0 %v2133
        %v2135 = vpop.xlane.xlu0 %2134
        %v2136 = vsel %vm1346, %v2128, -inf
        %2137 = vmax.xlane.f32.xlu0 %v2136
        %v2138 = vpop.xlane.xlu0 %2137
        %v2139 = vsub.f32 %v2078, %v2135
        %v2140 = vsub.f32 %v2128, %v2138
        %v2141 = vmul.f32 %v2139, 1.442695
        %v2142 = vpow.pop %v2141
        %v2143 = vmul.f32 %v2140, 1.442695
        %v2144 = vpow.pop %v2143
        %v2145 = vsel %vm1346, %v2142, 0.0
        %2146 = vadd.xlane.f32.xlu0 %v2145
        %v2147 = vpop.xlane.xlu0 %2146
        %v2148 = vsel %vm1346, %v2144, 0.0
        %2149 = vadd.xlane.f32.xlu0 %v2148
        %v2150 = vpop.xlane.xlu0 %2149
        %v2151 = vrcp.pop %v2147
        %v2152 = vrcp.pop %v2150
        %v2153 = vmul.f32 %v2142, %v2151
        %v2154 = vmul.f32 %v2144, %v2152
        %v2155 = vadd.f32 %v1922, %v2153
        %v2156 = vadd.f32 %v1923, %v2154
        %v2157 = vpack.c.bf16 %v2153, %v2153
        %v2158 = vpack.c.bf16 %v2154, %v2154
        %2159 = vrot.lane.b32.xlu0 %v1341, 40
        %v2160 = vpop.permute.xlu0 %2159
        %v2162 = vsel %vm1346, %v2157, 0
        %v2165 = vsel %vm1471, %v2160, 0
        %2167 = vmatprep.subr.bf16.mxu0 0
        %2168 = vmatpush1.bf16.msra.mxu0 0
        %2169 = vmatprep.subr.bf16.mxu0 0
        %2170 = vmatpush1.bf16.msra.mxu0 0
        %2171 = vmatprep.subr.bf16.mxu0 0
        %2172 = vmatpush1.bf16.msra.mxu0 0
        %2173 = vmatprep.subr.bf16.mxu0 0
        %2174 = vmatpush1.bf16.msra.mxu0 0
        %2175 = vmatprep.subr.bf16.mxu0 0
        %2176 = vmatpush1.bf16.msra.mxu0 0
        %2177 = vmatprep.subr.bf16.mxu0 0
        %2178 = vmatpush1.bf16.msra.mxu0 0
        %2179 = vmatprep.subr.bf16.mxu0 0
        %2180 = vmatpush1.bf16.msra.mxu0 0
        %2181 = vmatprep.subr.bf16.mxu0 0
        %2182 = vmatpush1.bf16.msra.mxu0 %v2165
        %2183 = vmatprep.subr.bf16.mxu0 0
        %2184 = vmatpush2.bf16.msra.mxu0 0
        %2185 = vmatprep.subr.bf16.mxu0 0
        %2186 = vmatpush2.bf16.msra.mxu0 0
        %2187 = vmatprep.subr.bf16.mxu0 0
        %2188 = vmatpush2.bf16.msra.mxu0 0
        %2189 = vmatprep.subr.bf16.mxu0 0
        %2190 = vmatpush2.bf16.msra.mxu0 0
        %2191 = vmatprep.subr.bf16.mxu0 0
        %2192 = vmatpush2.bf16.msra.mxu0 0
        %2193 = vmatprep.subr.bf16.mxu0 0
        %2194 = vmatpush2.bf16.msra.mxu0 0
        %2195 = vmatprep.subr.bf16.mxu0 0
        %2196 = vmatpush2.bf16.msra.mxu0 0
        %2197 = vmatprep.subr.bf16.mxu0 0
        %2198 = vmatpush2.bf16.msra.mxu0 0
        %2199 = vmatprep.mubr.bf16.mxu0 0
        %2200 = vmatmul.mubr.bf16.gmra.mxu0 %v2162
        %v2201 = vpop.f32.mrf.mxu0
        %v2202 = vadd.f32 0.0, %v2201
        %v2203 = vpop.f32.mrf.mxu0
        %v2204 = vpop.f32.mrf.mxu0
        %v2205 = vpop.f32.mrf.mxu0
        %2206 = vdwg.mxu0
        %2207 = vrot.lane.b32.xlu0 %v1342, 40
        %v2208 = vpop.permute.xlu0 %2207
        %v2210 = vsel %vm1346, %v2158, 0
        %v2213 = vsel %vm1471, %v2208, 0
        %2215 = vmatprep.subr.bf16.mxu0 0
        %2216 = vmatpush1.bf16.msra.mxu0 0
        %2217 = vmatprep.subr.bf16.mxu0 0
        %2218 = vmatpush1.bf16.msra.mxu0 0
        %2219 = vmatprep.subr.bf16.mxu0 0
        %2220 = vmatpush1.bf16.msra.mxu0 0
        %2221 = vmatprep.subr.bf16.mxu0 0
        %2222 = vmatpush1.bf16.msra.mxu0 0
        %2223 = vmatprep.subr.bf16.mxu0 0
        %2224 = vmatpush1.bf16.msra.mxu0 0
        %2225 = vmatprep.subr.bf16.mxu0 0
        %2226 = vmatpush1.bf16.msra.mxu0 0
        %2227 = vmatprep.subr.bf16.mxu0 0
        %2228 = vmatpush1.bf16.msra.mxu0 0
        %2229 = vmatprep.subr.bf16.mxu0 0
        %2230 = vmatpush1.bf16.msra.mxu0 %v2213
        %2231 = vmatprep.subr.bf16.mxu0 0
        %2232 = vmatpush2.bf16.msra.mxu0 0
        %2233 = vmatprep.subr.bf16.mxu0 0
        %2234 = vmatpush2.bf16.msra.mxu0 0
        %2235 = vmatprep.subr.bf16.mxu0 0
        %2236 = vmatpush2.bf16.msra.mxu0 0
        %2237 = vmatprep.subr.bf16.mxu0 0
        %2238 = vmatpush2.bf16.msra.mxu0 0
        %2239 = vmatprep.subr.bf16.mxu0 0
        %2240 = vmatpush2.bf16.msra.mxu0 0
        %2241 = vmatprep.subr.bf16.mxu0 0
        %2242 = vmatpush2.bf16.msra.mxu0 0
        %2243 = vmatprep.subr.bf16.mxu0 0
        %2244 = vmatpush2.bf16.msra.mxu0 0
        %2245 = vmatprep.subr.bf16.mxu0 0
        %2246 = vmatpush2.bf16.msra.mxu0 0
        %2247 = vmatprep.mubr.bf16.mxu0 0
        %2248 = vmatmul.mubr.bf16.gmra.mxu0 %v2210
        %v2249 = vpop.f32.mrf.mxu0
        %v2250 = vadd.f32 0.0, %v2249
        %v2251 = vpop.f32.mrf.mxu0
        %v2252 = vpop.f32.mrf.mxu0
        %v2253 = vpop.f32.mrf.mxu0
        %2254 = vdwg.mxu0
        %2257 = vrot.lane.b32.xlu0 %v2202, 24
        %v2258 = vpop.permute.xlu0 %2257
        %2259 = vrot.lane.b32.xlu0 %v2250, 24
        %v2260 = vpop.permute.xlu0 %2259
        %vm2263 = vcmask 261312
        %2264 = vst.msk [vmem:[#allocation3] sm:$0xff] %vm2263, %v2258
        %2265 = vst.msk [vmem:[#allocation3 + $0x8] sm:$0xff] %vm2263, %v2260
        %v2266 = vld [vmem:[#allocation3] sm:$0xff]
        %v2267 = vld [vmem:[#allocation3 + $0x8] sm:$0xff]
        %v2268 = vpack.c.bf16 %v2267, %v2266
        %v2270 = vlaneseq
        %v2271 = vshrl.u32 %v2270, 7
        %v2272 = vsub.s32 0, %v2271
        %v2273 = vrot.slane %v1338, %v2272
        %v2279 = vunpack.c.l.b16 %v1334
        %v2280 = vunpack.c.l.b16 %v1335
        %v2281 = vunpack.c.l.b16 %v1336
        %v2282 = vunpack.c.l.b16 %v1337
        %v2283 = vpack.c.b16 %v2280, %v2279
        %v2284 = vpack.c.b16 %v2282, %v2281
        %v2288 = vsel %vm1287, %v2268, 0
        %2290 = vmatprep.subr.bf16.mxu0 0
        %2291 = vmatpush1.bf16.msra.mxu0 0
        %2292 = vmatprep.subr.bf16.mxu0 0
        %2293 = vmatpush1.bf16.msra.mxu0 0
        %2294 = vmatprep.subr.bf16.mxu0 0
        %2295 = vmatpush1.bf16.msra.mxu0 0
        %2296 = vmatprep.subr.bf16.mxu0 0
        %2297 = vmatpush1.bf16.msra.mxu0 0
        %2298 = vmatprep.subr.bf16.mxu0 0
        %2299 = vmatpush1.bf16.msra.mxu0 0
        %2300 = vmatprep.subr.bf16.mxu0 0
        %2301 = vmatpush1.bf16.msra.mxu0 0
        %2302 = vmatprep.subr.bf16.mxu0 0
        %2303 = vmatpush1.bf16.msra.mxu0 %v2284
        %2304 = vmatprep.subr.bf16.mxu0 0
        %2305 = vmatpush1.bf16.msra.mxu0 %v2283
        %2306 = vmatprep.subr.bf16.mxu0 0
        %2307 = vmatpush2.bf16.msra.mxu0 0
        %2308 = vmatprep.subr.bf16.mxu0 0
        %2309 = vmatpush2.bf16.msra.mxu0 0
        %2310 = vmatprep.subr.bf16.mxu0 0
        %2311 = vmatpush2.bf16.msra.mxu0 0
        %2312 = vmatprep.subr.bf16.mxu0 0
        %2313 = vmatpush2.bf16.msra.mxu0 0
        %2314 = vmatprep.subr.bf16.mxu0 0
        %2315 = vmatpush2.bf16.msra.mxu0 0
        %2316 = vmatprep.subr.bf16.mxu0 0
        %2317 = vmatpush2.bf16.msra.mxu0 0
        %2318 = vmatprep.subr.bf16.mxu0 0
        %2319 = vmatpush2.bf16.msra.mxu0 0
        %2320 = vmatprep.subr.bf16.mxu0 0
        %2321 = vmatpush2.bf16.msra.mxu0 0
        %2322 = vmatprep.mubr.bf16.mxu0 0
        %2323 = vmatmul.mubr.bf16.gmra.mxu0 %v2288
        %v2324 = vpop.f32.mrf.mxu0
        %v2325 = vadd.f32 %v2273, %v2324
        %v2326 = vpop.f32.mrf.mxu0
        %v2327 = vpop.f32.mrf.mxu0
        %v2328 = vadd.f32 %v2273, %v2327
        %v2329 = vpop.f32.mrf.mxu0
        %2330 = vdwg.mxu0
        %v2331 = vmul.f32 %v2155, 0.25
        %v2332 = vmul.f32 %v2156, 0.25
        %v2333 = vadd.f32 %v1255, %v2325
        %v2334 = vadd.f32 %v1256, %v2328
        %v2335 = vld [vmem:[%s1226] sm:$0x1]
        %v2336 = vld [vmem:[%s1229] sm:$0x1]
        %v2337 = vsel %vm1287, %v2333, 0.0
        %2338 = vadd.xlane.f32.xlu0 %v2337
        %v2339 = vpop.xlane.xlu0 %2338
        %v2340 = vsel %vm1287, %v2334, 0.0
        %2341 = vadd.xlane.f32.xlu0 %v2340
        %v2342 = vpop.xlane.xlu0 %2341
        %v2343 = vrcp.pop 32.0
        %v2344 = vmul.f32 %v2339, %v2343
        %v2345 = vmul.f32 %v2342, %v2343
        %v2346 = vsub.f32 %v2333, %v2344
        %v2347 = vsub.f32 %v2334, %v2345
        %v2348 = vmul.f32 %v2346, %v2346
        %v2349 = vmul.f32 %v2347, %v2347
        %v2350 = vsel %vm1287, %v2348, 0.0
        %2351 = vadd.xlane.f32.xlu0 %v2350
        %v2352 = vpop.xlane.xlu0 %2351
        %v2353 = vsel %vm1287, %v2349, 0.0
        %2354 = vadd.xlane.f32.xlu0 %v2353
        %v2355 = vpop.xlane.xlu0 %2354
        %v2356 = vmul.f32 %v2352, %v2343
        %v2357 = vmul.f32 %v2355, %v2343
        %v2358 = vadd.f32 %v2356, 1e-06
        %v2359 = vadd.f32 %v2357, 1e-06
        %v2360 = vrsqrt.pop %v2358
        %v2361 = vrsqrt.pop %v2359
        %v2362 = vmul.f32 %v2346, %v2360
        %v2363 = vmul.f32 %v2347, %v2361
        %v2365 = vlaneseq
        %v2366 = vshrl.u32 %v2365, 7
        %v2367 = vsub.s32 0, %v2366
        %v2368 = vrot.slane %v2335, %v2367
        %v2370 = vmul.f32 %v2362, %v2368
        %v2371 = vmul.f32 %v2363, %v2368
        %v2373 = vlaneseq
        %v2374 = vshrl.u32 %v2373, 7
        %v2375 = vsub.s32 0, %v2374
        %v2376 = vrot.slane %v2336, %v2375
        %v2378 = vadd.f32 %v2370, %v2376
        %v2379 = vadd.f32 %v2371, %v2376
        %v2380 = vpack.c.bf16 %v2379, %v2378
        %v2381 = vld [vmem:[%s1004] sm:$0xf]
        %v2382 = vld [vmem:[%s1004 + $0x4] sm:$0xf]
        %v2383 = vld [vmem:[%s1004 + $0x8] sm:$0xf]
        %v2384 = vld [vmem:[%s1004 + $0xc] sm:$0xf]
        %v2385 = vld [vmem:[%s1206] sm:$0x1]
        %v2387 = vlaneseq
        %v2388 = vshrl.u32 %v2387, 7
        %v2389 = vsub.s32 0, %v2388
        %v2390 = vrot.slane %v2385, %v2389
        %v2396 = vunpack.c.l.b16 %v2381
        %v2397 = vunpack.c.l.b16 %v2382
        %v2398 = vunpack.c.l.b16 %v2383
        %v2399 = vunpack.c.l.b16 %v2384
        %v2400 = vpack.c.b16 %v2397, %v2396
        %v2401 = vpack.c.b16 %v2399, %v2398
        %v2405 = vsel %vm1287, %v2380, 0
        %2407 = vmatprep.subr.bf16.mxu0 0
        %2408 = vmatpush1.bf16.msra.mxu0 0
        %2409 = vmatprep.subr.bf16.mxu0 0
        %2410 = vmatpush1.bf16.msra.mxu0 0
        %2411 = vmatprep.subr.bf16.mxu0 0
        %2412 = vmatpush1.bf16.msra.mxu0 0
        %2413 = vmatprep.subr.bf16.mxu0 0
        %2414 = vmatpush1.bf16.msra.mxu0 0
        %2415 = vmatprep.subr.bf16.mxu0 0
        %2416 = vmatpush1.bf16.msra.mxu0 0
        %2417 = vmatprep.subr.bf16.mxu0 0
        %2418 = vmatpush1.bf16.msra.mxu0 0
        %2419 = vmatprep.subr.bf16.mxu0 0
        %2420 = vmatpush1.bf16.msra.mxu0 %v2401
        %2421 = vmatprep.subr.bf16.mxu0 0
        %2422 = vmatpush1.bf16.msra.mxu0 %v2400
        %2423 = vmatprep.subr.bf16.mxu0 0
        %2424 = vmatpush2.bf16.msra.mxu0 0
        %2425 = vmatprep.subr.bf16.mxu0 0
        %2426 = vmatpush2.bf16.msra.mxu0 0
        %2427 = vmatprep.subr.bf16.mxu0 0
        %2428 = vmatpush2.bf16.msra.mxu0 0
        %2429 = vmatprep.subr.bf16.mxu0 0
        %2430 = vmatpush2.bf16.msra.mxu0 0
        %2431 = vmatprep.subr.bf16.mxu0 0
        %2432 = vmatpush2.bf16.msra.mxu0 0
        %2433 = vmatprep.subr.bf16.mxu0 0
        %2434 = vmatpush2.bf16.msra.mxu0 0
        %2435 = vmatprep.subr.bf16.mxu0 0
        %2436 = vmatpush2.bf16.msra.mxu0 0
        %2437 = vmatprep.subr.bf16.mxu0 0
        %2438 = vmatpush2.bf16.msra.mxu0 0
        %2439 = vmatprep.mubr.bf16.mxu0 0
        %2440 = vmatmul.mubr.bf16.gmra.mxu0 %v2405
        %v2441 = vpop.f32.mrf.mxu0
        %v2442 = vadd.f32 %v2390, %v2441
        %v2443 = vpop.f32.mrf.mxu0
        %v2444 = vpop.f32.mrf.mxu0
        %v2445 = vadd.f32 %v2390, %v2444
        %v2446 = vpop.f32.mrf.mxu0
        %2447 = vdwg.mxu0
        %v2448 = vmul.f32 %v2442, 0.35355338
        %v2449 = vmul.f32 %v2445, 0.35355338
        %v2450 = vld [vmem:[%s1013] sm:$0xf]
        %v2451 = vld [vmem:[%s1013 + $0x4] sm:$0xf]
        %v2452 = vld [vmem:[%s1013 + $0x8] sm:$0xf]
        %v2453 = vld [vmem:[%s1013 + $0xc] sm:$0xf]
        %v2454 = vld [vmem:[%s1209] sm:$0x1]
        %v2456 = vlaneseq
        %v2457 = vshrl.u32 %v2456, 7
        %v2458 = vsub.s32 0, %v2457
        %v2459 = vrot.slane %v2454, %v2458
        %v2465 = vunpack.c.l.b16 %v2450
        %v2466 = vunpack.c.l.b16 %v2451
        %v2467 = vunpack.c.l.b16 %v2452
        %v2468 = vunpack.c.l.b16 %v2453
        %v2469 = vpack.c.b16 %v2466, %v2465
        %v2470 = vpack.c.b16 %v2468, %v2467
        %v2474 = vsel %vm1287, %v1261, 0
        %v2477 = vsel %vm1287, %v1262, 0
        %2479 = vmatprep.subr.bf16.mxu0 0
        %2480 = vmatpush1.bf16.msra.mxu0 0
        %2481 = vmatprep.subr.bf16.mxu0 0
        %2482 = vmatpush1.bf16.msra.mxu0 0
        %2483 = vmatprep.subr.bf16.mxu0 0
        %2484 = vmatpush1.bf16.msra.mxu0 0
        %2485 = vmatprep.subr.bf16.mxu0 0
        %2486 = vmatpush1.bf16.msra.mxu0 0
        %2487 = vmatprep.subr.bf16.mxu0 0
        %2488 = vmatpush1.bf16.msra.mxu0 0
        %2489 = vmatprep.subr.bf16.mxu0 0
        %2490 = vmatpush1.bf16.msra.mxu0 0
        %2491 = vmatprep.subr.bf16.mxu0 0
        %2492 = vmatpush1.bf16.msra.mxu0 %v2470
        %2493 = vmatprep.subr.bf16.mxu0 0
        %2494 = vmatpush1.bf16.msra.mxu0 %v2469
        %2495 = vmatprep.subr.bf16.mxu0 0
        %2496 = vmatpush2.bf16.msra.mxu0 0
        %2497 = vmatprep.subr.bf16.mxu0 0
        %2498 = vmatpush2.bf16.msra.mxu0 0
        %2499 = vmatprep.subr.bf16.mxu0 0
        %2500 = vmatpush2.bf16.msra.mxu0 0
        %2501 = vmatprep.subr.bf16.mxu0 0
        %2502 = vmatpush2.bf16.msra.mxu0 0
        %2503 = vmatprep.subr.bf16.mxu0 0
        %2504 = vmatpush2.bf16.msra.mxu0 0
        %2505 = vmatprep.subr.bf16.mxu0 0
        %2506 = vmatpush2.bf16.msra.mxu0 0
        %2507 = vmatprep.subr.bf16.mxu0 0
        %2508 = vmatpush2.bf16.msra.mxu0 0
        %2509 = vmatprep.subr.bf16.mxu0 0
        %2510 = vmatpush2.bf16.msra.mxu0 0
        %2511 = vmatprep.mubr.bf16.mxu0 0
        %2512 = vmatmul.mubr.bf16.gmra.mxu0 %v2474
        %v2513 = vpop.f32.mrf.mxu0
        %v2514 = vadd.f32 %v2459, %v2513
        %v2515 = vpop.f32.mrf.mxu0
        %v2516 = vpop.f32.mrf.mxu0
        %v2517 = vadd.f32 %v2459, %v2516
        %v2518 = vpop.f32.mrf.mxu0
        %2519 = vmatprep.mubr.bf16.mxu0 0
        %2520 = vmatmul.mubr.bf16.gmra.mxu0 %v2477
        %v2521 = vpop.f32.mrf.mxu0
        %v2522 = vadd.f32 %v2459, %v2521
        %v2523 = vpop.f32.mrf.mxu0
        %v2524 = vpop.f32.mrf.mxu0
        %v2525 = vadd.f32 %v2459, %v2524
        %v2526 = vpop.f32.mrf.mxu0
        %2527 = vdwg.mxu0
        %v2528 = vld [vmem:[%s1022] sm:$0xf]
        %v2529 = vld [vmem:[%s1022 + $0x4] sm:$0xf]
        %v2530 = vld [vmem:[%s1022 + $0x8] sm:$0xf]
        %v2531 = vld [vmem:[%s1022 + $0xc] sm:$0xf]
        %v2532 = vld [vmem:[%s1212] sm:$0x1]
        %v2533 = vpack.c.bf16 %v2448, %v2448
        %v2534 = vpack.c.bf16 %v2449, %v2449
        %v2535 = vpack.c.bf16 %v2517, %v2514
        %v2536 = vpack.c.bf16 %v2525, %v2522
        %v2538 = vsel %vm1346, %v2533, 0
        %v2541 = vsel %vm1346, %v2535, 0
        %2543 = vmatprep.subr.bf16.mxu0 0
        %2544 = vmatpush1.bf16.xpose.msra.mxu0 0
        %2545 = vmatprep.subr.bf16.mxu0 0
        %2546 = vmatpush1.bf16.xpose.msra.mxu0 0
        %2547 = vmatprep.subr.bf16.mxu0 0
        %2548 = vmatpush1.bf16.xpose.msra.mxu0 0
        %2549 = vmatprep.subr.bf16.mxu0 0
        %2550 = vmatpush1.bf16.xpose.msra.mxu0 0
        %2551 = vmatprep.subr.bf16.mxu0 0
        %2552 = vmatpush1.bf16.xpose.msra.mxu0 0
        %2553 = vmatprep.subr.bf16.mxu0 0
        %2554 = vmatpush1.bf16.xpose.msra.mxu0 0
        %2555 = vmatprep.subr.bf16.mxu0 0
        %2556 = vmatpush1.bf16.xpose.msra.mxu0 0
        %2557 = vmatprep.subr.bf16.mxu0 0
        %2558 = vmatpush1.bf16.xpose.msra.mxu0 %v2541
        %2559 = vmatprep.subr.bf16.mxu0 0
        %2560 = vmatpush2.bf16.xpose.msra.mxu0 0
        %2561 = vmatprep.subr.bf16.mxu0 0
        %2562 = vmatpush2.bf16.xpose.msra.mxu0 0
        %2563 = vmatprep.subr.bf16.mxu0 0
        %2564 = vmatpush2.bf16.xpose.msra.mxu0 0
        %2565 = vmatprep.subr.bf16.mxu0 0
        %2566 = vmatpush2.bf16.xpose.msra.mxu0 0
        %2567 = vmatprep.subr.bf16.mxu0 0
        %2568 = vmatpush2.bf16.xpose.msra.mxu0 0
        %2569 = vmatprep.subr.bf16.mxu0 0
        %2570 = vmatpush2.bf16.xpose.msra.mxu0 0
        %2571 = vmatprep.subr.bf16.mxu0 0
        %2572 = vmatpush2.bf16.xpose.msra.mxu0 0
        %2573 = vmatprep.subr.bf16.mxu0 0
        %2574 = vmatpush2.bf16.xpose.msra.mxu0 0
        %2575 = vmatprep.mubr.bf16.mxu0 0
        %2576 = vmatmul.mubr.bf16.gmra.mxu0 %v2538
        %v2577 = vpop.f32.mrf.mxu0
        %v2578 = vadd.f32 0.0, %v2577
        %v2579 = vpop.f32.mrf.mxu0
        %v2580 = vpop.f32.mrf.mxu0
        %v2581 = vpop.f32.mrf.mxu0
        %2582 = vdwg.mxu0
        %v2584 = vsel %vm1346, %v2534, 0
        %v2587 = vsel %vm1346, %v2536, 0
        %2589 = vmatprep.subr.bf16.mxu0 0
        %2590 = vmatpush1.bf16.xpose.msra.mxu0 0
        %2591 = vmatprep.subr.bf16.mxu0 0
        %2592 = vmatpush1.bf16.xpose.msra.mxu0 0
        %2593 = vmatprep.subr.bf16.mxu0 0
        %2594 = vmatpush1.bf16.xpose.msra.mxu0 0
        %2595 = vmatprep.subr.bf16.mxu0 0
        %2596 = vmatpush1.bf16.xpose.msra.mxu0 0
        %2597 = vmatprep.subr.bf16.mxu0 0
        %2598 = vmatpush1.bf16.xpose.msra.mxu0 0
        %2599 = vmatprep.subr.bf16.mxu0 0
        %2600 = vmatpush1.bf16.xpose.msra.mxu0 0
        %2601 = vmatprep.subr.bf16.mxu0 0
        %2602 = vmatpush1.bf16.xpose.msra.mxu0 0
        %2603 = vmatprep.subr.bf16.mxu0 0
        %2604 = vmatpush1.bf16.xpose.msra.mxu0 %v2587
        %2605 = vmatprep.subr.bf16.mxu0 0
        %2606 = vmatpush2.bf16.xpose.msra.mxu0 0
        %2607 = vmatprep.subr.bf16.mxu0 0
        %2608 = vmatpush2.bf16.xpose.msra.mxu0 0
        %2609 = vmatprep.subr.bf16.mxu0 0
        %2610 = vmatpush2.bf16.xpose.msra.mxu0 0
        %2611 = vmatprep.subr.bf16.mxu0 0
        %2612 = vmatpush2.bf16.xpose.msra.mxu0 0
        %2613 = vmatprep.subr.bf16.mxu0 0
        %2614 = vmatpush2.bf16.xpose.msra.mxu0 0
        %2615 = vmatprep.subr.bf16.mxu0 0
        %2616 = vmatpush2.bf16.xpose.msra.mxu0 0
        %2617 = vmatprep.subr.bf16.mxu0 0
        %2618 = vmatpush2.bf16.xpose.msra.mxu0 0
        %2619 = vmatprep.subr.bf16.mxu0 0
        %2620 = vmatpush2.bf16.xpose.msra.mxu0 0
        %2621 = vmatprep.mubr.bf16.mxu0 0
        %2622 = vmatmul.mubr.bf16.gmra.mxu0 %v2584
        %v2623 = vpop.f32.mrf.mxu0
        %v2624 = vadd.f32 0.0, %v2623
        %v2625 = vpop.f32.mrf.mxu0
        %v2626 = vpop.f32.mrf.mxu0
        %v2627 = vpop.f32.mrf.mxu0
        %2628 = vdwg.mxu0
        %vm2629 = vcmask 130048
        %v2630 = vsel %vm2629, %v2578, -inf
        %2631 = vmax.xlane.f32.xlu0 %v2630
        %v2632 = vpop.xlane.xlu0 %2631
        %v2633 = vsel %vm2629, %v2624, -inf
        %2634 = vmax.xlane.f32.xlu0 %v2633
        %v2635 = vpop.xlane.xlu0 %2634
        %v2636 = vsub.f32 %v2578, %v2632
        %v2637 = vsub.f32 %v2624, %v2635
        %v2638 = vmul.f32 %v2636, 1.442695
        %v2639 = vpow.pop %v2638
        %v2640 = vmul.f32 %v2637, 1.442695
        %v2641 = vpow.pop %v2640
        %v2642 = vsel %vm2629, %v2639, 0.0
        %2643 = vadd.xlane.f32.xlu0 %v2642
        %v2644 = vpop.xlane.xlu0 %2643
        %v2645 = vsel %vm2629, %v2641, 0.0
        %2646 = vadd.xlane.f32.xlu0 %v2645
        %v2647 = vpop.xlane.xlu0 %2646
        %v2648 = vrcp.pop %v2644
        %v2649 = vrcp.pop %v2647
        %v2650 = vmul.f32 %v2639, %v2648
        %v2651 = vmul.f32 %v2641, %v2649
        %v2652 = vpack.c.bf16 %v2650, %v2650
        %v2653 = vpack.c.bf16 %v2651, %v2651
        %2655 = vrot.lane.b32.xlu0 %v2535, 96
        %v2656 = vpop.permute.xlu0 %2655
        %v2659 = vsel %vm2629, %v2652, 0
        %2661 = vmatprep.subr.bf16.mxu0 0
        %2662 = vmatpush1.bf16.msra.mxu0 0
        %2663 = vmatprep.subr.bf16.mxu0 0
        %2664 = vmatpush1.bf16.msra.mxu0 0
        %2665 = vmatprep.subr.bf16.mxu0 0
        %2666 = vmatpush1.bf16.msra.mxu0 0
        %2667 = vmatprep.subr.bf16.mxu0 0
        %2668 = vmatpush1.bf16.msra.mxu0 0
        %2669 = vmatprep.subr.bf16.mxu0 0
        %2670 = vmatpush1.bf16.msra.mxu0 0
        %2671 = vmatprep.subr.bf16.mxu0 0
        %2672 = vmatpush1.bf16.msra.mxu0 0
        %2673 = vmatprep.subr.bf16.mxu0 0
        %2674 = vmatpush1.bf16.msra.mxu0 0
        %2675 = vmatprep.subr.bf16.mxu0 0
        %2676 = vmatpush1.bf16.msra.mxu0 %v2656
        %2677 = vmatprep.subr.bf16.mxu0 0
        %2678 = vmatpush2.bf16.msra.mxu0 0
        %2679 = vmatprep.subr.bf16.mxu0 0
        %2680 = vmatpush2.bf16.msra.mxu0 0
        %2681 = vmatprep.subr.bf16.mxu0 0
        %2682 = vmatpush2.bf16.msra.mxu0 0
        %2683 = vmatprep.subr.bf16.mxu0 0
        %2684 = vmatpush2.bf16.msra.mxu0 0
        %2685 = vmatprep.subr.bf16.mxu0 0
        %2686 = vmatpush2.bf16.msra.mxu0 0
        %2687 = vmatprep.subr.bf16.mxu0 0
        %2688 = vmatpush2.bf16.msra.mxu0 0
        %2689 = vmatprep.subr.bf16.mxu0 0
        %2690 = vmatpush2.bf16.msra.mxu0 0
        %2691 = vmatprep.subr.bf16.mxu0 0
        %2692 = vmatpush2.bf16.msra.mxu0 0
        %2693 = vmatprep.mubr.bf16.mxu0 0
        %2694 = vmatmul.mubr.bf16.gmra.mxu0 %v2659
        %v2695 = vpop.f32.mrf.mxu0
        %v2696 = vadd.f32 0.0, %v2695
        %v2697 = vpop.f32.mrf.mxu0
        %v2698 = vpop.f32.mrf.mxu0
        %v2699 = vpop.f32.mrf.mxu0
        %2700 = vdwg.mxu0
        %2702 = vrot.lane.b32.xlu0 %v2536, 96
        %v2703 = vpop.permute.xlu0 %2702
        %v2706 = vsel %vm2629, %v2653, 0
        %2708 = vmatprep.subr.bf16.mxu0 0
        %2709 = vmatpush1.bf16.msra.mxu0 0
        %2710 = vmatprep.subr.bf16.mxu0 0
        %2711 = vmatpush1.bf16.msra.mxu0 0
        %2712 = vmatprep.subr.bf16.mxu0 0
        %2713 = vmatpush1.bf16.msra.mxu0 0
        %2714 = vmatprep.subr.bf16.mxu0 0
        %2715 = vmatpush1.bf16.msra.mxu0 0
        %2716 = vmatprep.subr.bf16.mxu0 0
        %2717 = vmatpush1.bf16.msra.mxu0 0
        %2718 = vmatprep.subr.bf16.mxu0 0
        %2719 = vmatpush1.bf16.msra.mxu0 0
        %2720 = vmatprep.subr.bf16.mxu0 0
        %2721 = vmatpush1.bf16.msra.mxu0 0
        %2722 = vmatprep.subr.bf16.mxu0 0
        %2723 = vmatpush1.bf16.msra.mxu0 %v2703
        %2724 = vmatprep.subr.bf16.mxu0 0
        %2725 = vmatpush2.bf16.msra.mxu0 0
        %2726 = vmatprep.subr.bf16.mxu0 0
        %2727 = vmatpush2.bf16.msra.mxu0 0
        %2728 = vmatprep.subr.bf16.mxu0 0
        %2729 = vmatpush2.bf16.msra.mxu0 0
        %2730 = vmatprep.subr.bf16.mxu0 0
        %2731 = vmatpush2.bf16.msra.mxu0 0
        %2732 = vmatprep.subr.bf16.mxu0 0
        %2733 = vmatpush2.bf16.msra.mxu0 0
        %2734 = vmatprep.subr.bf16.mxu0 0
        %2735 = vmatpush2.bf16.msra.mxu0 0
        %2736 = vmatprep.subr.bf16.mxu0 0
        %2737 = vmatpush2.bf16.msra.mxu0 0
        %2738 = vmatprep.subr.bf16.mxu0 0
        %2739 = vmatpush2.bf16.msra.mxu0 0
        %2740 = vmatprep.mubr.bf16.mxu0 0
        %2741 = vmatmul.mubr.bf16.gmra.mxu0 %v2706
        %v2742 = vpop.f32.mrf.mxu0
        %v2743 = vadd.f32 0.0, %v2742
        %v2744 = vpop.f32.mrf.mxu0
        %v2745 = vpop.f32.mrf.mxu0
        %v2746 = vpop.f32.mrf.mxu0
        %2747 = vdwg.mxu0
        %2748 = vst.msk [vmem:[#allocation3] sm:$0xff] %vm1346, %v2696
        %2749 = vst.msk [vmem:[#allocation3 + $0x8] sm:$0xff] %vm1346, %v2743
        %2751 = vrot.lane.b32.xlu0 %v2533, 120
        %v2752 = vpop.permute.xlu0 %2751
        %2753 = vrot.lane.b32.xlu0 %v2535, 120
        %v2754 = vpop.permute.xlu0 %2753
        %v2756 = vsel %vm1346, %v2752, 0
        %v2759 = vsel %vm1346, %v2754, 0
        %2761 = vmatprep.subr.bf16.mxu0 0
        %2762 = vmatpush1.bf16.xpose.msra.mxu0 0
        %2763 = vmatprep.subr.bf16.mxu0 0
        %2764 = vmatpush1.bf16.xpose.msra.mxu0 0
        %2765 = vmatprep.subr.bf16.mxu0 0
        %2766 = vmatpush1.bf16.xpose.msra.mxu0 0
        %2767 = vmatprep.subr.bf16.mxu0 0
        %2768 = vmatpush1.bf16.xpose.msra.mxu0 0
        %2769 = vmatprep.subr.bf16.mxu0 0
        %2770 = vmatpush1.bf16.xpose.msra.mxu0 0
        %2771 = vmatprep.subr.bf16.mxu0 0
        %2772 = vmatpush1.bf16.xpose.msra.mxu0 0
        %2773 = vmatprep.subr.bf16.mxu0 0
        %2774 = vmatpush1.bf16.xpose.msra.mxu0 0
        %2775 = vmatprep.subr.bf16.mxu0 0
        %2776 = vmatpush1.bf16.xpose.msra.mxu0 %v2759
        %2777 = vmatprep.subr.bf16.mxu0 0
        %2778 = vmatpush2.bf16.xpose.msra.mxu0 0
        %2779 = vmatprep.subr.bf16.mxu0 0
        %2780 = vmatpush2.bf16.xpose.msra.mxu0 0
        %2781 = vmatprep.subr.bf16.mxu0 0
        %2782 = vmatpush2.bf16.xpose.msra.mxu0 0
        %2783 = vmatprep.subr.bf16.mxu0 0
        %2784 = vmatpush2.bf16.xpose.msra.mxu0 0
        %2785 = vmatprep.subr.bf16.mxu0 0
        %2786 = vmatpush2.bf16.xpose.msra.mxu0 0
        %2787 = vmatprep.subr.bf16.mxu0 0
        %2788 = vmatpush2.bf16.xpose.msra.mxu0 0
        %2789 = vmatprep.subr.bf16.mxu0 0
        %2790 = vmatpush2.bf16.xpose.msra.mxu0 0
        %2791 = vmatprep.subr.bf16.mxu0 0
        %2792 = vmatpush2.bf16.xpose.msra.mxu0 0
        %2793 = vmatprep.mubr.bf16.mxu0 0
        %2794 = vmatmul.mubr.bf16.gmra.mxu0 %v2756
        %v2795 = vpop.f32.mrf.mxu0
        %v2796 = vadd.f32 0.0, %v2795
        %v2797 = vpop.f32.mrf.mxu0
        %v2798 = vpop.f32.mrf.mxu0
        %v2799 = vpop.f32.mrf.mxu0
        %2800 = vdwg.mxu0
        %2802 = vrot.lane.b32.xlu0 %v2534, 120
        %v2803 = vpop.permute.xlu0 %2802
        %2804 = vrot.lane.b32.xlu0 %v2536, 120
        %v2805 = vpop.permute.xlu0 %2804
        %v2807 = vsel %vm1346, %v2803, 0
        %v2810 = vsel %vm1346, %v2805, 0
        %2812 = vmatprep.subr.bf16.mxu0 0
        %2813 = vmatpush1.bf16.xpose.msra.mxu0 0
        %2814 = vmatprep.subr.bf16.mxu0 0
        %2815 = vmatpush1.bf16.xpose.msra.mxu0 0
        %2816 = vmatprep.subr.bf16.mxu0 0
        %2817 = vmatpush1.bf16.xpose.msra.mxu0 0
        %2818 = vmatprep.subr.bf16.mxu0 0
        %2819 = vmatpush1.bf16.xpose.msra.mxu0 0
        %2820 = vmatprep.subr.bf16.mxu0 0
        %2821 = vmatpush1.bf16.xpose.msra.mxu0 0
        %2822 = vmatprep.subr.bf16.mxu0 0
        %2823 = vmatpush1.bf16.xpose.msra.mxu0 0
        %2824 = vmatprep.subr.bf16.mxu0 0
        %2825 = vmatpush1.bf16.xpose.msra.mxu0 0
        %2826 = vmatprep.subr.bf16.mxu0 0
        %2827 = vmatpush1.bf16.xpose.msra.mxu0 %v2810
        %2828 = vmatprep.subr.bf16.mxu0 0
        %2829 = vmatpush2.bf16.xpose.msra.mxu0 0
        %2830 = vmatprep.subr.bf16.mxu0 0
        %2831 = vmatpush2.bf16.xpose.msra.mxu0 0
        %2832 = vmatprep.subr.bf16.mxu0 0
        %2833 = vmatpush2.bf16.xpose.msra.mxu0 0
        %2834 = vmatprep.subr.bf16.mxu0 0
        %2835 = vmatpush2.bf16.xpose.msra.mxu0 0
        %2836 = vmatprep.subr.bf16.mxu0 0
        %2837 = vmatpush2.bf16.xpose.msra.mxu0 0
        %2838 = vmatprep.subr.bf16.mxu0 0
        %2839 = vmatpush2.bf16.xpose.msra.mxu0 0
        %2840 = vmatprep.subr.bf16.mxu0 0
        %2841 = vmatpush2.bf16.xpose.msra.mxu0 0
        %2842 = vmatprep.subr.bf16.mxu0 0
        %2843 = vmatpush2.bf16.xpose.msra.mxu0 0
        %2844 = vmatprep.mubr.bf16.mxu0 0
        %2845 = vmatmul.mubr.bf16.gmra.mxu0 %v2807
        %v2846 = vpop.f32.mrf.mxu0
        %v2847 = vadd.f32 0.0, %v2846
        %v2848 = vpop.f32.mrf.mxu0
        %v2849 = vpop.f32.mrf.mxu0
        %v2850 = vpop.f32.mrf.mxu0
        %2851 = vdwg.mxu0
        %v2852 = vsel %vm2629, %v2796, -inf
        %2853 = vmax.xlane.f32.xlu0 %v2852
        %v2854 = vpop.xlane.xlu0 %2853
        %v2855 = vsel %vm2629, %v2847, -inf
        %2856 = vmax.xlane.f32.xlu0 %v2855
        %v2857 = vpop.xlane.xlu0 %2856
        %v2858 = vsub.f32 %v2796, %v2854
        %v2859 = vsub.f32 %v2847, %v2857
        %v2860 = vmul.f32 %v2858, 1.442695
        %v2861 = vpow.pop %v2860
        %v2862 = vmul.f32 %v2859, 1.442695
        %v2863 = vpow.pop %v2862
        %v2864 = vsel %vm2629, %v2861, 0.0
        %2865 = vadd.xlane.f32.xlu0 %v2864
        %v2866 = vpop.xlane.xlu0 %2865
        %v2867 = vsel %vm2629, %v2863, 0.0
        %2868 = vadd.xlane.f32.xlu0 %v2867
        %v2869 = vpop.xlane.xlu0 %2868
        %v2870 = vrcp.pop %v2866
        %v2871 = vrcp.pop %v2869
        %v2872 = vmul.f32 %v2861, %v2870
        %v2873 = vmul.f32 %v2863, %v2871
        %v2874 = vadd.f32 %v2650, %v2872
        %v2875 = vadd.f32 %v2651, %v2873
        %v2876 = vpack.c.bf16 %v2872, %v2872
        %v2877 = vpack.c.bf16 %v2873, %v2873
        %2878 = vrot.lane.b32.xlu0 %v2535, 88
        %v2879 = vpop.permute.xlu0 %2878
        %v2882 = vsel %vm2629, %v2876, 0
        %2884 = vmatprep.subr.bf16.mxu0 0
        %2885 = vmatpush1.bf16.msra.mxu0 0
        %2886 = vmatprep.subr.bf16.mxu0 0
        %2887 = vmatpush1.bf16.msra.mxu0 0
        %2888 = vmatprep.subr.bf16.mxu0 0
        %2889 = vmatpush1.bf16.msra.mxu0 0
        %2890 = vmatprep.subr.bf16.mxu0 0
        %2891 = vmatpush1.bf16.msra.mxu0 0
        %2892 = vmatprep.subr.bf16.mxu0 0
        %2893 = vmatpush1.bf16.msra.mxu0 0
        %2894 = vmatprep.subr.bf16.mxu0 0
        %2895 = vmatpush1.bf16.msra.mxu0 0
        %2896 = vmatprep.subr.bf16.mxu0 0
        %2897 = vmatpush1.bf16.msra.mxu0 0
        %2898 = vmatprep.subr.bf16.mxu0 0
        %2899 = vmatpush1.bf16.msra.mxu0 %v2879
        %2900 = vmatprep.subr.bf16.mxu0 0
        %2901 = vmatpush2.bf16.msra.mxu0 0
        %2902 = vmatprep.subr.bf16.mxu0 0
        %2903 = vmatpush2.bf16.msra.mxu0 0
        %2904 = vmatprep.subr.bf16.mxu0 0
        %2905 = vmatpush2.bf16.msra.mxu0 0
        %2906 = vmatprep.subr.bf16.mxu0 0
        %2907 = vmatpush2.bf16.msra.mxu0 0
        %2908 = vmatprep.subr.bf16.mxu0 0
        %2909 = vmatpush2.bf16.msra.mxu0 0
        %2910 = vmatprep.subr.bf16.mxu0 0
        %2911 = vmatpush2.bf16.msra.mxu0 0
        %2912 = vmatprep.subr.bf16.mxu0 0
        %2913 = vmatpush2.bf16.msra.mxu0 0
        %2914 = vmatprep.subr.bf16.mxu0 0
        %2915 = vmatpush2.bf16.msra.mxu0 0
        %2916 = vmatprep.mubr.bf16.mxu0 0
        %2917 = vmatmul.mubr.bf16.gmra.mxu0 %v2882
        %v2918 = vpop.f32.mrf.mxu0
        %v2919 = vadd.f32 0.0, %v2918
        %v2920 = vpop.f32.mrf.mxu0
        %v2921 = vpop.f32.mrf.mxu0
        %v2922 = vpop.f32.mrf.mxu0
        %2923 = vdwg.mxu0
        %2924 = vrot.lane.b32.xlu0 %v2536, 88
        %v2925 = vpop.permute.xlu0 %2924
        %v2928 = vsel %vm2629, %v2877, 0
        %2930 = vmatprep.subr.bf16.mxu0 0
        %2931 = vmatpush1.bf16.msra.mxu0 0
        %2932 = vmatprep.subr.bf16.mxu0 0
        %2933 = vmatpush1.bf16.msra.mxu0 0
        %2934 = vmatprep.subr.bf16.mxu0 0
        %2935 = vmatpush1.bf16.msra.mxu0 0
        %2936 = vmatprep.subr.bf16.mxu0 0
        %2937 = vmatpush1.bf16.msra.mxu0 0
        %2938 = vmatprep.subr.bf16.mxu0 0
        %2939 = vmatpush1.bf16.msra.mxu0 0
        %2940 = vmatprep.subr.bf16.mxu0 0
        %2941 = vmatpush1.bf16.msra.mxu0 0
        %2942 = vmatprep.subr.bf16.mxu0 0
        %2943 = vmatpush1.bf16.msra.mxu0 0
        %2944 = vmatprep.subr.bf16.mxu0 0
        %2945 = vmatpush1.bf16.msra.mxu0 %v2925
        %2946 = vmatprep.subr.bf16.mxu0 0
        %2947 = vmatpush2.bf16.msra.mxu0 0
        %2948 = vmatprep.subr.bf16.mxu0 0
        %2949 = vmatpush2.bf16.msra.mxu0 0
        %2950 = vmatprep.subr.bf16.mxu0 0
        %2951 = vmatpush2.bf16.msra.mxu0 0
        %2952 = vmatprep.subr.bf16.mxu0 0
        %2953 = vmatpush2.bf16.msra.mxu0 0
        %2954 = vmatprep.subr.bf16.mxu0 0
        %2955 = vmatpush2.bf16.msra.mxu0 0
        %2956 = vmatprep.subr.bf16.mxu0 0
        %2957 = vmatpush2.bf16.msra.mxu0 0
        %2958 = vmatprep.subr.bf16.mxu0 0
        %2959 = vmatpush2.bf16.msra.mxu0 0
        %2960 = vmatprep.subr.bf16.mxu0 0
        %2961 = vmatpush2.bf16.msra.mxu0 0
        %2962 = vmatprep.mubr.bf16.mxu0 0
        %2963 = vmatmul.mubr.bf16.gmra.mxu0 %v2928
        %v2964 = vpop.f32.mrf.mxu0
        %v2965 = vadd.f32 0.0, %v2964
        %v2966 = vpop.f32.mrf.mxu0
        %v2967 = vpop.f32.mrf.mxu0
        %v2968 = vpop.f32.mrf.mxu0
        %2969 = vdwg.mxu0
        %2972 = vrot.lane.b32.xlu0 %v2919, 8
        %v2973 = vpop.permute.xlu0 %2972
        %2974 = vrot.lane.b32.xlu0 %v2965, 8
        %v2975 = vpop.permute.xlu0 %2974
        %2978 = vst.msk [vmem:[#allocation3] sm:$0xff] %vm1797, %v2973
        %2979 = vst.msk [vmem:[#allocation3 + $0x8] sm:$0xff] %vm1797, %v2975
        %2980 = vrot.lane.b32.xlu0 %v2533, 112
        %v2981 = vpop.permute.xlu0 %2980
        %2982 = vrot.lane.b32.xlu0 %v2535, 112
        %v2983 = vpop.permute.xlu0 %2982
        %v2985 = vsel %vm1346, %v2981, 0
        %v2988 = vsel %vm1346, %v2983, 0
        %2990 = vmatprep.subr.bf16.mxu0 0
        %2991 = vmatpush1.bf16.xpose.msra.mxu0 0
        %2992 = vmatprep.subr.bf16.mxu0 0
        %2993 = vmatpush1.bf16.xpose.msra.mxu0 0
        %2994 = vmatprep.subr.bf16.mxu0 0
        %2995 = vmatpush1.bf16.xpose.msra.mxu0 0
        %2996 = vmatprep.subr.bf16.mxu0 0
        %2997 = vmatpush1.bf16.xpose.msra.mxu0 0
        %2998 = vmatprep.subr.bf16.mxu0 0
        %2999 = vmatpush1.bf16.xpose.msra.mxu0 0
        %3000 = vmatprep.subr.bf16.mxu0 0
        %3001 = vmatpush1.bf16.xpose.msra.mxu0 0
        %3002 = vmatprep.subr.bf16.mxu0 0
        %3003 = vmatpush1.bf16.xpose.msra.mxu0 0
        %3004 = vmatprep.subr.bf16.mxu0 0
        %3005 = vmatpush1.bf16.xpose.msra.mxu0 %v2988
        %3006 = vmatprep.subr.bf16.mxu0 0
        %3007 = vmatpush2.bf16.xpose.msra.mxu0 0
        %3008 = vmatprep.subr.bf16.mxu0 0
        %3009 = vmatpush2.bf16.xpose.msra.mxu0 0
        %3010 = vmatprep.subr.bf16.mxu0 0
        %3011 = vmatpush2.bf16.xpose.msra.mxu0 0
        %3012 = vmatprep.subr.bf16.mxu0 0
        %3013 = vmatpush2.bf16.xpose.msra.mxu0 0
        %3014 = vmatprep.subr.bf16.mxu0 0
        %3015 = vmatpush2.bf16.xpose.msra.mxu0 0
        %3016 = vmatprep.subr.bf16.mxu0 0
        %3017 = vmatpush2.bf16.xpose.msra.mxu0 0
        %3018 = vmatprep.subr.bf16.mxu0 0
        %3019 = vmatpush2.bf16.xpose.msra.mxu0 0
        %3020 = vmatprep.subr.bf16.mxu0 0
        %3021 = vmatpush2.bf16.xpose.msra.mxu0 0
        %3022 = vmatprep.mubr.bf16.mxu0 0
        %3023 = vmatmul.mubr.bf16.gmra.mxu0 %v2985
        %v3024 = vpop.f32.mrf.mxu0
        %v3025 = vadd.f32 0.0, %v3024
        %v3026 = vpop.f32.mrf.mxu0
        %v3027 = vpop.f32.mrf.mxu0
        %v3028 = vpop.f32.mrf.mxu0
        %3029 = vdwg.mxu0
        %3030 = vrot.lane.b32.xlu0 %v2534, 112
        %v3031 = vpop.permute.xlu0 %3030
        %3032 = vrot.lane.b32.xlu0 %v2536, 112
        %v3033 = vpop.permute.xlu0 %3032
        %v3035 = vsel %vm1346, %v3031, 0
        %v3038 = vsel %vm1346, %v3033, 0
        %3040 = vmatprep.subr.bf16.mxu0 0
        %3041 = vmatpush1.bf16.xpose.msra.mxu0 0
        %3042 = vmatprep.subr.bf16.mxu0 0
        %3043 = vmatpush1.bf16.xpose.msra.mxu0 0
        %3044 = vmatprep.subr.bf16.mxu0 0
        %3045 = vmatpush1.bf16.xpose.msra.mxu0 0
        %3046 = vmatprep.subr.bf16.mxu0 0
        %3047 = vmatpush1.bf16.xpose.msra.mxu0 0
        %3048 = vmatprep.subr.bf16.mxu0 0
        %3049 = vmatpush1.bf16.xpose.msra.mxu0 0
        %3050 = vmatprep.subr.bf16.mxu0 0
        %3051 = vmatpush1.bf16.xpose.msra.mxu0 0
        %3052 = vmatprep.subr.bf16.mxu0 0
        %3053 = vmatpush1.bf16.xpose.msra.mxu0 0
        %3054 = vmatprep.subr.bf16.mxu0 0
        %3055 = vmatpush1.bf16.xpose.msra.mxu0 %v3038
        %3056 = vmatprep.subr.bf16.mxu0 0
        %3057 = vmatpush2.bf16.xpose.msra.mxu0 0
        %3058 = vmatprep.subr.bf16.mxu0 0
        %3059 = vmatpush2.bf16.xpose.msra.mxu0 0
        %3060 = vmatprep.subr.bf16.mxu0 0
        %3061 = vmatpush2.bf16.xpose.msra.mxu0 0
        %3062 = vmatprep.subr.bf16.mxu0 0
        %3063 = vmatpush2.bf16.xpose.msra.mxu0 0
        %3064 = vmatprep.subr.bf16.mxu0 0
        %3065 = vmatpush2.bf16.xpose.msra.mxu0 0
        %3066 = vmatprep.subr.bf16.mxu0 0
        %3067 = vmatpush2.bf16.xpose.msra.mxu0 0
        %3068 = vmatprep.subr.bf16.mxu0 0
        %3069 = vmatpush2.bf16.xpose.msra.mxu0 0
        %3070 = vmatprep.subr.bf16.mxu0 0
        %3071 = vmatpush2.bf16.xpose.msra.mxu0 0
        %3072 = vmatprep.mubr.bf16.mxu0 0
        %3073 = vmatmul.mubr.bf16.gmra.mxu0 %v3035
        %v3074 = vpop.f32.mrf.mxu0
        %v3075 = vadd.f32 0.0, %v3074
        %v3076 = vpop.f32.mrf.mxu0
        %v3077 = vpop.f32.mrf.mxu0
        %v3078 = vpop.f32.mrf.mxu0
        %3079 = vdwg.mxu0
        %v3080 = vsel %vm2629, %v3025, -inf
        %3081 = vmax.xlane.f32.xlu0 %v3080
        %v3082 = vpop.xlane.xlu0 %3081
        %v3083 = vsel %vm2629, %v3075, -inf
        %3084 = vmax.xlane.f32.xlu0 %v3083
        %v3085 = vpop.xlane.xlu0 %3084
        %v3086 = vsub.f32 %v3025, %v3082
        %v3087 = vsub.f32 %v3075, %v3085
        %v3088 = vmul.f32 %v3086, 1.442695
        %v3089 = vpow.pop %v3088
        %v3090 = vmul.f32 %v3087, 1.442695
        %v3091 = vpow.pop %v3090
        %v3092 = vsel %vm2629, %v3089, 0.0
        %3093 = vadd.xlane.f32.xlu0 %v3092
        %v3094 = vpop.xlane.xlu0 %3093
        %v3095 = vsel %vm2629, %v3091, 0.0
        %3096 = vadd.xlane.f32.xlu0 %v3095
        %v3097 = vpop.xlane.xlu0 %3096
        %v3098 = vrcp.pop %v3094
        %v3099 = vrcp.pop %v3097
        %v3100 = vmul.f32 %v3089, %v3098
        %v3101 = vmul.f32 %v3091, %v3099
        %v3102 = vadd.f32 %v2874, %v3100
        %v3103 = vadd.f32 %v2875, %v3101
        %v3104 = vpack.c.bf16 %v3100, %v3100
        %v3105 = vpack.c.bf16 %v3101, %v3101
        %3106 = vrot.lane.b32.xlu0 %v2535, 80
        %v3107 = vpop.permute.xlu0 %3106
        %v3110 = vsel %vm2629, %v3104, 0
        %3112 = vmatprep.subr.bf16.mxu0 0
        %3113 = vmatpush1.bf16.msra.mxu0 0
        %3114 = vmatprep.subr.bf16.mxu0 0
        %3115 = vmatpush1.bf16.msra.mxu0 0
        %3116 = vmatprep.subr.bf16.mxu0 0
        %3117 = vmatpush1.bf16.msra.mxu0 0
        %3118 = vmatprep.subr.bf16.mxu0 0
        %3119 = vmatpush1.bf16.msra.mxu0 0
        %3120 = vmatprep.subr.bf16.mxu0 0
        %3121 = vmatpush1.bf16.msra.mxu0 0
        %3122 = vmatprep.subr.bf16.mxu0 0
        %3123 = vmatpush1.bf16.msra.mxu0 0
        %3124 = vmatprep.subr.bf16.mxu0 0
        %3125 = vmatpush1.bf16.msra.mxu0 0
        %3126 = vmatprep.subr.bf16.mxu0 0
        %3127 = vmatpush1.bf16.msra.mxu0 %v3107
        %3128 = vmatprep.subr.bf16.mxu0 0
        %3129 = vmatpush2.bf16.msra.mxu0 0
        %3130 = vmatprep.subr.bf16.mxu0 0
        %3131 = vmatpush2.bf16.msra.mxu0 0
        %3132 = vmatprep.subr.bf16.mxu0 0
        %3133 = vmatpush2.bf16.msra.mxu0 0
        %3134 = vmatprep.subr.bf16.mxu0 0
        %3135 = vmatpush2.bf16.msra.mxu0 0
        %3136 = vmatprep.subr.bf16.mxu0 0
        %3137 = vmatpush2.bf16.msra.mxu0 0
        %3138 = vmatprep.subr.bf16.mxu0 0
        %3139 = vmatpush2.bf16.msra.mxu0 0
        %3140 = vmatprep.subr.bf16.mxu0 0
        %3141 = vmatpush2.bf16.msra.mxu0 0
        %3142 = vmatprep.subr.bf16.mxu0 0
        %3143 = vmatpush2.bf16.msra.mxu0 0
        %3144 = vmatprep.mubr.bf16.mxu0 0
        %3145 = vmatmul.mubr.bf16.gmra.mxu0 %v3110
        %v3146 = vpop.f32.mrf.mxu0
        %v3147 = vadd.f32 0.0, %v3146
        %v3148 = vpop.f32.mrf.mxu0
        %v3149 = vpop.f32.mrf.mxu0
        %v3150 = vpop.f32.mrf.mxu0
        %3151 = vdwg.mxu0
        %3152 = vrot.lane.b32.xlu0 %v2536, 80
        %v3153 = vpop.permute.xlu0 %3152
        %v3156 = vsel %vm2629, %v3105, 0
        %3158 = vmatprep.subr.bf16.mxu0 0
        %3159 = vmatpush1.bf16.msra.mxu0 0
        %3160 = vmatprep.subr.bf16.mxu0 0
        %3161 = vmatpush1.bf16.msra.mxu0 0
        %3162 = vmatprep.subr.bf16.mxu0 0
        %3163 = vmatpush1.bf16.msra.mxu0 0
        %3164 = vmatprep.subr.bf16.mxu0 0
        %3165 = vmatpush1.bf16.msra.mxu0 0
        %3166 = vmatprep.subr.bf16.mxu0 0
        %3167 = vmatpush1.bf16.msra.mxu0 0
        %3168 = vmatprep.subr.bf16.mxu0 0
        %3169 = vmatpush1.bf16.msra.mxu0 0
        %3170 = vmatprep.subr.bf16.mxu0 0
        %3171 = vmatpush1.bf16.msra.mxu0 0
        %3172 = vmatprep.subr.bf16.mxu0 0
        %3173 = vmatpush1.bf16.msra.mxu0 %v3153
        %3174 = vmatprep.subr.bf16.mxu0 0
        %3175 = vmatpush2.bf16.msra.mxu0 0
        %3176 = vmatprep.subr.bf16.mxu0 0
        %3177 = vmatpush2.bf16.msra.mxu0 0
        %3178 = vmatprep.subr.bf16.mxu0 0
        %3179 = vmatpush2.bf16.msra.mxu0 0
        %3180 = vmatprep.subr.bf16.mxu0 0
        %3181 = vmatpush2.bf16.msra.mxu0 0
        %3182 = vmatprep.subr.bf16.mxu0 0
        %3183 = vmatpush2.bf16.msra.mxu0 0
        %3184 = vmatprep.subr.bf16.mxu0 0
        %3185 = vmatpush2.bf16.msra.mxu0 0
        %3186 = vmatprep.subr.bf16.mxu0 0
        %3187 = vmatpush2.bf16.msra.mxu0 0
        %3188 = vmatprep.subr.bf16.mxu0 0
        %3189 = vmatpush2.bf16.msra.mxu0 0
        %3190 = vmatprep.mubr.bf16.mxu0 0
        %3191 = vmatmul.mubr.bf16.gmra.mxu0 %v3156
        %v3192 = vpop.f32.mrf.mxu0
        %v3193 = vadd.f32 0.0, %v3192
        %v3194 = vpop.f32.mrf.mxu0
        %v3195 = vpop.f32.mrf.mxu0
        %v3196 = vpop.f32.mrf.mxu0
        %3197 = vdwg.mxu0
        %3200 = vrot.lane.b32.xlu0 %v3147, 16
        %v3201 = vpop.permute.xlu0 %3200
        %3202 = vrot.lane.b32.xlu0 %v3193, 16
        %v3203 = vpop.permute.xlu0 %3202
        %3206 = vst.msk [vmem:[#allocation3] sm:$0xff] %vm2030, %v3201
        %3207 = vst.msk [vmem:[#allocation3 + $0x8] sm:$0xff] %vm2030, %v3203
        %3208 = vrot.lane.b32.xlu0 %v2533, 104
        %v3209 = vpop.permute.xlu0 %3208
        %3210 = vrot.lane.b32.xlu0 %v2535, 104
        %v3211 = vpop.permute.xlu0 %3210
        %v3213 = vsel %vm1346, %v3209, 0
        %v3216 = vsel %vm1346, %v3211, 0
        %3218 = vmatprep.subr.bf16.mxu0 0
        %3219 = vmatpush1.bf16.xpose.msra.mxu0 0
        %3220 = vmatprep.subr.bf16.mxu0 0
        %3221 = vmatpush1.bf16.xpose.msra.mxu0 0
        %3222 = vmatprep.subr.bf16.mxu0 0
        %3223 = vmatpush1.bf16.xpose.msra.mxu0 0
        %3224 = vmatprep.subr.bf16.mxu0 0
        %3225 = vmatpush1.bf16.xpose.msra.mxu0 0
        %3226 = vmatprep.subr.bf16.mxu0 0
        %3227 = vmatpush1.bf16.xpose.msra.mxu0 0
        %3228 = vmatprep.subr.bf16.mxu0 0
        %3229 = vmatpush1.bf16.xpose.msra.mxu0 0
        %3230 = vmatprep.subr.bf16.mxu0 0
        %3231 = vmatpush1.bf16.xpose.msra.mxu0 0
        %3232 = vmatprep.subr.bf16.mxu0 0
        %3233 = vmatpush1.bf16.xpose.msra.mxu0 %v3216
        %3234 = vmatprep.subr.bf16.mxu0 0
        %3235 = vmatpush2.bf16.xpose.msra.mxu0 0
        %3236 = vmatprep.subr.bf16.mxu0 0
        %3237 = vmatpush2.bf16.xpose.msra.mxu0 0
        %3238 = vmatprep.subr.bf16.mxu0 0
        %3239 = vmatpush2.bf16.xpose.msra.mxu0 0
        %3240 = vmatprep.subr.bf16.mxu0 0
        %3241 = vmatpush2.bf16.xpose.msra.mxu0 0
        %3242 = vmatprep.subr.bf16.mxu0 0
        %3243 = vmatpush2.bf16.xpose.msra.mxu0 0
        %3244 = vmatprep.subr.bf16.mxu0 0
        %3245 = vmatpush2.bf16.xpose.msra.mxu0 0
        %3246 = vmatprep.subr.bf16.mxu0 0
        %3247 = vmatpush2.bf16.xpose.msra.mxu0 0
        %3248 = vmatprep.subr.bf16.mxu0 0
        %3249 = vmatpush2.bf16.xpose.msra.mxu0 0
        %3250 = vmatprep.mubr.bf16.mxu0 0
        %3251 = vmatmul.mubr.bf16.gmra.mxu0 %v3213
        %v3252 = vpop.f32.mrf.mxu0
        %v3253 = vadd.f32 0.0, %v3252
        %v3254 = vpop.f32.mrf.mxu0
        %v3255 = vpop.f32.mrf.mxu0
        %v3256 = vpop.f32.mrf.mxu0
        %3257 = vdwg.mxu0
        %3258 = vrot.lane.b32.xlu0 %v2534, 104
        %v3259 = vpop.permute.xlu0 %3258
        %3260 = vrot.lane.b32.xlu0 %v2536, 104
        %v3261 = vpop.permute.xlu0 %3260
        %v3263 = vsel %vm1346, %v3259, 0
        %v3266 = vsel %vm1346, %v3261, 0
        %3268 = vmatprep.subr.bf16.mxu0 0
        %3269 = vmatpush1.bf16.xpose.msra.mxu0 0
        %3270 = vmatprep.subr.bf16.mxu0 0
        %3271 = vmatpush1.bf16.xpose.msra.mxu0 0
        %3272 = vmatprep.subr.bf16.mxu0 0
        %3273 = vmatpush1.bf16.xpose.msra.mxu0 0
        %3274 = vmatprep.subr.bf16.mxu0 0
        %3275 = vmatpush1.bf16.xpose.msra.mxu0 0
        %3276 = vmatprep.subr.bf16.mxu0 0
        %3277 = vmatpush1.bf16.xpose.msra.mxu0 0
        %3278 = vmatprep.subr.bf16.mxu0 0
        %3279 = vmatpush1.bf16.xpose.msra.mxu0 0
        %3280 = vmatprep.subr.bf16.mxu0 0
        %3281 = vmatpush1.bf16.xpose.msra.mxu0 0
        %3282 = vmatprep.subr.bf16.mxu0 0
        %3283 = vmatpush1.bf16.xpose.msra.mxu0 %v3266
        %3284 = vmatprep.subr.bf16.mxu0 0
        %3285 = vmatpush2.bf16.xpose.msra.mxu0 0
        %3286 = vmatprep.subr.bf16.mxu0 0
        %3287 = vmatpush2.bf16.xpose.msra.mxu0 0
        %3288 = vmatprep.subr.bf16.mxu0 0
        %3289 = vmatpush2.bf16.xpose.msra.mxu0 0
        %3290 = vmatprep.subr.bf16.mxu0 0
        %3291 = vmatpush2.bf16.xpose.msra.mxu0 0
        %3292 = vmatprep.subr.bf16.mxu0 0
        %3293 = vmatpush2.bf16.xpose.msra.mxu0 0
        %3294 = vmatprep.subr.bf16.mxu0 0
        %3295 = vmatpush2.bf16.xpose.msra.mxu0 0
        %3296 = vmatprep.subr.bf16.mxu0 0
        %3297 = vmatpush2.bf16.xpose.msra.mxu0 0
        %3298 = vmatprep.subr.bf16.mxu0 0
        %3299 = vmatpush2.bf16.xpose.msra.mxu0 0
        %3300 = vmatprep.mubr.bf16.mxu0 0
        %3301 = vmatmul.mubr.bf16.gmra.mxu0 %v3263
        %v3302 = vpop.f32.mrf.mxu0
        %v3303 = vadd.f32 0.0, %v3302
        %v3304 = vpop.f32.mrf.mxu0
        %v3305 = vpop.f32.mrf.mxu0
        %v3306 = vpop.f32.mrf.mxu0
        %3307 = vdwg.mxu0
        %v3308 = vsel %vm2629, %v3253, -inf
        %3309 = vmax.xlane.f32.xlu0 %v3308
        %v3310 = vpop.xlane.xlu0 %3309
        %v3311 = vsel %vm2629, %v3303, -inf
        %3312 = vmax.xlane.f32.xlu0 %v3311
        %v3313 = vpop.xlane.xlu0 %3312
        %v3314 = vsub.f32 %v3253, %v3310
        %v3315 = vsub.f32 %v3303, %v3313
        %v3316 = vmul.f32 %v3314, 1.442695
        %v3317 = vpow.pop %v3316
        %v3318 = vmul.f32 %v3315, 1.442695
        %v3319 = vpow.pop %v3318
        %v3320 = vsel %vm2629, %v3317, 0.0
        %3321 = vadd.xlane.f32.xlu0 %v3320
        %v3322 = vpop.xlane.xlu0 %3321
        %v3323 = vsel %vm2629, %v3319, 0.0
        %3324 = vadd.xlane.f32.xlu0 %v3323
        %v3325 = vpop.xlane.xlu0 %3324
        %v3326 = vrcp.pop %v3322
        %v3327 = vrcp.pop %v3325
        %v3328 = vmul.f32 %v3317, %v3326
        %v3329 = vmul.f32 %v3319, %v3327
        %v3330 = vadd.f32 %v3102, %v3328
        %v3331 = vadd.f32 %v3103, %v3329
        %v3332 = vpack.c.bf16 %v3328, %v3328
        %v3333 = vpack.c.bf16 %v3329, %v3329
        %3334 = vrot.lane.b32.xlu0 %v2535, 72
        %v3335 = vpop.permute.xlu0 %3334
        %v3338 = vsel %vm2629, %v3332, 0
        %3340 = vmatprep.subr.bf16.mxu0 0
        %3341 = vmatpush1.bf16.msra.mxu0 0
        %3342 = vmatprep.subr.bf16.mxu0 0
        %3343 = vmatpush1.bf16.msra.mxu0 0
        %3344 = vmatprep.subr.bf16.mxu0 0
        %3345 = vmatpush1.bf16.msra.mxu0 0
        %3346 = vmatprep.subr.bf16.mxu0 0
        %3347 = vmatpush1.bf16.msra.mxu0 0
        %3348 = vmatprep.subr.bf16.mxu0 0
        %3349 = vmatpush1.bf16.msra.mxu0 0
        %3350 = vmatprep.subr.bf16.mxu0 0
        %3351 = vmatpush1.bf16.msra.mxu0 0
        %3352 = vmatprep.subr.bf16.mxu0 0
        %3353 = vmatpush1.bf16.msra.mxu0 0
        %3354 = vmatprep.subr.bf16.mxu0 0
        %3355 = vmatpush1.bf16.msra.mxu0 %v3335
        %3356 = vmatprep.subr.bf16.mxu0 0
        %3357 = vmatpush2.bf16.msra.mxu0 0
        %3358 = vmatprep.subr.bf16.mxu0 0
        %3359 = vmatpush2.bf16.msra.mxu0 0
        %3360 = vmatprep.subr.bf16.mxu0 0
        %3361 = vmatpush2.bf16.msra.mxu0 0
        %3362 = vmatprep.subr.bf16.mxu0 0
        %3363 = vmatpush2.bf16.msra.mxu0 0
        %3364 = vmatprep.subr.bf16.mxu0 0
        %3365 = vmatpush2.bf16.msra.mxu0 0
        %3366 = vmatprep.subr.bf16.mxu0 0
        %3367 = vmatpush2.bf16.msra.mxu0 0
        %3368 = vmatprep.subr.bf16.mxu0 0
        %3369 = vmatpush2.bf16.msra.mxu0 0
        %3370 = vmatprep.subr.bf16.mxu0 0
        %3371 = vmatpush2.bf16.msra.mxu0 0
        %3372 = vmatprep.mubr.bf16.mxu0 0
        %3373 = vmatmul.mubr.bf16.gmra.mxu0 %v3338
        %v3374 = vpop.f32.mrf.mxu0
        %v3375 = vadd.f32 0.0, %v3374
        %v3376 = vpop.f32.mrf.mxu0
        %v3377 = vpop.f32.mrf.mxu0
        %v3378 = vpop.f32.mrf.mxu0
        %3379 = vdwg.mxu0
        %3380 = vrot.lane.b32.xlu0 %v2536, 72
        %v3381 = vpop.permute.xlu0 %3380
        %v3384 = vsel %vm2629, %v3333, 0
        %3386 = vmatprep.subr.bf16.mxu0 0
        %3387 = vmatpush1.bf16.msra.mxu0 0
        %3388 = vmatprep.subr.bf16.mxu0 0
        %3389 = vmatpush1.bf16.msra.mxu0 0
        %3390 = vmatprep.subr.bf16.mxu0 0
        %3391 = vmatpush1.bf16.msra.mxu0 0
        %3392 = vmatprep.subr.bf16.mxu0 0
        %3393 = vmatpush1.bf16.msra.mxu0 0
        %3394 = vmatprep.subr.bf16.mxu0 0
        %3395 = vmatpush1.bf16.msra.mxu0 0
        %3396 = vmatprep.subr.bf16.mxu0 0
        %3397 = vmatpush1.bf16.msra.mxu0 0
        %3398 = vmatprep.subr.bf16.mxu0 0
        %3399 = vmatpush1.bf16.msra.mxu0 0
        %3400 = vmatprep.subr.bf16.mxu0 0
        %3401 = vmatpush1.bf16.msra.mxu0 %v3381
        %3402 = vmatprep.subr.bf16.mxu0 0
        %3403 = vmatpush2.bf16.msra.mxu0 0
        %3404 = vmatprep.subr.bf16.mxu0 0
        %3405 = vmatpush2.bf16.msra.mxu0 0
        %3406 = vmatprep.subr.bf16.mxu0 0
        %3407 = vmatpush2.bf16.msra.mxu0 0
        %3408 = vmatprep.subr.bf16.mxu0 0
        %3409 = vmatpush2.bf16.msra.mxu0 0
        %3410 = vmatprep.subr.bf16.mxu0 0
        %3411 = vmatpush2.bf16.msra.mxu0 0
        %3412 = vmatprep.subr.bf16.mxu0 0
        %3413 = vmatpush2.bf16.msra.mxu0 0
        %3414 = vmatprep.subr.bf16.mxu0 0
        %3415 = vmatpush2.bf16.msra.mxu0 0
        %3416 = vmatprep.subr.bf16.mxu0 0
        %3417 = vmatpush2.bf16.msra.mxu0 0
        %3418 = vmatprep.mubr.bf16.mxu0 0
        %3419 = vmatmul.mubr.bf16.gmra.mxu0 %v3384
        %v3420 = vpop.f32.mrf.mxu0
        %v3421 = vadd.f32 0.0, %v3420
        %v3422 = vpop.f32.mrf.mxu0
        %v3423 = vpop.f32.mrf.mxu0
        %v3424 = vpop.f32.mrf.mxu0
        %3425 = vdwg.mxu0
        %3428 = vrot.lane.b32.xlu0 %v3375, 24
        %v3429 = vpop.permute.xlu0 %3428
        %3430 = vrot.lane.b32.xlu0 %v3421, 24
        %v3431 = vpop.permute.xlu0 %3430
        %3434 = vst.msk [vmem:[#allocation3] sm:$0xff] %vm2263, %v3429
        %3435 = vst.msk [vmem:[#allocation3 + $0x8] sm:$0xff] %vm2263, %v3431
        %v3436 = vld [vmem:[#allocation3] sm:$0xff]
        %v3437 = vld [vmem:[#allocation3 + $0x8] sm:$0xff]
        %v3438 = vpack.c.bf16 %v3437, %v3436
        %v3440 = vlaneseq
        %v3441 = vshrl.u32 %v3440, 7
        %v3442 = vsub.s32 0, %v3441
        %v3443 = vrot.slane %v2532, %v3442
        %v3449 = vunpack.c.l.b16 %v2528
        %v3450 = vunpack.c.l.b16 %v2529
        %v3451 = vunpack.c.l.b16 %v2530
        %v3452 = vunpack.c.l.b16 %v2531
        %v3453 = vpack.c.b16 %v3450, %v3449
        %v3454 = vpack.c.b16 %v3452, %v3451
        %v3458 = vsel %vm1287, %v3438, 0
        %3460 = vmatprep.subr.bf16.mxu0 0
        %3461 = vmatpush1.bf16.msra.mxu0 0
        %3462 = vmatprep.subr.bf16.mxu0 0
        %3463 = vmatpush1.bf16.msra.mxu0 0
        %3464 = vmatprep.subr.bf16.mxu0 0
        %3465 = vmatpush1.bf16.msra.mxu0 0
        %3466 = vmatprep.subr.bf16.mxu0 0
        %3467 = vmatpush1.bf16.msra.mxu0 0
        %3468 = vmatprep.subr.bf16.mxu0 0
        %3469 = vmatpush1.bf16.msra.mxu0 0
        %3470 = vmatprep.subr.bf16.mxu0 0
        %3471 = vmatpush1.bf16.msra.mxu0 0
        %3472 = vmatprep.subr.bf16.mxu0 0
        %3473 = vmatpush1.bf16.msra.mxu0 %v3454
        %3474 = vmatprep.subr.bf16.mxu0 0
        %3475 = vmatpush1.bf16.msra.mxu0 %v3453
        %3476 = vmatprep.subr.bf16.mxu0 0
        %3477 = vmatpush2.bf16.msra.mxu0 0
        %3478 = vmatprep.subr.bf16.mxu0 0
        %3479 = vmatpush2.bf16.msra.mxu0 0
        %3480 = vmatprep.subr.bf16.mxu0 0
        %3481 = vmatpush2.bf16.msra.mxu0 0
        %3482 = vmatprep.subr.bf16.mxu0 0
        %3483 = vmatpush2.bf16.msra.mxu0 0
        %3484 = vmatprep.subr.bf16.mxu0 0
        %3485 = vmatpush2.bf16.msra.mxu0 0
        %3486 = vmatprep.subr.bf16.mxu0 0
        %3487 = vmatpush2.bf16.msra.mxu0 0
        %3488 = vmatprep.subr.bf16.mxu0 0
        %3489 = vmatpush2.bf16.msra.mxu0 0
        %3490 = vmatprep.subr.bf16.mxu0 0
        %3491 = vmatpush2.bf16.msra.mxu0 0
        %3492 = vmatprep.mubr.bf16.mxu0 0
        %3493 = vmatmul.mubr.bf16.gmra.mxu0 %v3458
        %v3494 = vpop.f32.mrf.mxu0
        %v3495 = vadd.f32 %v3443, %v3494
        %v3496 = vpop.f32.mrf.mxu0
        %v3497 = vpop.f32.mrf.mxu0
        %v3498 = vadd.f32 %v3443, %v3497
        %v3499 = vpop.f32.mrf.mxu0
        %3500 = vdwg.mxu0
        %v3501 = vmul.f32 %v3330, 0.25
        %v3502 = vmul.f32 %v3331, 0.25
        %v3503 = vadd.f32 %v2378, %v3495
        %v3504 = vadd.f32 %v2379, %v3498
        %v3505 = vld [vmem:[%s1232] sm:$0x1]
        %v3506 = vld [vmem:[%s1235] sm:$0x1]
        %v3507 = vsel %vm1287, %v3503, 0.0
        %3508 = vadd.xlane.f32.xlu0 %v3507
        %v3509 = vpop.xlane.xlu0 %3508
        %v3510 = vsel %vm1287, %v3504, 0.0
        %3511 = vadd.xlane.f32.xlu0 %v3510
        %v3512 = vpop.xlane.xlu0 %3511
        %v3513 = vmul.f32 %v3509, %v2343
        %v3514 = vmul.f32 %v3512, %v2343
        %v3515 = vsub.f32 %v3503, %v3513
        %v3516 = vsub.f32 %v3504, %v3514
        %v3517 = vmul.f32 %v3515, %v3515
        %v3518 = vmul.f32 %v3516, %v3516
        %v3519 = vsel %vm1287, %v3517, 0.0
        %3520 = vadd.xlane.f32.xlu0 %v3519
        %v3521 = vpop.xlane.xlu0 %3520
        %v3522 = vsel %vm1287, %v3518, 0.0
        %3523 = vadd.xlane.f32.xlu0 %v3522
        %v3524 = vpop.xlane.xlu0 %3523
        %v3525 = vmul.f32 %v3521, %v2343
        %v3526 = vmul.f32 %v3524, %v2343
        %v3527 = vadd.f32 %v3525, 1e-06
        %v3528 = vadd.f32 %v3526, 1e-06
        %v3529 = vrsqrt.pop %v3527
        %v3530 = vrsqrt.pop %v3528
        %v3531 = vmul.f32 %v3515, %v3529
        %v3532 = vmul.f32 %v3516, %v3530
        %v3534 = vlaneseq
        %v3535 = vshrl.u32 %v3534, 7
        %v3536 = vsub.s32 0, %v3535
        %v3537 = vrot.slane %v3505, %v3536
        %v3539 = vmul.f32 %v3531, %v3537
        %v3540 = vmul.f32 %v3532, %v3537
        %v3542 = vlaneseq
        %v3543 = vshrl.u32 %v3542, 7
        %v3544 = vsub.s32 0, %v3543
        %v3545 = vrot.slane %v3506, %v3544
        %v3547 = vadd.f32 %v3539, %v3545
        %v3548 = vadd.f32 %v3540, %v3545
        %v3549 = vpack.c.bf16 %v3548, %v3547
        %v3550 = vld [vmem:[%s1031] sm:$0xf]
        %v3551 = vld [vmem:[%s1031 + $0x4] sm:$0xf]
        %v3552 = vld [vmem:[%s1031 + $0x8] sm:$0xf]
        %v3553 = vld [vmem:[%s1031 + $0xc] sm:$0xf]
        %v3554 = vld [vmem:[%s1215] sm:$0x1]
        %v3556 = vlaneseq
        %v3557 = vshrl.u32 %v3556, 7
        %v3558 = vsub.s32 0, %v3557
        %v3559 = vrot.slane %v3554, %v3558
        %v3565 = vunpack.c.l.b16 %v3550
        %v3566 = vunpack.c.l.b16 %v3551
        %v3567 = vunpack.c.l.b16 %v3552
        %v3568 = vunpack.c.l.b16 %v3553
        %v3569 = vpack.c.b16 %v3566, %v3565
        %v3570 = vpack.c.b16 %v3568, %v3567
        %v3574 = vsel %vm1287, %v3549, 0
        %3576 = vmatprep.subr.bf16.mxu0 0
        %3577 = vmatpush1.bf16.msra.mxu0 0
        %3578 = vmatprep.subr.bf16.mxu0 0
        %3579 = vmatpush1.bf16.msra.mxu0 0
        %3580 = vmatprep.subr.bf16.mxu0 0
        %3581 = vmatpush1.bf16.msra.mxu0 0
        %3582 = vmatprep.subr.bf16.mxu0 0
        %3583 = vmatpush1.bf16.msra.mxu0 0
        %3584 = vmatprep.subr.bf16.mxu0 0
        %3585 = vmatpush1.bf16.msra.mxu0 0
        %3586 = vmatprep.subr.bf16.mxu0 0
        %3587 = vmatpush1.bf16.msra.mxu0 0
        %3588 = vmatprep.subr.bf16.mxu0 0
        %3589 = vmatpush1.bf16.msra.mxu0 %v3570
        %3590 = vmatprep.subr.bf16.mxu0 0
        %3591 = vmatpush1.bf16.msra.mxu0 %v3569
        %3592 = vmatprep.subr.bf16.mxu0 0
        %3593 = vmatpush2.bf16.msra.mxu0 0
        %3594 = vmatprep.subr.bf16.mxu0 0
        %3595 = vmatpush2.bf16.msra.mxu0 0
        %3596 = vmatprep.subr.bf16.mxu0 0
        %3597 = vmatpush2.bf16.msra.mxu0 0
        %3598 = vmatprep.subr.bf16.mxu0 0
        %3599 = vmatpush2.bf16.msra.mxu0 0
        %3600 = vmatprep.subr.bf16.mxu0 0
        %3601 = vmatpush2.bf16.msra.mxu0 0
        %3602 = vmatprep.subr.bf16.mxu0 0
        %3603 = vmatpush2.bf16.msra.mxu0 0
        %3604 = vmatprep.subr.bf16.mxu0 0
        %3605 = vmatpush2.bf16.msra.mxu0 0
        %3606 = vmatprep.subr.bf16.mxu0 0
        %3607 = vmatpush2.bf16.msra.mxu0 0
        %3608 = vmatprep.mubr.bf16.mxu0 0
        %3609 = vmatmul.mubr.bf16.gmra.mxu0 %v3574
        %v3610 = vpop.f32.mrf.mxu0
        %v3611 = vadd.f32 %v3559, %v3610
        %v3612 = vpop.f32.mrf.mxu0
        %v3613 = vpop.f32.mrf.mxu0
        %v3614 = vadd.f32 %v3559, %v3613
        %v3615 = vpop.f32.mrf.mxu0
        %3616 = vdwg.mxu0
        %v3617 = vmax.f32 %v3611, 0.0
        %v3618 = vmax.f32 %v3614, 0.0
        %v3619 = vpack.c.bf16 %v3618, %v3617
        %v3620 = vld [vmem:[%s1220] sm:$0xf]
        %v3621 = vld [vmem:[%s1220 + $0x4] sm:$0xf]
        %v3622 = vld [vmem:[%s1220 + $0x8] sm:$0xf]
        %v3623 = vld [vmem:[%s1220 + $0xc] sm:$0xf]
        %v3624 = vld [vmem:[%s1220 + $0x10] sm:$0xf]
        %v3625 = vld [vmem:[%s1220 + $0x14] sm:$0xf]
        %v3626 = vld [vmem:[%s1220 + $0x18] sm:$0xf]
        %v3627 = vld [vmem:[%s1220 + $0x1c] sm:$0xf]
        %v3628 = vld [vmem:[%s1223] sm:$0x1]
        %v3630 = vlaneseq
        %v3631 = vshrl.u32 %v3630, 7
        %v3632 = vsub.s32 0, %v3631
        %v3633 = vrot.slane %v3628, %v3632
        %v3643 = vunpack.c.l.b16 %v3620
        %v3644 = vunpack.c.l.b16 %v3621
        %v3645 = vunpack.c.l.b16 %v3622
        %v3646 = vunpack.c.l.b16 %v3623
        %v3647 = vunpack.c.l.b16 %v3624
        %v3648 = vunpack.c.l.b16 %v3625
        %v3649 = vunpack.c.l.b16 %v3626
        %v3650 = vunpack.c.l.b16 %v3627
        %v3651 = vpack.c.b16 %v3644, %v3643
        %v3652 = vpack.c.b16 %v3646, %v3645
        %v3653 = vpack.c.b16 %v3648, %v3647
        %v3654 = vpack.c.b16 %v3650, %v3649
        %vm3659 = vcmask 523264
        %v3661 = vsel %vm3659, %v3619, 0
        %3663 = vmatprep.subr.bf16.mxu0 0
        %3664 = vmatpush1.bf16.msra.mxu0 0
        %3665 = vmatprep.subr.bf16.mxu0 0
        %3666 = vmatpush1.bf16.msra.mxu0 0
        %3667 = vmatprep.subr.bf16.mxu0 0
        %3668 = vmatpush1.bf16.msra.mxu0 0
        %3669 = vmatprep.subr.bf16.mxu0 0
        %3670 = vmatpush1.bf16.msra.mxu0 0
        %3671 = vmatprep.subr.bf16.mxu0 0
        %3672 = vmatpush1.bf16.msra.mxu0 %v3654
        %3673 = vmatprep.subr.bf16.mxu0 0
        %3674 = vmatpush1.bf16.msra.mxu0 %v3653
        %3675 = vmatprep.subr.bf16.mxu0 0
        %3676 = vmatpush1.bf16.msra.mxu0 %v3652
        %3677 = vmatprep.subr.bf16.mxu0 0
        %3678 = vmatpush1.bf16.msra.mxu0 %v3651
        %3679 = vmatprep.subr.bf16.mxu0 0
        %3680 = vmatpush2.bf16.msra.mxu0 0
        %3681 = vmatprep.subr.bf16.mxu0 0
        %3682 = vmatpush2.bf16.msra.mxu0 0
        %3683 = vmatprep.subr.bf16.mxu0 0
        %3684 = vmatpush2.bf16.msra.mxu0 0
        %3685 = vmatprep.subr.bf16.mxu0 0
        %3686 = vmatpush2.bf16.msra.mxu0 0
        %3687 = vmatprep.subr.bf16.mxu0 0
        %3688 = vmatpush2.bf16.msra.mxu0 0
        %3689 = vmatprep.subr.bf16.mxu0 0
        %3690 = vmatpush2.bf16.msra.mxu0 0
        %3691 = vmatprep.subr.bf16.mxu0 0
        %3692 = vmatpush2.bf16.msra.mxu0 0
        %3693 = vmatprep.subr.bf16.mxu0 0
        %3694 = vmatpush2.bf16.msra.mxu0 0
        %3695 = vmatprep.mubr.bf16.mxu0 0
        %3696 = vmatmul.mubr.bf16.gmra.mxu0 %v3661
        %v3697 = vpop.f32.mrf.mxu0
        %v3698 = vadd.f32 %v3633, %v3697
        %v3699 = vpop.f32.mrf.mxu0
        %v3700 = vpop.f32.mrf.mxu0
        %v3701 = vadd.f32 %v3633, %v3700
        %v3702 = vpop.f32.mrf.mxu0
        %3703 = vdwg.mxu0
        %v3704 = vadd.f32 %v3547, %v3698
        %v3705 = vadd.f32 %v3548, %v3701
        %v3706 = vld [vmem:[%s1238] sm:$0x1]
        %v3707 = vld [vmem:[%s1241] sm:$0x1]
        %v3708 = vsel %vm1287, %v3704, 0.0
        %3709 = vadd.xlane.f32.xlu0 %v3708
        %v3710 = vpop.xlane.xlu0 %3709
        %v3711 = vsel %vm1287, %v3705, 0.0
        %3712 = vadd.xlane.f32.xlu0 %v3711
        %v3713 = vpop.xlane.xlu0 %3712
        %v3714 = vmul.f32 %v3710, %v2343
        %v3715 = vmul.f32 %v3713, %v2343
        %v3716 = vsub.f32 %v3704, %v3714
        %v3717 = vsub.f32 %v3705, %v3715
        %v3718 = vmul.f32 %v3716, %v3716
        %v3719 = vmul.f32 %v3717, %v3717
        %v3720 = vsel %vm1287, %v3718, 0.0
        %3721 = vadd.xlane.f32.xlu0 %v3720
        %v3722 = vpop.xlane.xlu0 %3721
        %v3723 = vsel %vm1287, %v3719, 0.0
        %3724 = vadd.xlane.f32.xlu0 %v3723
        %v3725 = vpop.xlane.xlu0 %3724
        %v3726 = vmul.f32 %v3722, %v2343
        %v3727 = vmul.f32 %v3725, %v2343
        %v3728 = vadd.f32 %v3726, 1e-06
        %v3729 = vadd.f32 %v3727, 1e-06
        %v3730 = vrsqrt.pop %v3728
        %v3731 = vrsqrt.pop %v3729
        %v3732 = vmul.f32 %v3716, %v3730
        %v3733 = vmul.f32 %v3717, %v3731
        %v3735 = vlaneseq
        %v3736 = vshrl.u32 %v3735, 7
        %v3737 = vsub.s32 0, %v3736
        %v3738 = vrot.slane %v3706, %v3737
        %v3740 = vmul.f32 %v3732, %v3738
        %v3741 = vmul.f32 %v3733, %v3738
        %v3743 = vlaneseq
        %v3744 = vshrl.u32 %v3743, 7
        %v3745 = vsub.s32 0, %v3744
        %v3746 = vrot.slane %v3707, %v3745
        %v3748 = vadd.f32 %v3740, %v3746
        %v3749 = vadd.f32 %v3741, %v3746
        %3750 = vst.msk [vmem:[#allocation2] sm:$0xff] %vm1287, %v3748
        %3751 = vst.msk [vmem:[#allocation2 + $0x8] sm:$0xff] %vm1287, %v3749
        %3752 = vst.msk [vmem:[%s1172] sm:$0xff] %vm1346, %v2331
        %3753 = vst.msk [vmem:[%s1172 + $0x8] sm:$0xff] %vm1346, %v2332
        %3754 = vst.msk [vmem:[%s1179] sm:$0xff] %vm2629, %v3501
        %3755 = vst.msk [vmem:[%s1179 + $0x8] sm:$0xff] %vm2629, %v3502
        %p3756 = scmp.eq.s32.totalorder %s54, 1
        // Predicated region
        $region141: #{tpu_custom_call.1} parent=115 // pred_check
          %p3757 = pneg %p3756
        $region142: #{tpu_custom_call.1} parent=115 // pred_check_branch
          %3759 = sbr.rel (%p3757) target = $region144
        $region143: #{tpu_custom_call.1} parent=115 // pred_region
          %v3760 = vld [vmem:[%s22] sm:$0x1]
          %v3761 = vld [vmem:[%s23] sm:$0x1]
          %v3762 = vsel %vm1287, %v3748, 0.0
          %3763 = vadd.xlane.f32.xlu0 %v3762
          %v3764 = vpop.xlane.xlu0 %3763
          %v3765 = vsel %vm1287, %v3749, 0.0
          %3766 = vadd.xlane.f32.xlu0 %v3765
          %v3767 = vpop.xlane.xlu0 %3766
          %v3768 = vmul.f32 %v3764, %v2343
          %v3769 = vmul.f32 %v3767, %v2343
          %v3770 = vsub.f32 %v3748, %v3768
          %v3771 = vsub.f32 %v3749, %v3769
          %v3772 = vmul.f32 %v3770, %v3770
          %v3773 = vmul.f32 %v3771, %v3771
          %v3774 = vsel %vm1287, %v3772, 0.0
          %3775 = vadd.xlane.f32.xlu0 %v3774
          %v3776 = vpop.xlane.xlu0 %3775
          %v3777 = vsel %vm1287, %v3773, 0.0
          %3778 = vadd.xlane.f32.xlu0 %v3777
          %v3779 = vpop.xlane.xlu0 %3778
          %v3780 = vmul.f32 %v3776, %v2343
          %v3781 = vmul.f32 %v3779, %v2343
          %v3782 = vadd.f32 %v3780, 1e-06
          %v3783 = vadd.f32 %v3781, 1e-06
          %v3784 = vrsqrt.pop %v3782
          %v3785 = vrsqrt.pop %v3783
          %v3786 = vmul.f32 %v3770, %v3784
          %v3787 = vmul.f32 %v3771, %v3785
          %v3789 = vlaneseq
          %v3790 = vshrl.u32 %v3789, 7
          %v3791 = vsub.s32 0, %v3790
          %v3792 = vrot.slane %v3760, %v3791
          %v3794 = vmul.f32 %v3786, %v3792
          %v3795 = vmul.f32 %v3787, %v3792
          %v3797 = vlaneseq
          %v3798 = vshrl.u32 %v3797, 7
          %v3799 = vsub.s32 0, %v3798
          %v3800 = vrot.slane %v3761, %v3799
          %v3802 = vadd.f32 %v3794, %v3800
          %v3803 = vadd.f32 %v3795, %v3800
          %3804 = vst.msk [vmem:[#allocation13] sm:$0xff] %vm1287, %v3802
          %3805 = vst.msk [vmem:[#allocation13 + $0x8] sm:$0xff] %vm1287, %v3803
        $region144: #{tpu_custom_call.1} parent=115 // pred_fallthru
          _
        %s3806 = sand.u32 %s49, 1
        %s3807 = scalar_lea.sflag [#allocation15], %s3806
        %s3808 = sand.u32 %s711, 1
        %s3809 = smul.addr %s3808, 16
        %s3810 = scalar_lea.vmem [#allocation14], %s3809
        %s3811 = sand.u32 %s49, 1
        %s3812 = scalar_lea.sflag [#allocation15], %s3811
        %s3813 = sand.u32 %s739, 1
        %s3814 = smul.addr %s3813, 16
        %s3815 = scalar_lea.vmem [#allocation16], %s3814
        // Predicated region
        $region145: #{tpu_custom_call.1} parent=115 // pred_check
          %p3816 = pneg %p693
        $region146: #{tpu_custom_call.1} parent=115 // pred_check_branch
          %3818 = sbr.rel (%p3816) target = $region148
        $region147: #{tpu_custom_call.1} parent=115 // pred_region
          %s3819 = smul.u32 2, %s53
          %s3821 = ssub.s32 256, 256
          %3822 = vsyncadd [#allocation6], %s3821
          %s3823 = smul.addr %s3819, 128
          %s3824 = scalar_lea.hbm %s24, %s3823
          %s3825 = sshll.u32 [#allocation13], 4
          %s3826 = int_to_ptr.vmem [resolvable:$true] %s3825
          %3831 = dma.vmem_to_hbm [thread:$0]  %s3826, 256, %s3824, [#allocation6], 128, 128, 8
        $region148: #{tpu_custom_call.1} parent=115 // pred_fallthru
          _
        // Predicated region
        $region149: #{tpu_custom_call.1} parent=115 // pred_check
          %p3832 = pneg %p721
        $region150: #{tpu_custom_call.1} parent=115 // pred_check_branch
          %3834 = sbr.rel (%p3832) target = $region152
        $region151: #{tpu_custom_call.1} parent=115 // pred_region
          %s3835 = smul.u32 2, %s53
          %s3837 = ssub.s32 256, 256
          %3838 = vsyncadd %s3807, %s3837
          %s3839 = smul.addr %s54, 2
          %s3840 = sadd.s32 %s3835, %s3839
          %s3841 = smul.addr %s3840, 128
          %s3842 = scalar_lea.hbm %s25, %s3841
          %s3843 = sshll.u32 %s3810, 4
          %s3844 = int_to_ptr.vmem [resolvable:$true] %s3843
          %3849 = dma.vmem_to_hbm [thread:$0]  %s3844, 256, %s3842, %s3807, 128, 128, 8
        $region152: #{tpu_custom_call.1} parent=115 // pred_fallthru
          _
        // Predicated region
        $region153: #{tpu_custom_call.1} parent=115 // pred_check
          %p3850 = pneg %p749
        $region154: #{tpu_custom_call.1} parent=115 // pred_check_branch
          %3852 = sbr.rel (%p3850) target = $region156
        $region155: #{tpu_custom_call.1} parent=115 // pred_region
          %s3853 = smul.u32 2, %s53
          %s3855 = ssub.s32 256, 256
          %3856 = vsyncadd %s3812, %s3855
          %s3857 = smul.addr %s54, 2
          %s3858 = sadd.s32 %s3853, %s3857
          %s3859 = smul.addr %s3858, 128
          %s3860 = scalar_lea.hbm %s26, %s3859
          %s3861 = sshll.u32 %s3815, 4
          %s3862 = int_to_ptr.vmem [resolvable:$true] %s3861
          %3867 = dma.vmem_to_hbm [thread:$0]  %s3862, 256, %s3860, %s3812, 128, 128, 8
        $region156: #{tpu_custom_call.1} parent=115 // pred_fallthru
          _
        // Predicated region
        $region157: #{tpu_custom_call.1} parent=115 // pred_check
          %p3868 = pneg %p693
        $region158: #{tpu_custom_call.1} parent=115 // pred_check_branch
          %3870 = sbr.rel (%p3868) target = $region160
        $region159: #{tpu_custom_call.1} parent=115 // pred_region
          %3871 = dma.done [#allocation6], 256
        $region160: #{tpu_custom_call.1} parent=115 // pred_fallthru
          _
      $region116: #{tpu_custom_call.1} parent=5 // pred_fallthru
        _
      %p3872 = scmp.le.s32.totalorder 2, %s44
      // Predicated region
      $region161: #{tpu_custom_call.1} parent=5 // pred_check
        %p3873 = pneg %p3872
      $region162: #{tpu_custom_call.1} parent=5 // pred_check_branch
        %3875 = sbr.rel (%p3873) target = $region164
      $region163: #{tpu_custom_call.1} parent=5 // pred_region
        %s3876 = ssub.s32 %s44, 2
        // Predicated region
        $region165: #{tpu_custom_call.1} parent=163 // pred_check
          %p3877 = pneg %p727
        $region166: #{tpu_custom_call.1} parent=163 // pred_check_branch
          %3879 = sbr.rel (%p3877) target = $region168
        $region167: #{tpu_custom_call.1} parent=163 // pred_region
          %s3880 = sand.u32 %s50, 1
          %s3881 = scalar_lea.sflag [#allocation15], %s3880
          %s3882 = sand.u32 %s712, 1
          %s3883 = smul.addr %s3882, 16
          %s3884 = scalar_lea.vmem [#allocation14], %s3883
          %3885 = dma.done %s3881, 256
        $region168: #{tpu_custom_call.1} parent=163 // pred_fallthru
          _
        // Predicated region
        $region169: #{tpu_custom_call.1} parent=163 // pred_check
          %p3886 = pneg %p755
        $region170: #{tpu_custom_call.1} parent=163 // pred_check_branch
          %3888 = sbr.rel (%p3886) target = $region172
        $region171: #{tpu_custom_call.1} parent=163 // pred_region
          %s3889 = sand.u32 %s50, 1
          %s3890 = scalar_lea.sflag [#allocation15], %s3889
          %s3891 = sand.u32 %s740, 1
          %s3892 = smul.addr %s3891, 16
          %s3893 = scalar_lea.vmem [#allocation16], %s3892
          %3894 = dma.done %s3890, 256
        $region172: #{tpu_custom_call.1} parent=163 // pred_fallthru
          _
      $region164: #{tpu_custom_call.1} parent=5 // pred_fallthru
        _
    $region6: #{tpu_custom_call.1} parent=1 // loop_footer
      %s48 = sadd.s32 1, %s44
    $region7: #{tpu_custom_call.1} parent=1 // loop_footer_branch
      %43 = sbr.rel target = $region3
    $region8: #{tpu_custom_call.1} parent=1 // loop_exit
      _
    %3895 = vsyncpa [#allocation5], 1
    %s3896 = scalar_lea.sflag [#allocation5], 1
    %3897 = vsyncpa %s3896, 1
    %3898 = vsyncpa [#allocation8], 1
    %s3899 = scalar_lea.sflag [#allocation8], 1
    %3900 = vsyncpa %s3899, 1
    %3901 = vsyncpa [#allocation11], 1
    %s3902 = scalar_lea.sflag [#allocation11], 1
    %3903 = vsyncpa %s3902, 1
    %3904 = vsyncpa [#allocation6], 1
    %s3905 = scalar_lea.sflag [#allocation6], 1
    %3906 = vsyncpa %s3905, 1
    %3907 = vsyncpa [#allocation15], 1
    %s3908 = scalar_lea.sflag [#allocation15], 1
    %3909 = vsyncpa %s3908, 1

</llo_original>
